<compile_context>
chip_gen: v7x
topology: tpu7x:2x2x1
jax: 0.10.0
libtpu: 0.0.40
codegen_flags: <defaults>
</compile_context>

<pallas_src>
import jax
import jax.numpy as jnp
from jax import lax
from jax.experimental import pallas as pl
from jax.experimental.pallas import tpu as pltpu


_TAPS = ((0, 0), (0, 1), (1, 0), (1, 1))   # 2x2 kernel taps, (dy, dx), row-major


# ----------------------------------------------------------------------------
# In-kernel helpers (everything operates on flat (C, S) frames, S = H*W)
# ----------------------------------------------------------------------------
def _conv2x2_relu(a, w_ref, b_ref, frame_w, stride, s):
    """2x2 valid conv + bias + ReLU on a flat (Cin, S) frame.

    a      : (Cin, S) f32 value; valid samples live at frame positions
             stride*(i*frame_w + j).
    w_ref  : (4, Cout, Cin) tap-major weights (tap order == _TAPS).
    b_ref  : (Cout, 1) bias.
    Returns: (Cout, S) f32; valid at the same stride-spaced positions (one
             fewer valid row/col than the input).  Four tiny MXU matmuls,
             no im2col, result already lane-dense in (Cout, S).
    """
    acc = None
    for t, (dy, dx) in enumerate(_TAPS):
        k = stride * (dy * frame_w + dx)
        # out[:, p] needs a[:, p + k]  ->  circular shift left by k.
        xs = a if k == 0 else pltpu.roll(a, shift=s - k, axis=1)
        d = jnp.dot(w_ref[t], xs, preferred_element_type=jnp.float32)
        acc = d if acc is None else acc + d
    return jnp.maximum(acc + b_ref[...], 0.0)


def _maxpool2(a, frame_w, stride, s):
    """MaxPool2d(kernel=2, stride=2, floor), kept sparse in the original frame.

    Valid pooled values land at frame positions (2*stride)*(i*frame_w + j);
    garbage elsewhere is never read by later stages.  2 rolls + 2 maxes.
    """
    m = jnp.maximum(a, pltpu.roll(a, shift=s - stride, axis=1))
    return jnp.maximum(m, pltpu.roll(m, shift=s - stride * frame_w, axis=1))


def _make_encoder_kernel(n_blocks, frame_w, s):
    """Builds the fused whole-encoder kernel for `n_blocks` Blocks."""

    def kernel(*refs):
        x_ref = refs[0]
        p_refs = refs[1:1 + 4 * n_blocks]            # (w1, b1, w2, b2) per block
        f_refs = refs[1 + 4 * n_blocks:]             # one feature frame per block

        a = x_ref[0]                                  # (Cin_pad, S) f32
        stride = 1
        for b in range(n_blocks):
            w1, b1, w2, b2 = p_refs[4 * b: 4 * b + 4]
            a = _conv2x2_relu(a, w1, b1, frame_w, stride, s)
            a = _conv2x2_relu(a, w2, b2, frame_w, stride, s)
            f_refs[b][0] = a                          # lane-dense (Cout, S) store
            if b + 1 < n_blocks:                      # last block's pool is unused
                a = _maxpool2(a, frame_w, stride, s)
                stride *= 2

    return kernel


# ----------------------------------------------------------------------------
# Host-side wrapper
# ----------------------------------------------------------------------------
def _pack_params(params, cin_pad):
    """HWIO (2,2,Cin,Cout) conv weights -> tap-major (4,Cout,Cin[pad]) + (Cout,1)."""
    packed = []
    for bidx, (w1, b1, w2, b2) in enumerate(params):
        for widx, (w, bias) in enumerate(((w1, b1), (w2, b2))):
            _, _, ci, co = w.shape
            wp = jnp.transpose(w.reshape(4, ci, co), (0, 2, 1))   # (4, Cout, Cin)
            if bidx == 0 and widx == 0 and cin_pad != ci:
                wp = jnp.pad(wp, ((0, 0), (0, 0), (0, cin_pad - ci)))
            packed.append(wp.astype(jnp.float32))
            packed.append(bias.reshape(co, 1).astype(jnp.float32))
    return packed


@jax.jit
def encoder_forward(params, x_nchw):
    """Matches torch Encoder.forward: list of per-block pre-pool features (NCHW)."""
    n, cin, h, w = x_nchw.shape
    s = h * w
    n_blocks = len(params)
    couts = [p[0].shape[-1] for p in params]

    # Channel-on-sublane / spatial-on-lane input slab.  Pad Cin up to a sublane
    # tile (8) so every matmul operand is row-aligned; zero channels are exact
    # no-ops in the convolution.
    cin_pad = max(8, -(-cin // 8) * 8)
    x_flat = x_nchw.reshape(n, cin, s).astype(jnp.float32)
    if cin_pad != cin:
        x_flat = jnp.pad(x_flat, ((0, 0), (0, cin_pad - cin), (0, 0)))

    packed = _pack_params(params, cin_pad)

    in_specs = [pl.BlockSpec((1, cin_pad, s), lambda i: (i, 0, 0))]
    for arr in packed:   # whole (tiny) weight/bias arrays resident in VMEM
        in_specs.append(pl.BlockSpec(arr.shape, lambda i, nd=arr.ndim: (0,) * nd))

    out_shape = tuple(jax.ShapeDtypeStruct((n, c, s), jnp.float32) for c in couts)
    out_specs = tuple(pl.BlockSpec((1, c, s), lambda i: (i, 0, 0)) for c in couts)

    frames = pl.pallas_call(
        _make_encoder_kernel(n_blocks, w, s),
        out_shape=out_shape,
        grid_spec=pltpu.PrefetchScalarGridSpec(
            num_scalar_prefetch=0,
            grid=(n,),                                     # one image per step
            in_specs=in_specs,
            out_specs=out_specs,
        ),
        compiler_params=pltpu.CompilerParams(
            dimension_semantics=("parallel",),             # batch -> v7x TCs
        ),
    )(x_flat, *packed)
    if not isinstance(frames, (list, tuple)):
        frames = (frames,)

    # Extract the valid (strided) window of each lane-dense feature frame.
    # Pure layout plumbing; a few tens of KB per feature map.
    ftrs = []
    h_in, w_in = h, w
    for bidx in range(n_blocks):
        stride = 1 << bidx
        h_f, w_f = h_in - 2, w_in - 2                      # two valid 2x2 convs
        fr = frames[bidx].reshape(n, couts[bidx], h, w)
        ftrs.append(fr[:, :, : stride * h_f : stride, : stride * w_f : stride])
        h_in, w_in = h_f // 2, w_f // 2                    # MaxPool2d(2), floor
    return ftrs


# ----------------------------------------------------------------------------
# Parameters + pure-JAX reference
# ----------------------------------------------------------------------------
def init_encoder_params(key, chs):
    """Deterministic synthetic params; conv weights in HWIO (2,2,Cin,Cout)."""
    params = []
    for i in range(len(chs) - 1):
        in_ch, out_ch = chs[i], chs[i + 1]
        k = jax.random.fold_in(key, i)
        k1, k2, k3, k4 = jax.random.split(k, 4)
        std1 = (2.0 / (in_ch * 4)) ** 0.5
        std2 = (2.0 / (out_ch * 4)) ** 0.5
        w1 = jax.random.normal(k1, (2, 2, in_ch, out_ch), jnp.float32) * std1
        b1 = jax.random.normal(k2, (out_ch,), jnp.float32) * 0.01
        w2 = jax.random.normal(k3, (2, 2, out_ch, out_ch), jnp.float32) * std2
        b2 = jax.random.normal(k4, (out_ch,), jnp.float32) * 0.01
        params.append((w1, b1, w2, b2))
    return params


def _encoder_ref(params, x_nchw):
    """Pure-JAX reference (correctness verification only)."""
    x = jnp.transpose(x_nchw, (0, 2, 3, 1))
    ftrs = []
    for (w1, b1, w2, b2) in params:
        for (w, b) in ((w1, b1), (w2, b2)):
            dn = lax.conv_dimension_numbers(x.shape, w.shape,
                                            ("NHWC", "HWIO", "NHWC"))
            x = lax.conv_general_dilated(x, w, (1, 1), "VALID",
                                         dimension_numbers=dn) + b
            x = jnp.maximum(x, 0.0)
        ftrs.append(jnp.transpose(x, (0, 3, 1, 2)))
        x = lax.reduce_window(x, -jnp.inf, lax.max,
                              (1, 2, 2, 1), (1, 2, 2, 1), "VALID")
    return ftrs


if __name__ == "__main__":
    # Small, module-consistent shapes: chs=(3, 8, 16), batch=2, spatial=32x32.
    chs = (3, 8, 16)
    key = jax.random.PRNGKey(0)
    kx, kp = jax.random.split(key)
    x = jax.random.normal(kx, (2, chs[0], 32, 32), jnp.float32)   # NCHW input
    params = init_encoder_params(kp, chs)

    ftrs = encoder_forward(params, x)
    for f in ftrs:
        jax.block_until_ready(f)

    # Verify against the pure-JAX reference.
    ftrs_ref = _encoder_ref(params, x)
    for got, want in zip(ftrs, ftrs_ref):
        assert got.shape == want.shape, (got.shape, want.shape)
        err = float(jnp.max(jnp.abs(got - want)))
        assert err < 1e-3, err

    print("KERNEL_OK")
</pallas_src>

<mosaic_0001>
module attributes {stable_mosaic.version = 11 : i64} {
  func.func @kernel(%arg0: i32, %arg1: memref<1x8x1024xf32, #tpu.memory_space<vmem>>, %arg2: memref<4x8x8xf32, #tpu.memory_space<vmem>>, %arg3: memref<8x1xf32, #tpu.memory_space<vmem>>, %arg4: memref<4x8x8xf32, #tpu.memory_space<vmem>>, %arg5: memref<8x1xf32, #tpu.memory_space<vmem>>, %arg6: memref<4x16x8xf32, #tpu.memory_space<vmem>>, %arg7: memref<16x1xf32, #tpu.memory_space<vmem>>, %arg8: memref<4x16x16xf32, #tpu.memory_space<vmem>>, %arg9: memref<16x1xf32, #tpu.memory_space<vmem>>, %arg10: memref<1x8x1024xf32, #tpu.memory_space<vmem>>, %arg11: memref<1x16x1024xf32, #tpu.memory_space<vmem>>) attributes {dimension_semantics = [#tpu.dimension_semantics<parallel>], iteration_bounds = array<i64: 2>, scalar_prefetch = 0 : i64, scratch_operands = 0 : i64, tpu.core_type = #tpu.core_type<tc>, window_params = [{transform_indices = @transform_0, window_bounds = array<i64: 1, 8, 1024>}, {pipeline_mode = #tpu.pipeline_mode<synchronous>, transform_indices = @transform_1, window_bounds = array<i64: 4, 8, 8>}, {pipeline_mode = #tpu.pipeline_mode<synchronous>, transform_indices = @transform_2, window_bounds = array<i64: 8, 1>}, {pipeline_mode = #tpu.pipeline_mode<synchronous>, transform_indices = @transform_3, window_bounds = array<i64: 4, 8, 8>}, {pipeline_mode = #tpu.pipeline_mode<synchronous>, transform_indices = @transform_4, window_bounds = array<i64: 8, 1>}, {pipeline_mode = #tpu.pipeline_mode<synchronous>, transform_indices = @transform_5, window_bounds = array<i64: 4, 16, 8>}, {pipeline_mode = #tpu.pipeline_mode<synchronous>, transform_indices = @transform_6, window_bounds = array<i64: 16, 1>}, {pipeline_mode = #tpu.pipeline_mode<synchronous>, transform_indices = @transform_7, window_bounds = array<i64: 4, 16, 16>}, {pipeline_mode = #tpu.pipeline_mode<synchronous>, transform_indices = @transform_8, window_bounds = array<i64: 16, 1>}, {transform_indices = @transform_9, window_bounds = array<i64: 1, 8, 1024>}, {transform_indices = @transform_10, window_bounds = array<i64: 1, 16, 1024>}]} {
    %c0 = arith.constant 0 : index
    %c0_0 = arith.constant 0 : index
    %c0_1 = arith.constant 0 : index
    %0 = vector.load %arg1[%c0, %c0_0, %c0_1] : memref<1x8x1024xf32, #tpu.memory_space<vmem>>, vector<1x8x1024xf32>
    %1 = vector.shape_cast %0 : vector<1x8x1024xf32> to vector<8x1024xf32>
    %c0_2 = arith.constant 0 : index
    %c0_3 = arith.constant 0 : index
    %c0_4 = arith.constant 0 : index
    %2 = vector.load %arg2[%c0_2, %c0_3, %c0_4] : memref<4x8x8xf32, #tpu.memory_space<vmem>>, vector<1x8x8xf32>
    %3 = vector.shape_cast %2 : vector<1x8x8xf32> to vector<8x8xf32>
    %cst = arith.constant dense<0.000000e+00> : vector<8x1024xf32>
    %4 = tpu.matmul %3, %1, %cst {dimension_numbers = #tpu.dot_dimension_numbers<[1], [0], [0], [1], [0, 0, 1, 1], [], []>} : vector<8x8xf32>, vector<8x1024xf32>, vector<8x1024xf32> -> vector<8x1024xf32>
    %c1023_i32 = arith.constant 1023 : i32
    %5 = tpu.dynamic_rotate %1 by %c1023_i32 dim 1 : vector<8x1024xf32>, i32 -> vector<8x1024xf32>
    %c1 = arith.constant 1 : index
    %c0_5 = arith.constant 0 : index
    %c0_6 = arith.constant 0 : index
    %6 = vector.load %arg2[%c1, %c0_5, %c0_6] : memref<4x8x8xf32, #tpu.memory_space<vmem>>, vector<1x8x8xf32>
    %7 = vector.shape_cast %6 : vector<1x8x8xf32> to vector<8x8xf32>
    %cst_7 = arith.constant dense<0.000000e+00> : vector<8x1024xf32>
    %8 = tpu.matmul %7, %5, %cst_7 {dimension_numbers = #tpu.dot_dimension_numbers<[1], [0], [0], [1], [0, 0, 1, 1], [], []>} : vector<8x8xf32>, vector<8x1024xf32>, vector<8x1024xf32> -> vector<8x1024xf32>
    %9 = arith.addf %4, %8 : vector<8x1024xf32>
    %c992_i32 = arith.constant 992 : i32
    %10 = tpu.dynamic_rotate %1 by %c992_i32 dim 1 : vector<8x1024xf32>, i32 -> vector<8x1024xf32>
    %c2 = arith.constant 2 : index
    %c0_8 = arith.constant 0 : index
    %c0_9 = arith.constant 0 : index
    %11 = vector.load %arg2[%c2, %c0_8, %c0_9] : memref<4x8x8xf32, #tpu.memory_space<vmem>>, vector<1x8x8xf32>
    %12 = vector.shape_cast %11 : vector<1x8x8xf32> to vector<8x8xf32>
    %cst_10 = arith.constant dense<0.000000e+00> : vector<8x1024xf32>
    %13 = tpu.matmul %12, %10, %cst_10 {dimension_numbers = #tpu.dot_dimension_numbers<[1], [0], [0], [1], [0, 0, 1, 1], [], []>} : vector<8x8xf32>, vector<8x1024xf32>, vector<8x1024xf32> -> vector<8x1024xf32>
    %14 = arith.addf %9, %13 : vector<8x1024xf32>
    %c991_i32 = arith.constant 991 : i32
    %15 = tpu.dynamic_rotate %1 by %c991_i32 dim 1 : vector<8x1024xf32>, i32 -> vector<8x1024xf32>
    %c3 = arith.constant 3 : index
    %c0_11 = arith.constant 0 : index
    %c0_12 = arith.constant 0 : index
    %16 = vector.load %arg2[%c3, %c0_11, %c0_12] : memref<4x8x8xf32, #tpu.memory_space<vmem>>, vector<1x8x8xf32>
    %17 = vector.shape_cast %16 : vector<1x8x8xf32> to vector<8x8xf32>
    %cst_13 = arith.constant dense<0.000000e+00> : vector<8x1024xf32>
    %18 = tpu.matmul %17, %15, %cst_13 {dimension_numbers = #tpu.dot_dimension_numbers<[1], [0], [0], [1], [0, 0, 1, 1], [], []>} : vector<8x8xf32>, vector<8x1024xf32>, vector<8x1024xf32> -> vector<8x1024xf32>
    %19 = arith.addf %14, %18 : vector<8x1024xf32>
    %c0_14 = arith.constant 0 : index
    %c0_15 = arith.constant 0 : index
    %20 = vector.load %arg3[%c0_14, %c0_15] : memref<8x1xf32, #tpu.memory_space<vmem>>, vector<8x1xf32>
    %21 = vector.broadcast %20 : vector<8x1xf32> to vector<8x1024xf32>
    %22 = arith.addf %19, %21 : vector<8x1024xf32>
    %cst_16 = arith.constant 0.000000e+00 : f32
    %23 = vector.broadcast %cst_16 : f32 to vector<8x1024xf32>
    %24 = arith.maximumf %22, %23 : vector<8x1024xf32>
    %c0_17 = arith.constant 0 : index
    %c0_18 = arith.constant 0 : index
    %c0_19 = arith.constant 0 : index
    %25 = vector.load %arg4[%c0_17, %c0_18, %c0_19] : memref<4x8x8xf32, #tpu.memory_space<vmem>>, vector<1x8x8xf32>
    %26 = vector.shape_cast %25 : vector<1x8x8xf32> to vector<8x8xf32>
    %cst_20 = arith.constant dense<0.000000e+00> : vector<8x1024xf32>
    %27 = tpu.matmul %26, %24, %cst_20 {dimension_numbers = #tpu.dot_dimension_numbers<[1], [0], [0], [1], [0, 0, 1, 1], [], []>} : vector<8x8xf32>, vector<8x1024xf32>, vector<8x1024xf32> -> vector<8x1024xf32>
    %c1023_i32_21 = arith.constant 1023 : i32
    %28 = tpu.dynamic_rotate %24 by %c1023_i32_21 dim 1 : vector<8x1024xf32>, i32 -> vector<8x1024xf32>
    %c1_22 = arith.constant 1 : index
    %c0_23 = arith.constant 0 : index
    %c0_24 = arith.constant 0 : index
    %29 = vector.load %arg4[%c1_22, %c0_23, %c0_24] : memref<4x8x8xf32, #tpu.memory_space<vmem>>, vector<1x8x8xf32>
    %30 = vector.shape_cast %29 : vector<1x8x8xf32> to vector<8x8xf32>
    %cst_25 = arith.constant dense<0.000000e+00> : vector<8x1024xf32>
    %31 = tpu.matmul %30, %28, %cst_25 {dimension_numbers = #tpu.dot_dimension_numbers<[1], [0], [0], [1], [0, 0, 1, 1], [], []>} : vector<8x8xf32>, vector<8x1024xf32>, vector<8x1024xf32> -> vector<8x1024xf32>
    %32 = arith.addf %27, %31 : vector<8x1024xf32>
    %c992_i32_26 = arith.constant 992 : i32
    %33 = tpu.dynamic_rotate %24 by %c992_i32_26 dim 1 : vector<8x1024xf32>, i32 -> vector<8x1024xf32>
    %c2_27 = arith.constant 2 : index
    %c0_28 = arith.constant 0 : index
    %c0_29 = arith.constant 0 : index
    %34 = vector.load %arg4[%c2_27, %c0_28, %c0_29] : memref<4x8x8xf32, #tpu.memory_space<vmem>>, vector<1x8x8xf32>
    %35 = vector.shape_cast %34 : vector<1x8x8xf32> to vector<8x8xf32>
    %cst_30 = arith.constant dense<0.000000e+00> : vector<8x1024xf32>
    %36 = tpu.matmul %35, %33, %cst_30 {dimension_numbers = #tpu.dot_dimension_numbers<[1], [0], [0], [1], [0, 0, 1, 1], [], []>} : vector<8x8xf32>, vector<8x1024xf32>, vector<8x1024xf32> -> vector<8x1024xf32>
    %37 = arith.addf %32, %36 : vector<8x1024xf32>
    %c991_i32_31 = arith.constant 991 : i32
    %38 = tpu.dynamic_rotate %24 by %c991_i32_31 dim 1 : vector<8x1024xf32>, i32 -> vector<8x1024xf32>
    %c3_32 = arith.constant 3 : index
    %c0_33 = arith.constant 0 : index
    %c0_34 = arith.constant 0 : index
    %39 = vector.load %arg4[%c3_32, %c0_33, %c0_34] : memref<4x8x8xf32, #tpu.memory_space<vmem>>, vector<1x8x8xf32>
    %40 = vector.shape_cast %39 : vector<1x8x8xf32> to vector<8x8xf32>
    %cst_35 = arith.constant dense<0.000000e+00> : vector<8x1024xf32>
    %41 = tpu.matmul %40, %38, %cst_35 {dimension_numbers = #tpu.dot_dimension_numbers<[1], [0], [0], [1], [0, 0, 1, 1], [], []>} : vector<8x8xf32>, vector<8x1024xf32>, vector<8x1024xf32> -> vector<8x1024xf32>
    %42 = arith.addf %37, %41 : vector<8x1024xf32>
    %c0_36 = arith.constant 0 : index
    %c0_37 = arith.constant 0 : index
    %43 = vector.load %arg5[%c0_36, %c0_37] : memref<8x1xf32, #tpu.memory_space<vmem>>, vector<8x1xf32>
    %44 = vector.broadcast %43 : vector<8x1xf32> to vector<8x1024xf32>
    %45 = arith.addf %42, %44 : vector<8x1024xf32>
    %cst_38 = arith.constant 0.000000e+00 : f32
    %46 = vector.broadcast %cst_38 : f32 to vector<8x1024xf32>
    %47 = arith.maximumf %45, %46 : vector<8x1024xf32>
    %c0_39 = arith.constant 0 : index
    %c0_40 = arith.constant 0 : index
    %c0_41 = arith.constant 0 : index
    %48 = vector.load %arg10[%c0_39, %c0_40, %c0_41] : memref<1x8x1024xf32, #tpu.memory_space<vmem>>, vector<1x8x1024xf32>
    %49 = vector.shape_cast %48 : vector<1x8x1024xf32> to vector<8x1024xf32>
    %50 = vector.shape_cast %47 : vector<8x1024xf32> to vector<1x8x1024xf32>
    tpu.vector_store %arg10[%c0_39, %c0_40, %c0_41], %50 {strides = array<i32>} : memref<1x8x1024xf32, #tpu.memory_space<vmem>>, vector<1x8x1024xf32>,
    %c1023_i32_42 = arith.constant 1023 : i32
    %51 = tpu.dynamic_rotate %47 by %c1023_i32_42 dim 1 : vector<8x1024xf32>, i32 -> vector<8x1024xf32>
    %52 = arith.maximumf %47, %51 : vector<8x1024xf32>
    %c992_i32_43 = arith.constant 992 : i32
    %53 = tpu.dynamic_rotate %52 by %c992_i32_43 dim 1 : vector<8x1024xf32>, i32 -> vector<8x1024xf32>
    %54 = arith.maximumf %52, %53 : vector<8x1024xf32>
    %c0_44 = arith.constant 0 : index
    %c0_45 = arith.constant 0 : index
    %c0_46 = arith.constant 0 : index
    %55 = vector.load %arg6[%c0_44, %c0_45, %c0_46] : memref<4x16x8xf32, #tpu.memory_space<vmem>>, vector<1x16x8xf32>
    %56 = vector.shape_cast %55 : vector<1x16x8xf32> to vector<16x8xf32>
    %cst_47 = arith.constant dense<0.000000e+00> : vector<16x1024xf32>
    %57 = tpu.matmul %56, %54, %cst_47 {dimension_numbers = #tpu.dot_dimension_numbers<[1], [0], [0], [1], [0, 0, 1, 1], [], []>} : vector<16x8xf32>, vector<8x1024xf32>, vector<16x1024xf32> -> vector<16x1024xf32>
    %c1022_i32 = arith.constant 1022 : i32
    %58 = tpu.dynamic_rotate %54 by %c1022_i32 dim 1 : vector<8x1024xf32>, i32 -> vector<8x1024xf32>
    %c1_48 = arith.constant 1 : index
    %c0_49 = arith.constant 0 : index
    %c0_50 = arith.constant 0 : index
    %59 = vector.load %arg6[%c1_48, %c0_49, %c0_50] : memref<4x16x8xf32, #tpu.memory_space<vmem>>, vector<1x16x8xf32>
    %60 = vector.shape_cast %59 : vector<1x16x8xf32> to vector<16x8xf32>
    %cst_51 = arith.constant dense<0.000000e+00> : vector<16x1024xf32>
    %61 = tpu.matmul %60, %58, %cst_51 {dimension_numbers = #tpu.dot_dimension_numbers<[1], [0], [0], [1], [0, 0, 1, 1], [], []>} : vector<16x8xf32>, vector<8x1024xf32>, vector<16x1024xf32> -> vector<16x1024xf32>
    %62 = arith.addf %57, %61 : vector<16x1024xf32>
    %c960_i32 = arith.constant 960 : i32
    %63 = tpu.dynamic_rotate %54 by %c960_i32 dim 1 : vector<8x1024xf32>, i32 -> vector<8x1024xf32>
    %c2_52 = arith.constant 2 : index
    %c0_53 = arith.constant 0 : index
    %c0_54 = arith.constant 0 : index
    %64 = vector.load %arg6[%c2_52, %c0_53, %c0_54] : memref<4x16x8xf32, #tpu.memory_space<vmem>>, vector<1x16x8xf32>
    %65 = vector.shape_cast %64 : vector<1x16x8xf32> to vector<16x8xf32>
    %cst_55 = arith.constant dense<0.000000e+00> : vector<16x1024xf32>
    %66 = tpu.matmul %65, %63, %cst_55 {dimension_numbers = #tpu.dot_dimension_numbers<[1], [0], [0], [1], [0, 0, 1, 1], [], []>} : vector<16x8xf32>, vector<8x1024xf32>, vector<16x1024xf32> -> vector<16x1024xf32>
    %67 = arith.addf %62, %66 : vector<16x1024xf32>
    %c958_i32 = arith.constant 958 : i32
    %68 = tpu.dynamic_rotate %54 by %c958_i32 dim 1 : vector<8x1024xf32>, i32 -> vector<8x1024xf32>
    %c3_56 = arith.constant 3 : index
    %c0_57 = arith.constant 0 : index
    %c0_58 = arith.constant 0 : index
    %69 = vector.load %arg6[%c3_56, %c0_57, %c0_58] : memref<4x16x8xf32, #tpu.memory_space<vmem>>, vector<1x16x8xf32>
    %70 = vector.shape_cast %69 : vector<1x16x8xf32> to vector<16x8xf32>
    %cst_59 = arith.constant dense<0.000000e+00> : vector<16x1024xf32>
    %71 = tpu.matmul %70, %68, %cst_59 {dimension_numbers = #tpu.dot_dimension_numbers<[1], [0], [0], [1], [0, 0, 1, 1], [], []>} : vector<16x8xf32>, vector<8x1024xf32>, vector<16x1024xf32> -> vector<16x1024xf32>
    %72 = arith.addf %67, %71 : vector<16x1024xf32>
    %c0_60 = arith.constant 0 : index
    %c0_61 = arith.constant 0 : index
    %73 = vector.load %arg7[%c0_60, %c0_61] : memref<16x1xf32, #tpu.memory_space<vmem>>, vector<16x1xf32>
    %74 = vector.broadcast %73 : vector<16x1xf32> to vector<16x1024xf32>
    %75 = arith.addf %72, %74 : vector<16x1024xf32>
    %cst_62 = arith.constant 0.000000e+00 : f32
    %76 = vector.broadcast %cst_62 : f32 to vector<16x1024xf32>
    %77 = arith.maximumf %75, %76 : vector<16x1024xf32>
    %c0_63 = arith.constant 0 : index
    %c0_64 = arith.constant 0 : index
    %c0_65 = arith.constant 0 : index
    %78 = vector.load %arg8[%c0_63, %c0_64, %c0_65] : memref<4x16x16xf32, #tpu.memory_space<vmem>>, vector<1x16x16xf32>
    %79 = vector.shape_cast %78 : vector<1x16x16xf32> to vector<16x16xf32>
    %cst_66 = arith.constant dense<0.000000e+00> : vector<16x1024xf32>
    %80 = tpu.matmul %79, %77, %cst_66 {dimension_numbers = #tpu.dot_dimension_numbers<[1], [0], [0], [1], [0, 0, 1, 1], [], []>} : vector<16x16xf32>, vector<16x1024xf32>, vector<16x1024xf32> -> vector<16x1024xf32>
    %c1022_i32_67 = arith.constant 1022 : i32
    %81 = tpu.dynamic_rotate %77 by %c1022_i32_67 dim 1 : vector<16x1024xf32>, i32 -> vector<16x1024xf32>
    %c1_68 = arith.constant 1 : index
    %c0_69 = arith.constant 0 : index
    %c0_70 = arith.constant 0 : index
    %82 = vector.load %arg8[%c1_68, %c0_69, %c0_70] : memref<4x16x16xf32, #tpu.memory_space<vmem>>, vector<1x16x16xf32>
    %83 = vector.shape_cast %82 : vector<1x16x16xf32> to vector<16x16xf32>
    %cst_71 = arith.constant dense<0.000000e+00> : vector<16x1024xf32>
    %84 = tpu.matmul %83, %81, %cst_71 {dimension_numbers = #tpu.dot_dimension_numbers<[1], [0], [0], [1], [0, 0, 1, 1], [], []>} : vector<16x16xf32>, vector<16x1024xf32>, vector<16x1024xf32> -> vector<16x1024xf32>
    %85 = arith.addf %80, %84 : vector<16x1024xf32>
    %c960_i32_72 = arith.constant 960 : i32
    %86 = tpu.dynamic_rotate %77 by %c960_i32_72 dim 1 : vector<16x1024xf32>, i32 -> vector<16x1024xf32>
    %c2_73 = arith.constant 2 : index
    %c0_74 = arith.constant 0 : index
    %c0_75 = arith.constant 0 : index
    %87 = vector.load %arg8[%c2_73, %c0_74, %c0_75] : memref<4x16x16xf32, #tpu.memory_space<vmem>>, vector<1x16x16xf32>
    %88 = vector.shape_cast %87 : vector<1x16x16xf32> to vector<16x16xf32>
    %cst_76 = arith.constant dense<0.000000e+00> : vector<16x1024xf32>
    %89 = tpu.matmul %88, %86, %cst_76 {dimension_numbers = #tpu.dot_dimension_numbers<[1], [0], [0], [1], [0, 0, 1, 1], [], []>} : vector<16x16xf32>, vector<16x1024xf32>, vector<16x1024xf32> -> vector<16x1024xf32>
    %90 = arith.addf %85, %89 : vector<16x1024xf32>
    %c958_i32_77 = arith.constant 958 : i32
    %91 = tpu.dynamic_rotate %77 by %c958_i32_77 dim 1 : vector<16x1024xf32>, i32 -> vector<16x1024xf32>
    %c3_78 = arith.constant 3 : index
    %c0_79 = arith.constant 0 : index
    %c0_80 = arith.constant 0 : index
    %92 = vector.load %arg8[%c3_78, %c0_79, %c0_80] : memref<4x16x16xf32, #tpu.memory_space<vmem>>, vector<1x16x16xf32>
    %93 = vector.shape_cast %92 : vector<1x16x16xf32> to vector<16x16xf32>
    %cst_81 = arith.constant dense<0.000000e+00> : vector<16x1024xf32>
    %94 = tpu.matmul %93, %91, %cst_81 {dimension_numbers = #tpu.dot_dimension_numbers<[1], [0], [0], [1], [0, 0, 1, 1], [], []>} : vector<16x16xf32>, vector<16x1024xf32>, vector<16x1024xf32> -> vector<16x1024xf32>
    %95 = arith.addf %90, %94 : vector<16x1024xf32>
    %c0_82 = arith.constant 0 : index
    %c0_83 = arith.constant 0 : index
    %96 = vector.load %arg9[%c0_82, %c0_83] : memref<16x1xf32, #tpu.memory_space<vmem>>, vector<16x1xf32>
    %97 = vector.broadcast %96 : vector<16x1xf32> to vector<16x1024xf32>
    %98 = arith.addf %95, %97 : vector<16x1024xf32>
    %cst_84 = arith.constant 0.000000e+00 : f32
    %99 = vector.broadcast %cst_84 : f32 to vector<16x1024xf32>
    %100 = arith.maximumf %98, %99 : vector<16x1024xf32>
    %c0_85 = arith.constant 0 : index
    %c0_86 = arith.constant 0 : index
    %c0_87 = arith.constant 0 : index
    %101 = vector.load %arg11[%c0_85, %c0_86, %c0_87] : memref<1x16x1024xf32, #tpu.memory_space<vmem>>, vector<1x16x1024xf32>
    %102 = vector.shape_cast %101 : vector<1x16x1024xf32> to vector<16x1024xf32>
    %103 = vector.shape_cast %100 : vector<16x1024xf32> to vector<1x16x1024xf32>
    tpu.vector_store %arg11[%c0_85, %c0_86, %c0_87], %103 {strides = array<i32>} : memref<1x16x1024xf32, #tpu.memory_space<vmem>>, vector<1x16x1024xf32>,
    return
  }
  func.func @transform_0(%arg0: i32) -> (i32, i32, i32) {
    %c0_i32 = arith.constant 0 : i32
    %c0_i32_0 = arith.constant 0 : i32
    %c0_i32_1 = arith.constant 0 : i32
    return %arg0, %c0_i32, %c0_i32_0 : i32, i32, i32
  }
  func.func @transform_1(%arg0: i32) -> (i32, i32, i32) {
    %c0_i32 = arith.constant 0 : i32
    %c0_i32_0 = arith.constant 0 : i32
    %c0_i32_1 = arith.constant 0 : i32
    %c0_i32_2 = arith.constant 0 : i32
    return %c0_i32, %c0_i32_0, %c0_i32_1 : i32, i32, i32
  }
  func.func @transform_2(%arg0: i32) -> (i32, i32) {
    %c0_i32 = arith.constant 0 : i32
    %c0_i32_0 = arith.constant 0 : i32
    %c0_i32_1 = arith.constant 0 : i32
    return %c0_i32, %c0_i32_0 : i32, i32
  }
  func.func @transform_3(%arg0: i32) -> (i32, i32, i32) {
    %c0_i32 = arith.constant 0 : i32
    %c0_i32_0 = arith.constant 0 : i32
    %c0_i32_1 = arith.constant 0 : i32
    %c0_i32_2 = arith.constant 0 : i32
    return %c0_i32, %c0_i32_0, %c0_i32_1 : i32, i32, i32
  }
  func.func @transform_4(%arg0: i32) -> (i32, i32) {
    %c0_i32 = arith.constant 0 : i32
    %c0_i32_0 = arith.constant 0 : i32
    %c0_i32_1 = arith.constant 0 : i32
    return %c0_i32, %c0_i32_0 : i32, i32
  }
  func.func @transform_5(%arg0: i32) -> (i32, i32, i32) {
    %c0_i32 = arith.constant 0 : i32
    %c0_i32_0 = arith.constant 0 : i32
    %c0_i32_1 = arith.constant 0 : i32
    %c0_i32_2 = arith.constant 0 : i32
    return %c0_i32, %c0_i32_0, %c0_i32_1 : i32, i32, i32
  }
  func.func @transform_6(%arg0: i32) -> (i32, i32) {
    %c0_i32 = arith.constant 0 : i32
    %c0_i32_0 = arith.constant 0 : i32
    %c0_i32_1 = arith.constant 0 : i32
    return %c0_i32, %c0_i32_0 : i32, i32
  }
  func.func @transform_7(%arg0: i32) -> (i32, i32, i32) {
    %c0_i32 = arith.constant 0 : i32
    %c0_i32_0 = arith.constant 0 : i32
    %c0_i32_1 = arith.constant 0 : i32
    %c0_i32_2 = arith.constant 0 : i32
    return %c0_i32, %c0_i32_0, %c0_i32_1 : i32, i32, i32
  }
  func.func @transform_8(%arg0: i32) -> (i32, i32) {
    %c0_i32 = arith.constant 0 : i32
    %c0_i32_0 = arith.constant 0 : i32
    %c0_i32_1 = arith.constant 0 : i32
    return %c0_i32, %c0_i32_0 : i32, i32
  }
  func.func @transform_9(%arg0: i32) -> (i32, i32, i32) {
    %c0_i32 = arith.constant 0 : i32
    %c0_i32_0 = arith.constant 0 : i32
    %c0_i32_1 = arith.constant 0 : i32
    return %arg0, %c0_i32, %c0_i32_0 : i32, i32, i32
  }
  func.func @transform_10(%arg0: i32) -> (i32, i32, i32) {
    %c0_i32 = arith.constant 0 : i32
    %c0_i32_0 = arith.constant 0 : i32
    %c0_i32_1 = arith.constant 0 : i32
    return %arg0, %c0_i32, %c0_i32_0 : i32, i32, i32
  }
}

</mosaic_0001>

<llo_original>
// kernel: encoder_forward.1
$region0: #{encoder_forward.1}
  #allocation0 [shape = 'u32[]', space=smem, size = 0x4, offset = 0x4, fixed_abs, tag = 'smem constant byte address 0x4 - core index']
  #allocation1 [shape = 'u32[144,128]{1,0:T(1,128)}', space=vmem, size = 0x12000, scoped, tag = 'internal scratch']
  %s0 = inlined_call_operand.vmem [shape: f32[2,8,1024], index: 0, kind: input, shape index: {}]
  %s1 = inlined_call_operand.vmem [shape: f32[4,8,8], index: 1, kind: input, shape index: {}]
  %s2 = inlined_call_operand.vmem [shape: f32[8,1], index: 2, kind: input, shape index: {}]
  %s3 = inlined_call_operand.vmem [shape: f32[4,8,8], index: 3, kind: input, shape index: {}]
  %s4 = inlined_call_operand.vmem [shape: f32[8,1], index: 4, kind: input, shape index: {}]
  %s5 = inlined_call_operand.vmem [shape: f32[4,16,8], index: 5, kind: input, shape index: {}]
  %s6 = inlined_call_operand.vmem [shape: f32[16,1], index: 6, kind: input, shape index: {}]
  %s7 = inlined_call_operand.vmem [shape: f32[4,16,16], index: 7, kind: input, shape index: {}]
  %s8 = inlined_call_operand.vmem [shape: f32[16,1], index: 8, kind: input, shape index: {}]
  %s9 = inlined_call_operand.vmem [shape: f32[2,8,1024], index: 9, kind: output, shape index: {0}]
  %s10 = inlined_call_operand.vmem [shape: f32[2,16,1024], index: 10, kind: output, shape index: {1}]
  %11 = xla_tuple %s9, %s10
  %s12 = sld [smem:[#allocation0]]
  $region77: #{encoder_forward.1} parent=0
    _
  %s14 = ssub.s32 1, %s12
  %s15 = scalar_select 0, %s14, %s12
  loop: start=0, step=1, limit=4
  $region2: #{encoder_forward.1} parent=0 // loop_pre_header
    _
  $region3: #{encoder_forward.1} parent=0 // loop_header
    %s17 = sphi 0, %s21
    %p18 = scmp.ge.s32.totalorder %s17, 4
    %s27 = sphi 0, %s29
    %s30 = sphi 0, %s27
    %s31 = sphi 0, %s30
    %s47 = sphi 0, %s31
    %s51 = sphi 0, %s51
    %s53 = sphi 0, %s51
    %s54 = sphi 0, %s53
    %s68 = sphi 0, %s54
    %s72 = sphi 0, %s72
    %s74 = sphi 0, %s72
    %s75 = sphi 0, %s74
    %s89 = sphi 0, %s75
    %s93 = sphi 0, %s93
    %s95 = sphi 0, %s93
    %s96 = sphi 0, %s95
    %s110 = sphi 0, %s96
    %s114 = sphi 0, %s114
    %s116 = sphi 0, %s114
    %s117 = sphi 0, %s116
    %s131 = sphi 0, %s117
    %s135 = sphi 0, %s135
    %s137 = sphi 0, %s135
    %s138 = sphi 0, %s137
    %s152 = sphi 0, %s138
    %s156 = sphi 0, %s156
    %s158 = sphi 0, %s156
    %s159 = sphi 0, %s158
    %s173 = sphi 0, %s159
    %s177 = sphi 0, %s177
    %s179 = sphi 0, %s177
    %s180 = sphi 0, %s179
    %s194 = sphi 0, %s180
    %s198 = sphi 0, %s198
    %s200 = sphi 0, %s198
    %s201 = sphi 0, %s200
    %s215 = sphi 0, %s201
    %s221 = sphi 0, %s223
    %s224 = sphi 0, %s221
    %s225 = sphi 0, %s224
    %s241 = sphi 0, %s225
    %s247 = sphi 0, %s249
    %s250 = sphi 0, %s247
    %s251 = sphi 0, %s250
    %s267 = sphi 0, %s251
  $region4: #{encoder_forward.1} parent=0 // loop_header_branch
    %20 = sbr.rel (%p18) target = $region8
  $region5: #{encoder_forward.1} parent=0 // loop_body
    %s22 = ssub.s32 %s17, 1
    %s23 = ssub.s32 %s17, 2
    %s24 = sadd.s32 %s17, 1
    %s25 = ssub.s32 %s17, %s24
    %p26 = scmp.eq.s32.totalorder %s25, 0
    %s28 = sadd.s32 %s27, 1
    %s29 = scalar_select %p26, %s27, %s28
    %p32 = pneg %p26
    %p33 = scmp.eq.s32.totalorder %s17, 1
    %p34 = por %p32, %p33
    %p35 = scmp.ne.s32.totalorder %s27, %s30
    %p36 = scmp.eq.s32.totalorder %s17, 0
    %p37 = por %p35, %p36
    %p38 = scmp.ne.s32.totalorder %s27, %s30
    %p39 = scmp.eq.s32.totalorder %s22, 1
    %p40 = por %p38, %p39
    %p41 = scmp.ne.s32.totalorder %s30, %s31
    %p42 = scmp.eq.s32.totalorder %s22, 0
    %p43 = por %p41, %p42
    %p44 = scmp.ne.s32.totalorder %s30, %s31
    %p45 = scmp.eq.s32.totalorder %s23, 1
    %p46 = por %p44, %p45
    %p48 = scmp.ne.s32.totalorder %s31, %s47
    %p49 = scmp.eq.s32.totalorder %s23, 0
    %p50 = por %p48, %p49
    %s52 = sadd.s32 %s51, 1
    %p55 = scmp.eq.s32.totalorder %s17, 1
    %p56 = scmp.ne.s32.totalorder %s51, %s53
    %p57 = scmp.eq.s32.totalorder %s17, 0
    %p58 = por %p56, %p57
    %p59 = scmp.ne.s32.totalorder %s51, %s53
    %p60 = scmp.eq.s32.totalorder %s22, 1
    %p61 = por %p59, %p60
    %p62 = scmp.ne.s32.totalorder %s53, %s54
    %p63 = scmp.eq.s32.totalorder %s22, 0
    %p64 = por %p62, %p63
    %p65 = scmp.ne.s32.totalorder %s53, %s54
    %p66 = scmp.eq.s32.totalorder %s23, 1
    %p67 = por %p65, %p66
    %p69 = scmp.ne.s32.totalorder %s54, %s68
    %p70 = scmp.eq.s32.totalorder %s23, 0
    %p71 = por %p69, %p70
    %s73 = sadd.s32 %s72, 1
    %p76 = scmp.eq.s32.totalorder %s17, 1
    %p77 = scmp.ne.s32.totalorder %s72, %s74
    %p78 = scmp.eq.s32.totalorder %s17, 0
    %p79 = por %p77, %p78
    %p80 = scmp.ne.s32.totalorder %s72, %s74
    %p81 = scmp.eq.s32.totalorder %s22, 1
    %p82 = por %p80, %p81
    %p83 = scmp.ne.s32.totalorder %s74, %s75
    %p84 = scmp.eq.s32.totalorder %s22, 0
    %p85 = por %p83, %p84
    %p86 = scmp.ne.s32.totalorder %s74, %s75
    %p87 = scmp.eq.s32.totalorder %s23, 1
    %p88 = por %p86, %p87
    %p90 = scmp.ne.s32.totalorder %s75, %s89
    %p91 = scmp.eq.s32.totalorder %s23, 0
    %p92 = por %p90, %p91
    %s94 = sadd.s32 %s93, 1
    %p97 = scmp.eq.s32.totalorder %s17, 1
    %p98 = scmp.ne.s32.totalorder %s93, %s95
    %p99 = scmp.eq.s32.totalorder %s17, 0
    %p100 = por %p98, %p99
    %p101 = scmp.ne.s32.totalorder %s93, %s95
    %p102 = scmp.eq.s32.totalorder %s22, 1
    %p103 = por %p101, %p102
    %p104 = scmp.ne.s32.totalorder %s95, %s96
    %p105 = scmp.eq.s32.totalorder %s22, 0
    %p106 = por %p104, %p105
    %p107 = scmp.ne.s32.totalorder %s95, %s96
    %p108 = scmp.eq.s32.totalorder %s23, 1
    %p109 = por %p107, %p108
    %p111 = scmp.ne.s32.totalorder %s96, %s110
    %p112 = scmp.eq.s32.totalorder %s23, 0
    %p113 = por %p111, %p112
    %s115 = sadd.s32 %s114, 1
    %p118 = scmp.eq.s32.totalorder %s17, 1
    %p119 = scmp.ne.s32.totalorder %s114, %s116
    %p120 = scmp.eq.s32.totalorder %s17, 0
    %p121 = por %p119, %p120
    %p122 = scmp.ne.s32.totalorder %s114, %s116
    %p123 = scmp.eq.s32.totalorder %s22, 1
    %p124 = por %p122, %p123
    %p125 = scmp.ne.s32.totalorder %s116, %s117
    %p126 = scmp.eq.s32.totalorder %s22, 0
    %p127 = por %p125, %p126
    %p128 = scmp.ne.s32.totalorder %s116, %s117
    %p129 = scmp.eq.s32.totalorder %s23, 1
    %p130 = por %p128, %p129
    %p132 = scmp.ne.s32.totalorder %s117, %s131
    %p133 = scmp.eq.s32.totalorder %s23, 0
    %p134 = por %p132, %p133
    %s136 = sadd.s32 %s135, 1
    %p139 = scmp.eq.s32.totalorder %s17, 1
    %p140 = scmp.ne.s32.totalorder %s135, %s137
    %p141 = scmp.eq.s32.totalorder %s17, 0
    %p142 = por %p140, %p141
    %p143 = scmp.ne.s32.totalorder %s135, %s137
    %p144 = scmp.eq.s32.totalorder %s22, 1
    %p145 = por %p143, %p144
    %p146 = scmp.ne.s32.totalorder %s137, %s138
    %p147 = scmp.eq.s32.totalorder %s22, 0
    %p148 = por %p146, %p147
    %p149 = scmp.ne.s32.totalorder %s137, %s138
    %p150 = scmp.eq.s32.totalorder %s23, 1
    %p151 = por %p149, %p150
    %p153 = scmp.ne.s32.totalorder %s138, %s152
    %p154 = scmp.eq.s32.totalorder %s23, 0
    %p155 = por %p153, %p154
    %s157 = sadd.s32 %s156, 1
    %p160 = scmp.eq.s32.totalorder %s17, 1
    %p161 = scmp.ne.s32.totalorder %s156, %s158
    %p162 = scmp.eq.s32.totalorder %s17, 0
    %p163 = por %p161, %p162
    %p164 = scmp.ne.s32.totalorder %s156, %s158
    %p165 = scmp.eq.s32.totalorder %s22, 1
    %p166 = por %p164, %p165
    %p167 = scmp.ne.s32.totalorder %s158, %s159
    %p168 = scmp.eq.s32.totalorder %s22, 0
    %p169 = por %p167, %p168
    %p170 = scmp.ne.s32.totalorder %s158, %s159
    %p171 = scmp.eq.s32.totalorder %s23, 1
    %p172 = por %p170, %p171
    %p174 = scmp.ne.s32.totalorder %s159, %s173
    %p175 = scmp.eq.s32.totalorder %s23, 0
    %p176 = por %p174, %p175
    %s178 = sadd.s32 %s177, 1
    %p181 = scmp.eq.s32.totalorder %s17, 1
    %p182 = scmp.ne.s32.totalorder %s177, %s179
    %p183 = scmp.eq.s32.totalorder %s17, 0
    %p184 = por %p182, %p183
    %p185 = scmp.ne.s32.totalorder %s177, %s179
    %p186 = scmp.eq.s32.totalorder %s22, 1
    %p187 = por %p185, %p186
    %p188 = scmp.ne.s32.totalorder %s179, %s180
    %p189 = scmp.eq.s32.totalorder %s22, 0
    %p190 = por %p188, %p189
    %p191 = scmp.ne.s32.totalorder %s179, %s180
    %p192 = scmp.eq.s32.totalorder %s23, 1
    %p193 = por %p191, %p192
    %p195 = scmp.ne.s32.totalorder %s180, %s194
    %p196 = scmp.eq.s32.totalorder %s23, 0
    %p197 = por %p195, %p196
    %s199 = sadd.s32 %s198, 1
    %p202 = scmp.eq.s32.totalorder %s17, 1
    %p203 = scmp.ne.s32.totalorder %s198, %s200
    %p204 = scmp.eq.s32.totalorder %s17, 0
    %p205 = por %p203, %p204
    %p206 = scmp.ne.s32.totalorder %s198, %s200
    %p207 = scmp.eq.s32.totalorder %s22, 1
    %p208 = por %p206, %p207
    %p209 = scmp.ne.s32.totalorder %s200, %s201
    %p210 = scmp.eq.s32.totalorder %s22, 0
    %p211 = por %p209, %p210
    %p212 = scmp.ne.s32.totalorder %s200, %s201
    %p213 = scmp.eq.s32.totalorder %s23, 1
    %p214 = por %p212, %p213
    %p216 = scmp.ne.s32.totalorder %s201, %s215
    %p217 = scmp.eq.s32.totalorder %s23, 0
    %p218 = por %p216, %p217
    %s219 = ssub.s32 %s17, %s24
    %p220 = scmp.eq.s32.totalorder %s219, 0
    %s222 = sadd.s32 %s221, 1
    %s223 = scalar_select %p220, %s221, %s222
    %p226 = pneg %p220
    %p227 = scmp.eq.s32.totalorder %s17, 1
    %p228 = por %p226, %p227
    %p229 = scmp.ne.s32.totalorder %s221, %s224
    %p230 = scmp.eq.s32.totalorder %s17, 0
    %p231 = por %p229, %p230
    %p232 = scmp.ne.s32.totalorder %s221, %s224
    %p233 = scmp.eq.s32.totalorder %s22, 1
    %p234 = por %p232, %p233
    %p235 = scmp.ne.s32.totalorder %s224, %s225
    %p236 = scmp.eq.s32.totalorder %s22, 0
    %p237 = por %p235, %p236
    %p238 = scmp.ne.s32.totalorder %s224, %s225
    %p239 = scmp.eq.s32.totalorder %s23, 1
    %p240 = por %p238, %p239
    %p242 = scmp.ne.s32.totalorder %s225, %s241
    %p243 = scmp.eq.s32.totalorder %s23, 0
    %p244 = por %p242, %p243
    %s245 = ssub.s32 %s17, %s24
    %p246 = scmp.eq.s32.totalorder %s245, 0
    %s248 = sadd.s32 %s247, 1
    %s249 = scalar_select %p246, %s247, %s248
    %p252 = pneg %p246
    %p253 = scmp.eq.s32.totalorder %s17, 1
    %p254 = por %p252, %p253
    %p255 = scmp.ne.s32.totalorder %s247, %s250
    %p256 = scmp.eq.s32.totalorder %s17, 0
    %p257 = por %p255, %p256
    %p258 = scmp.ne.s32.totalorder %s247, %s250
    %p259 = scmp.eq.s32.totalorder %s22, 1
    %p260 = por %p258, %p259
    %p261 = scmp.ne.s32.totalorder %s250, %s251
    %p262 = scmp.eq.s32.totalorder %s22, 0
    %p263 = por %p261, %p262
    %p264 = scmp.ne.s32.totalorder %s250, %s251
    %p265 = scmp.eq.s32.totalorder %s23, 1
    %p266 = por %p264, %p265
    %p268 = scmp.ne.s32.totalorder %s251, %s267
    %p269 = scmp.eq.s32.totalorder %s23, 0
    %p270 = por %p268, %p269
    %p271 = scmp.le.s32.totalorder 1, %s17
    %p272 = scmp.lt.s32.totalorder %s17, 3
    %p273 = pnand %p271, %p272
    %p274 = pneg %p273
    // Predicated region
    $region9: #{encoder_forward.1} parent=5 // pred_check
      _
    $region10: #{encoder_forward.1} parent=5 // pred_check_branch
      %276 = sbr.rel (%p273) target = $region12
    $region11: #{encoder_forward.1} parent=5 // pred_region
      %s277 = ssub.s32 %s17, 1
      // Predicated region
      $region13: #{encoder_forward.1} parent=11 // pred_check
        %p278 = pneg %p64
      $region14: #{encoder_forward.1} parent=11 // pred_check_branch
        %280 = sbr.rel (%p278) target = $region16
      $region15: #{encoder_forward.1} parent=11 // pred_region
        _
      $region16: #{encoder_forward.1} parent=11 // pred_fallthru
        _
      // Predicated region
      $region17: #{encoder_forward.1} parent=11 // pred_check
        %p281 = pneg %p85
      $region18: #{encoder_forward.1} parent=11 // pred_check_branch
        %283 = sbr.rel (%p281) target = $region20
      $region19: #{encoder_forward.1} parent=11 // pred_region
        _
      $region20: #{encoder_forward.1} parent=11 // pred_fallthru
        _
      // Predicated region
      $region21: #{encoder_forward.1} parent=11 // pred_check
        %p284 = pneg %p106
      $region22: #{encoder_forward.1} parent=11 // pred_check_branch
        %286 = sbr.rel (%p284) target = $region24
      $region23: #{encoder_forward.1} parent=11 // pred_region
        _
      $region24: #{encoder_forward.1} parent=11 // pred_fallthru
        _
      // Predicated region
      $region25: #{encoder_forward.1} parent=11 // pred_check
        %p287 = pneg %p127
      $region26: #{encoder_forward.1} parent=11 // pred_check_branch
        %289 = sbr.rel (%p287) target = $region28
      $region27: #{encoder_forward.1} parent=11 // pred_region
        _
      $region28: #{encoder_forward.1} parent=11 // pred_fallthru
        _
      // Predicated region
      $region29: #{encoder_forward.1} parent=11 // pred_check
        %p290 = pneg %p148
      $region30: #{encoder_forward.1} parent=11 // pred_check_branch
        %292 = sbr.rel (%p290) target = $region32
      $region31: #{encoder_forward.1} parent=11 // pred_region
        _
      $region32: #{encoder_forward.1} parent=11 // pred_fallthru
        _
      // Predicated region
      $region33: #{encoder_forward.1} parent=11 // pred_check
        %p293 = pneg %p169
      $region34: #{encoder_forward.1} parent=11 // pred_check_branch
        %295 = sbr.rel (%p293) target = $region36
      $region35: #{encoder_forward.1} parent=11 // pred_region
        _
      $region36: #{encoder_forward.1} parent=11 // pred_fallthru
        _
      // Predicated region
      $region37: #{encoder_forward.1} parent=11 // pred_check
        %p296 = pneg %p190
      $region38: #{encoder_forward.1} parent=11 // pred_check_branch
        %298 = sbr.rel (%p296) target = $region40
      $region39: #{encoder_forward.1} parent=11 // pred_region
        _
      $region40: #{encoder_forward.1} parent=11 // pred_fallthru
        _
      // Predicated region
      $region41: #{encoder_forward.1} parent=11 // pred_check
        %p299 = pneg %p211
      $region42: #{encoder_forward.1} parent=11 // pred_check_branch
        %301 = sbr.rel (%p299) target = $region44
      $region43: #{encoder_forward.1} parent=11 // pred_region
        _
      $region44: #{encoder_forward.1} parent=11 // pred_fallthru
        _
    $region12: #{encoder_forward.1} parent=5 // pred_fallthru
      _
    %p302 = scmp.lt.s32.totalorder %s17, 2
    // Predicated region
    $region45: #{encoder_forward.1} parent=5 // pred_check
      %p303 = pneg %p302
    $region46: #{encoder_forward.1} parent=5 // pred_check_branch
      %305 = sbr.rel (%p303) target = $region48
    $region47: #{encoder_forward.1} parent=5 // pred_region
      // Predicated region
      $region49: #{encoder_forward.1} parent=47 // pred_check
        %p306 = pneg %p37
      $region50: #{encoder_forward.1} parent=47 // pred_check_branch
        %308 = sbr.rel (%p306) target = $region52
      $region51: #{encoder_forward.1} parent=47 // pred_region
        %p309 = scmp.lt.s32.totalorder %s17, 1
        %s310 = scalar_select %p309, %s17, 1
        %s311 = smul.addr %s310, 8
        %s312 = smul.addr %s311, 8
        %s313 = scalar_lea.vmem %s0, %s312
      $region52: #{encoder_forward.1} parent=47 // pred_fallthru
        _
    $region48: #{encoder_forward.1} parent=5 // pred_fallthru
      _
    %p314 = scmp.le.s32.totalorder 1, %s17
    %p315 = scmp.lt.s32.totalorder %s17, 3
    %p316 = pnand %p314, %p315
    %p317 = pneg %p316
    // Predicated region
    $region53: #{encoder_forward.1} parent=5 // pred_check
      _
    $region54: #{encoder_forward.1} parent=5 // pred_check_branch
      %319 = sbr.rel (%p316) target = $region56
    $region55: #{encoder_forward.1} parent=5 // pred_region
      %s320 = ssub.s32 %s17, 1
      %p321 = scmp.lt.s32.totalorder %s22, 1
      %s322 = scalar_select %p321, %s22, 1
      %s323 = smul.addr %s322, 8
      %s324 = smul.addr %s323, 8
      %s325 = scalar_lea.vmem %s0, %s324
      %p326 = pneg %p43
      %p327 = pneg %p40
      %p328 = pneg %p64
      %p329 = pneg %p61
      %p330 = pneg %p85
      %p331 = pneg %p82
      %p332 = pneg %p106
      %p333 = pneg %p103
      %p334 = pneg %p127
      %p335 = pneg %p124
      %p336 = pneg %p148
      %p337 = pneg %p145
      %p338 = pneg %p169
      %p339 = pneg %p166
      %p340 = pneg %p190
      %p341 = pneg %p187
      %p342 = pneg %p211
      %p343 = pneg %p208
      %p344 = pneg %p237
      %p345 = pneg %p234
      %p346 = scmp.lt.s32.totalorder %s22, 1
      %s347 = scalar_select %p346, %s22, 1
      %s348 = smul.addr %s347, 8
      %s349 = smul.addr %s348, 8
      %s350 = scalar_lea.vmem %s9, %s349
      %p351 = pneg %p263
      %p352 = pneg %p260
      %p353 = scmp.lt.s32.totalorder %s22, 1
      %s354 = scalar_select %p353, %s22, 1
      %s355 = smul.addr %s354, 16
      %s356 = smul.addr %s355, 8
      %s357 = scalar_lea.vmem %s10, %s356
      %p358 = scmp.lt.s32.totalorder %s22, 1
      %s359 = scalar_select %p358, %s22, 1
      %s360 = smul.addr %s359, 8
      %s361 = smul.addr %s360, 8
      %s362 = scalar_lea.vmem %s0, %s361
      %p363 = scmp.lt.s32.totalorder %s22, 1
      %s364 = scalar_select %p363, %s22, 1
      %s365 = smul.addr %s364, 8
      %s366 = smul.addr %s365, 8
      %s367 = scalar_lea.vmem %s9, %s366
      %p368 = scmp.lt.s32.totalorder %s22, 1
      %s369 = scalar_select %p368, %s22, 1
      %s370 = smul.addr %s369, 16
      %s371 = smul.addr %s370, 8
      %s372 = scalar_lea.vmem %s10, %s371
      %v373 = vld [vmem:[%s362] sm:$0xff]
      %v374 = vld [vmem:[%s362 + $0x8] sm:$0xff]
      %v375 = vld [vmem:[%s362 + $0x10] sm:$0xff]
      %v376 = vld [vmem:[%s362 + $0x18] sm:$0xff]
      %v377 = vld [vmem:[%s362 + $0x20] sm:$0xff]
      %v378 = vld [vmem:[%s362 + $0x28] sm:$0xff]
      %v379 = vld [vmem:[%s362 + $0x30] sm:$0xff]
      %v380 = vld [vmem:[%s362 + $0x38] sm:$0xff]
      %v381 = vld [vmem:[%s1] sm:$0xff]
      %382 = vrot.lane.b32.xlu0 %v373, 127
      %v383 = vpop.permute.xlu0 %382
      %384 = vrot.lane.b32.xlu0 %v374, 127
      %v385 = vpop.permute.xlu0 %384
      %386 = vrot.lane.b32.xlu0 %v375, 127
      %v387 = vpop.permute.xlu0 %386
      %388 = vrot.lane.b32.xlu0 %v376, 127
      %v389 = vpop.permute.xlu0 %388
      %390 = vrot.lane.b32.xlu0 %v377, 127
      %v391 = vpop.permute.xlu0 %390
      %392 = vrot.lane.b32.xlu0 %v378, 127
      %v393 = vpop.permute.xlu0 %392
      %394 = vrot.lane.b32.xlu0 %v379, 127
      %v395 = vpop.permute.xlu0 %394
      %396 = vrot.lane.b32.xlu0 %v380, 127
      %v397 = vpop.permute.xlu0 %396
      %v398 = vlaneseq
      %v399 = vand.u32 %v398, 127
      %vm400 = vcmp.lt.s32.totalorder %v399, 127
      %v401 = vsel %vm400, %v395, %v397
      %v402 = vsel %vm400, %v393, %v395
      %v403 = vsel %vm400, %v391, %v393
      %v404 = vsel %vm400, %v389, %v391
      %v405 = vsel %vm400, %v387, %v389
      %v406 = vsel %vm400, %v385, %v387
      %v407 = vsel %vm400, %v383, %v385
      %v408 = vsel %vm400, %v397, %v383
      %s409 = scalar_lea.vmem %s1, 8
      %v410 = vld [vmem:[%s409] sm:$0xff]
      %vm411 = vcmask 64512
      %v413 = vsel %vm411, %v410, 0
      %415 = vmatprep.subr.mxu0 %v406
      %416 = vmatpush1.msra.mxu0 %v407
      %417 = vmatprep.subr.mxu0 0.0
      %418 = vmatpush1.msra.mxu0 0.0
      %419 = vmatprep.subr.mxu0 0.0
      %420 = vmatpush1.msra.mxu0 0.0
      %421 = vmatprep.subr.mxu0 0.0
      %422 = vmatpush1.msra.mxu0 0.0
      %423 = vmatprep.subr.mxu0 0.0
      %424 = vmatpush1.msra.mxu0 0.0
      %425 = vmatprep.subr.mxu0 0.0
      %426 = vmatpush1.msra.mxu0 0.0
      %427 = vmatprep.subr.mxu0 0.0
      %428 = vmatpush1.msra.mxu0 0.0
      %429 = vmatprep.subr.mxu0 0.0
      %430 = vmatpush1.msra.mxu0 0.0
      %431 = vmatprep.subr.mxu0 0.0
      %432 = vmatpush1.msra.mxu0 0.0
      %433 = vmatprep.subr.mxu0 0.0
      %434 = vmatpush1.msra.mxu0 0.0
      %435 = vmatprep.subr.mxu0 0.0
      %436 = vmatpush1.msra.mxu0 0.0
      %437 = vmatprep.subr.mxu0 0.0
      %438 = vmatpush1.msra.mxu0 0.0
      %439 = vmatprep.subr.mxu0 0.0
      %440 = vmatpush1.msra.mxu0 0.0
      %441 = vmatprep.subr.mxu0 0.0
      %442 = vmatpush1.msra.mxu0 0.0
      %443 = vmatprep.subr.mxu0 0.0
      %444 = vmatpush1.msra.mxu0 0.0
      %445 = vmatprep.subr.mxu0 0.0
      %446 = vmatpush1.msra.mxu0 0.0
      %447 = vmatprep.subr.mxu0 0.0
      %448 = vmatpush1.msra.mxu0 0.0
      %449 = vmatprep.subr.mxu0 0.0
      %450 = vmatpush1.msra.mxu0 0.0
      %451 = vmatprep.subr.mxu0 0.0
      %452 = vmatpush1.msra.mxu0 0.0
      %453 = vmatprep.subr.mxu0 0.0
      %454 = vmatpush1.msra.mxu0 0.0
      %455 = vmatprep.subr.mxu0 0.0
      %456 = vmatpush1.msra.mxu0 0.0
      %457 = vmatprep.subr.mxu0 0.0
      %458 = vmatpush1.msra.mxu0 0.0
      %459 = vmatprep.subr.mxu0 0.0
      %460 = vmatpush1.msra.mxu0 0.0
      %461 = vmatprep.subr.mxu0 0.0
      %462 = vmatpush1.msra.mxu0 0.0
      %463 = vmatprep.subr.mxu0 0.0
      %464 = vmatpush1.msra.mxu0 0.0
      %465 = vmatprep.subr.mxu0 0.0
      %466 = vmatpush1.msra.mxu0 0.0
      %467 = vmatprep.subr.mxu0 0.0
      %468 = vmatpush1.msra.mxu0 0.0
      %469 = vmatprep.subr.mxu0 0.0
      %470 = vmatpush1.msra.mxu0 0.0
      %471 = vmatprep.subr.mxu0 0.0
      %472 = vmatpush1.msra.mxu0 0.0
      %473 = vmatprep.subr.mxu0 0.0
      %474 = vmatpush1.msra.mxu0 0.0
      %475 = vmatprep.subr.mxu0 0.0
      %476 = vmatpush1.msra.mxu0 0.0
      %477 = vmatprep.subr.mxu0 0.0
      %478 = vmatpush1.msra.mxu0 0.0
      %479 = vmatprep.mubr.f32.mxu0 0.0
      %480 = vmatmul.mubr.f32.gmra.mrb[0].mxu0 %v413
      %v481 = vpop.f32.mrb[0].mxu0
      %v482 = vadd.f32 0.0, %v481
      %v483 = vpop.f32.mrb[0].mxu0
      %v484 = vadd.f32 0.0, %v483
      %485 = vdwg.mxu0
      %486 = vmatprep.subr.mxu0 %v404
      %487 = vmatpush1.msra.mxu0 %v405
      %488 = vmatprep.subr.mxu0 0.0
      %489 = vmatpush1.msra.mxu0 0.0
      %490 = vmatprep.subr.mxu0 0.0
      %491 = vmatpush1.msra.mxu0 0.0
      %492 = vmatprep.subr.mxu0 0.0
      %493 = vmatpush1.msra.mxu0 0.0
      %494 = vmatprep.subr.mxu0 0.0
      %495 = vmatpush1.msra.mxu0 0.0
      %496 = vmatprep.subr.mxu0 0.0
      %497 = vmatpush1.msra.mxu0 0.0
      %498 = vmatprep.subr.mxu0 0.0
      %499 = vmatpush1.msra.mxu0 0.0
      %500 = vmatprep.subr.mxu0 0.0
      %501 = vmatpush1.msra.mxu0 0.0
      %502 = vmatprep.subr.mxu0 0.0
      %503 = vmatpush1.msra.mxu0 0.0
      %504 = vmatprep.subr.mxu0 0.0
      %505 = vmatpush1.msra.mxu0 0.0
      %506 = vmatprep.subr.mxu0 0.0
      %507 = vmatpush1.msra.mxu0 0.0
      %508 = vmatprep.subr.mxu0 0.0
      %509 = vmatpush1.msra.mxu0 0.0
      %510 = vmatprep.subr.mxu0 0.0
      %511 = vmatpush1.msra.mxu0 0.0
      %512 = vmatprep.subr.mxu0 0.0
      %513 = vmatpush1.msra.mxu0 0.0
      %514 = vmatprep.subr.mxu0 0.0
      %515 = vmatpush1.msra.mxu0 0.0
      %516 = vmatprep.subr.mxu0 0.0
      %517 = vmatpush1.msra.mxu0 0.0
      %518 = vmatprep.subr.mxu0 0.0
      %519 = vmatpush1.msra.mxu0 0.0
      %520 = vmatprep.subr.mxu0 0.0
      %521 = vmatpush1.msra.mxu0 0.0
      %522 = vmatprep.subr.mxu0 0.0
      %523 = vmatpush1.msra.mxu0 0.0
      %524 = vmatprep.subr.mxu0 0.0
      %525 = vmatpush1.msra.mxu0 0.0
      %526 = vmatprep.subr.mxu0 0.0
      %527 = vmatpush1.msra.mxu0 0.0
      %528 = vmatprep.subr.mxu0 0.0
      %529 = vmatpush1.msra.mxu0 0.0
      %530 = vmatprep.subr.mxu0 0.0
      %531 = vmatpush1.msra.mxu0 0.0
      %532 = vmatprep.subr.mxu0 0.0
      %533 = vmatpush1.msra.mxu0 0.0
      %534 = vmatprep.subr.mxu0 0.0
      %535 = vmatpush1.msra.mxu0 0.0
      %536 = vmatprep.subr.mxu0 0.0
      %537 = vmatpush1.msra.mxu0 0.0
      %538 = vmatprep.subr.mxu0 0.0
      %539 = vmatpush1.msra.mxu0 0.0
      %540 = vmatprep.subr.mxu0 0.0
      %541 = vmatpush1.msra.mxu0 0.0
      %542 = vmatprep.subr.mxu0 0.0
      %543 = vmatpush1.msra.mxu0 0.0
      %544 = vmatprep.subr.mxu0 0.0
      %545 = vmatpush1.msra.mxu0 0.0
      %546 = vmatprep.subr.mxu0 0.0
      %547 = vmatpush1.msra.mxu0 0.0
      %548 = vmatprep.subr.mxu0 0.0
      %549 = vmatpush1.msra.mxu0 0.0
      %550 = vmatprep.mubr.f32.mxu0 0.0
      %551 = vmatmul.mubr.f32.gmra.mrb[0].mxu0 %v413
      %v552 = vpop.f32.mrb[0].mxu0
      %v553 = vadd.f32 0.0, %v552
      %v554 = vpop.f32.mrb[0].mxu0
      %v555 = vadd.f32 0.0, %v554
      %556 = vdwg.mxu0
      %557 = vmatprep.subr.mxu0 %v402
      %558 = vmatpush1.msra.mxu0 %v403
      %559 = vmatprep.subr.mxu0 0.0
      %560 = vmatpush1.msra.mxu0 0.0
      %561 = vmatprep.subr.mxu0 0.0
      %562 = vmatpush1.msra.mxu0 0.0
      %563 = vmatprep.subr.mxu0 0.0
      %564 = vmatpush1.msra.mxu0 0.0
      %565 = vmatprep.subr.mxu0 0.0
      %566 = vmatpush1.msra.mxu0 0.0
      %567 = vmatprep.subr.mxu0 0.0
      %568 = vmatpush1.msra.mxu0 0.0
      %569 = vmatprep.subr.mxu0 0.0
      %570 = vmatpush1.msra.mxu0 0.0
      %571 = vmatprep.subr.mxu0 0.0
      %572 = vmatpush1.msra.mxu0 0.0
      %573 = vmatprep.subr.mxu0 0.0
      %574 = vmatpush1.msra.mxu0 0.0
      %575 = vmatprep.subr.mxu0 0.0
      %576 = vmatpush1.msra.mxu0 0.0
      %577 = vmatprep.subr.mxu0 0.0
      %578 = vmatpush1.msra.mxu0 0.0
      %579 = vmatprep.subr.mxu0 0.0
      %580 = vmatpush1.msra.mxu0 0.0
      %581 = vmatprep.subr.mxu0 0.0
      %582 = vmatpush1.msra.mxu0 0.0
      %583 = vmatprep.subr.mxu0 0.0
      %584 = vmatpush1.msra.mxu0 0.0
      %585 = vmatprep.subr.mxu0 0.0
      %586 = vmatpush1.msra.mxu0 0.0
      %587 = vmatprep.subr.mxu0 0.0
      %588 = vmatpush1.msra.mxu0 0.0
      %589 = vmatprep.subr.mxu0 0.0
      %590 = vmatpush1.msra.mxu0 0.0
      %591 = vmatprep.subr.mxu0 0.0
      %592 = vmatpush1.msra.mxu0 0.0
      %593 = vmatprep.subr.mxu0 0.0
      %594 = vmatpush1.msra.mxu0 0.0
      %595 = vmatprep.subr.mxu0 0.0
      %596 = vmatpush1.msra.mxu0 0.0
      %597 = vmatprep.subr.mxu0 0.0
      %598 = vmatpush1.msra.mxu0 0.0
      %599 = vmatprep.subr.mxu0 0.0
      %600 = vmatpush1.msra.mxu0 0.0
      %601 = vmatprep.subr.mxu0 0.0
      %602 = vmatpush1.msra.mxu0 0.0
      %603 = vmatprep.subr.mxu0 0.0
      %604 = vmatpush1.msra.mxu0 0.0
      %605 = vmatprep.subr.mxu0 0.0
      %606 = vmatpush1.msra.mxu0 0.0
      %607 = vmatprep.subr.mxu0 0.0
      %608 = vmatpush1.msra.mxu0 0.0
      %609 = vmatprep.subr.mxu0 0.0
      %610 = vmatpush1.msra.mxu0 0.0
      %611 = vmatprep.subr.mxu0 0.0
      %612 = vmatpush1.msra.mxu0 0.0
      %613 = vmatprep.subr.mxu0 0.0
      %614 = vmatpush1.msra.mxu0 0.0
      %615 = vmatprep.subr.mxu0 0.0
      %616 = vmatpush1.msra.mxu0 0.0
      %617 = vmatprep.subr.mxu0 0.0
      %618 = vmatpush1.msra.mxu0 0.0
      %619 = vmatprep.subr.mxu0 0.0
      %620 = vmatpush1.msra.mxu0 0.0
      %621 = vmatprep.mubr.f32.mxu0 0.0
      %622 = vmatmul.mubr.f32.gmra.mrb[0].mxu0 %v413
      %v623 = vpop.f32.mrb[0].mxu0
      %v624 = vadd.f32 0.0, %v623
      %v625 = vpop.f32.mrb[0].mxu0
      %v626 = vadd.f32 0.0, %v625
      %627 = vdwg.mxu0
      %628 = vmatprep.subr.mxu0 %v408
      %629 = vmatpush1.msra.mxu0 %v401
      %630 = vmatprep.subr.mxu0 0.0
      %631 = vmatpush1.msra.mxu0 0.0
      %632 = vmatprep.subr.mxu0 0.0
      %633 = vmatpush1.msra.mxu0 0.0
      %634 = vmatprep.subr.mxu0 0.0
      %635 = vmatpush1.msra.mxu0 0.0
      %636 = vmatprep.subr.mxu0 0.0
      %637 = vmatpush1.msra.mxu0 0.0
      %638 = vmatprep.subr.mxu0 0.0
      %639 = vmatpush1.msra.mxu0 0.0
      %640 = vmatprep.subr.mxu0 0.0
      %641 = vmatpush1.msra.mxu0 0.0
      %642 = vmatprep.subr.mxu0 0.0
      %643 = vmatpush1.msra.mxu0 0.0
      %644 = vmatprep.subr.mxu0 0.0
      %645 = vmatpush1.msra.mxu0 0.0
      %646 = vmatprep.subr.mxu0 0.0
      %647 = vmatpush1.msra.mxu0 0.0
      %648 = vmatprep.subr.mxu0 0.0
      %649 = vmatpush1.msra.mxu0 0.0
      %650 = vmatprep.subr.mxu0 0.0
      %651 = vmatpush1.msra.mxu0 0.0
      %652 = vmatprep.subr.mxu0 0.0
      %653 = vmatpush1.msra.mxu0 0.0
      %654 = vmatprep.subr.mxu0 0.0
      %655 = vmatpush1.msra.mxu0 0.0
      %656 = vmatprep.subr.mxu0 0.0
      %657 = vmatpush1.msra.mxu0 0.0
      %658 = vmatprep.subr.mxu0 0.0
      %659 = vmatpush1.msra.mxu0 0.0
      %660 = vmatprep.subr.mxu0 0.0
      %661 = vmatpush1.msra.mxu0 0.0
      %662 = vmatprep.subr.mxu0 0.0
      %663 = vmatpush1.msra.mxu0 0.0
      %664 = vmatprep.subr.mxu0 0.0
      %665 = vmatpush1.msra.mxu0 0.0
      %666 = vmatprep.subr.mxu0 0.0
      %667 = vmatpush1.msra.mxu0 0.0
      %668 = vmatprep.subr.mxu0 0.0
      %669 = vmatpush1.msra.mxu0 0.0
      %670 = vmatprep.subr.mxu0 0.0
      %671 = vmatpush1.msra.mxu0 0.0
      %672 = vmatprep.subr.mxu0 0.0
      %673 = vmatpush1.msra.mxu0 0.0
      %674 = vmatprep.subr.mxu0 0.0
      %675 = vmatpush1.msra.mxu0 0.0
      %676 = vmatprep.subr.mxu0 0.0
      %677 = vmatpush1.msra.mxu0 0.0
      %678 = vmatprep.subr.mxu0 0.0
      %679 = vmatpush1.msra.mxu0 0.0
      %680 = vmatprep.subr.mxu0 0.0
      %681 = vmatpush1.msra.mxu0 0.0
      %682 = vmatprep.subr.mxu0 0.0
      %683 = vmatpush1.msra.mxu0 0.0
      %684 = vmatprep.subr.mxu0 0.0
      %685 = vmatpush1.msra.mxu0 0.0
      %686 = vmatprep.subr.mxu0 0.0
      %687 = vmatpush1.msra.mxu0 0.0
      %688 = vmatprep.subr.mxu0 0.0
      %689 = vmatpush1.msra.mxu0 0.0
      %690 = vmatprep.subr.mxu0 0.0
      %691 = vmatpush1.msra.mxu0 0.0
      %692 = vmatprep.mubr.f32.mxu0 0.0
      %693 = vmatmul.mubr.f32.gmra.mrb[0].mxu0 %v413
      %v694 = vpop.f32.mrb[0].mxu0
      %v695 = vadd.f32 0.0, %v694
      %v696 = vpop.f32.mrb[0].mxu0
      %v697 = vadd.f32 0.0, %v696
      %698 = vdwg.mxu0
      %v700 = vsel %vm411, %v381, 0
      %702 = vmatprep.subr.mxu0 %v374
      %703 = vmatpush1.msra.mxu0 %v373
      %704 = vmatprep.subr.mxu0 0.0
      %705 = vmatpush1.msra.mxu0 0.0
      %706 = vmatprep.subr.mxu0 0.0
      %707 = vmatpush1.msra.mxu0 0.0
      %708 = vmatprep.subr.mxu0 0.0
      %709 = vmatpush1.msra.mxu0 0.0
      %710 = vmatprep.subr.mxu0 0.0
      %711 = vmatpush1.msra.mxu0 0.0
      %712 = vmatprep.subr.mxu0 0.0
      %713 = vmatpush1.msra.mxu0 0.0
      %714 = vmatprep.subr.mxu0 0.0
      %715 = vmatpush1.msra.mxu0 0.0
      %716 = vmatprep.subr.mxu0 0.0
      %717 = vmatpush1.msra.mxu0 0.0
      %718 = vmatprep.subr.mxu0 0.0
      %719 = vmatpush1.msra.mxu0 0.0
      %720 = vmatprep.subr.mxu0 0.0
      %721 = vmatpush1.msra.mxu0 0.0
      %722 = vmatprep.subr.mxu0 0.0
      %723 = vmatpush1.msra.mxu0 0.0
      %724 = vmatprep.subr.mxu0 0.0
      %725 = vmatpush1.msra.mxu0 0.0
      %726 = vmatprep.subr.mxu0 0.0
      %727 = vmatpush1.msra.mxu0 0.0
      %728 = vmatprep.subr.mxu0 0.0
      %729 = vmatpush1.msra.mxu0 0.0
      %730 = vmatprep.subr.mxu0 0.0
      %731 = vmatpush1.msra.mxu0 0.0
      %732 = vmatprep.subr.mxu0 0.0
      %733 = vmatpush1.msra.mxu0 0.0
      %734 = vmatprep.subr.mxu0 0.0
      %735 = vmatpush1.msra.mxu0 0.0
      %736 = vmatprep.subr.mxu0 0.0
      %737 = vmatpush1.msra.mxu0 0.0
      %738 = vmatprep.subr.mxu0 0.0
      %739 = vmatpush1.msra.mxu0 0.0
      %740 = vmatprep.subr.mxu0 0.0
      %741 = vmatpush1.msra.mxu0 0.0
      %742 = vmatprep.subr.mxu0 0.0
      %743 = vmatpush1.msra.mxu0 0.0
      %744 = vmatprep.subr.mxu0 0.0
      %745 = vmatpush1.msra.mxu0 0.0
      %746 = vmatprep.subr.mxu0 0.0
      %747 = vmatpush1.msra.mxu0 0.0
      %748 = vmatprep.subr.mxu0 0.0
      %749 = vmatpush1.msra.mxu0 0.0
      %750 = vmatprep.subr.mxu0 0.0
      %751 = vmatpush1.msra.mxu0 0.0
      %752 = vmatprep.subr.mxu0 0.0
      %753 = vmatpush1.msra.mxu0 0.0
      %754 = vmatprep.subr.mxu0 0.0
      %755 = vmatpush1.msra.mxu0 0.0
      %756 = vmatprep.subr.mxu0 0.0
      %757 = vmatpush1.msra.mxu0 0.0
      %758 = vmatprep.subr.mxu0 0.0
      %759 = vmatpush1.msra.mxu0 0.0
      %760 = vmatprep.subr.mxu0 0.0
      %761 = vmatpush1.msra.mxu0 0.0
      %762 = vmatprep.subr.mxu0 0.0
      %763 = vmatpush1.msra.mxu0 0.0
      %764 = vmatprep.subr.mxu0 0.0
      %765 = vmatpush1.msra.mxu0 0.0
      %766 = vmatprep.mubr.f32.mxu0 0.0
      %767 = vmatmul.mubr.f32.gmra.mrb[0].mxu0 %v700
      %v768 = vpop.f32.mrb[0].mxu0
      %v769 = vadd.f32 %v482, %v768
      %v770 = vpop.f32.mrb[0].mxu0
      %v771 = vadd.f32 %v484, %v770
      %772 = vdwg.mxu0
      %773 = vmatprep.subr.mxu0 %v376
      %774 = vmatpush1.msra.mxu0 %v375
      %775 = vmatprep.subr.mxu0 0.0
      %776 = vmatpush1.msra.mxu0 0.0
      %777 = vmatprep.subr.mxu0 0.0
      %778 = vmatpush1.msra.mxu0 0.0
      %779 = vmatprep.subr.mxu0 0.0
      %780 = vmatpush1.msra.mxu0 0.0
      %781 = vmatprep.subr.mxu0 0.0
      %782 = vmatpush1.msra.mxu0 0.0
      %783 = vmatprep.subr.mxu0 0.0
      %784 = vmatpush1.msra.mxu0 0.0
      %785 = vmatprep.subr.mxu0 0.0
      %786 = vmatpush1.msra.mxu0 0.0
      %787 = vmatprep.subr.mxu0 0.0
      %788 = vmatpush1.msra.mxu0 0.0
      %789 = vmatprep.subr.mxu0 0.0
      %790 = vmatpush1.msra.mxu0 0.0
      %791 = vmatprep.subr.mxu0 0.0
      %792 = vmatpush1.msra.mxu0 0.0
      %793 = vmatprep.subr.mxu0 0.0
      %794 = vmatpush1.msra.mxu0 0.0
      %795 = vmatprep.subr.mxu0 0.0
      %796 = vmatpush1.msra.mxu0 0.0
      %797 = vmatprep.subr.mxu0 0.0
      %798 = vmatpush1.msra.mxu0 0.0
      %799 = vmatprep.subr.mxu0 0.0
      %800 = vmatpush1.msra.mxu0 0.0
      %801 = vmatprep.subr.mxu0 0.0
      %802 = vmatpush1.msra.mxu0 0.0
      %803 = vmatprep.subr.mxu0 0.0
      %804 = vmatpush1.msra.mxu0 0.0
      %805 = vmatprep.subr.mxu0 0.0
      %806 = vmatpush1.msra.mxu0 0.0
      %807 = vmatprep.subr.mxu0 0.0
      %808 = vmatpush1.msra.mxu0 0.0
      %809 = vmatprep.subr.mxu0 0.0
      %810 = vmatpush1.msra.mxu0 0.0
      %811 = vmatprep.subr.mxu0 0.0
      %812 = vmatpush1.msra.mxu0 0.0
      %813 = vmatprep.subr.mxu0 0.0
      %814 = vmatpush1.msra.mxu0 0.0
      %815 = vmatprep.subr.mxu0 0.0
      %816 = vmatpush1.msra.mxu0 0.0
      %817 = vmatprep.subr.mxu0 0.0
      %818 = vmatpush1.msra.mxu0 0.0
      %819 = vmatprep.subr.mxu0 0.0
      %820 = vmatpush1.msra.mxu0 0.0
      %821 = vmatprep.subr.mxu0 0.0
      %822 = vmatpush1.msra.mxu0 0.0
      %823 = vmatprep.subr.mxu0 0.0
      %824 = vmatpush1.msra.mxu0 0.0
      %825 = vmatprep.subr.mxu0 0.0
      %826 = vmatpush1.msra.mxu0 0.0
      %827 = vmatprep.subr.mxu0 0.0
      %828 = vmatpush1.msra.mxu0 0.0
      %829 = vmatprep.subr.mxu0 0.0
      %830 = vmatpush1.msra.mxu0 0.0
      %831 = vmatprep.subr.mxu0 0.0
      %832 = vmatpush1.msra.mxu0 0.0
      %833 = vmatprep.subr.mxu0 0.0
      %834 = vmatpush1.msra.mxu0 0.0
      %835 = vmatprep.subr.mxu0 0.0
      %836 = vmatpush1.msra.mxu0 0.0
      %837 = vmatprep.mubr.f32.mxu0 0.0
      %838 = vmatmul.mubr.f32.gmra.mrb[0].mxu0 %v700
      %v839 = vpop.f32.mrb[0].mxu0
      %v840 = vadd.f32 %v553, %v839
      %v841 = vpop.f32.mrb[0].mxu0
      %v842 = vadd.f32 %v555, %v841
      %843 = vdwg.mxu0
      %844 = vmatprep.subr.mxu0 %v378
      %845 = vmatpush1.msra.mxu0 %v377
      %846 = vmatprep.subr.mxu0 0.0
      %847 = vmatpush1.msra.mxu0 0.0
      %848 = vmatprep.subr.mxu0 0.0
      %849 = vmatpush1.msra.mxu0 0.0
      %850 = vmatprep.subr.mxu0 0.0
      %851 = vmatpush1.msra.mxu0 0.0
      %852 = vmatprep.subr.mxu0 0.0
      %853 = vmatpush1.msra.mxu0 0.0
      %854 = vmatprep.subr.mxu0 0.0
      %855 = vmatpush1.msra.mxu0 0.0
      %856 = vmatprep.subr.mxu0 0.0
      %857 = vmatpush1.msra.mxu0 0.0
      %858 = vmatprep.subr.mxu0 0.0
      %859 = vmatpush1.msra.mxu0 0.0
      %860 = vmatprep.subr.mxu0 0.0
      %861 = vmatpush1.msra.mxu0 0.0
      %862 = vmatprep.subr.mxu0 0.0
      %863 = vmatpush1.msra.mxu0 0.0
      %864 = vmatprep.subr.mxu0 0.0
      %865 = vmatpush1.msra.mxu0 0.0
      %866 = vmatprep.subr.mxu0 0.0
      %867 = vmatpush1.msra.mxu0 0.0
      %868 = vmatprep.subr.mxu0 0.0
      %869 = vmatpush1.msra.mxu0 0.0
      %870 = vmatprep.subr.mxu0 0.0
      %871 = vmatpush1.msra.mxu0 0.0
      %872 = vmatprep.subr.mxu0 0.0
      %873 = vmatpush1.msra.mxu0 0.0
      %874 = vmatprep.subr.mxu0 0.0
      %875 = vmatpush1.msra.mxu0 0.0
      %876 = vmatprep.subr.mxu0 0.0
      %877 = vmatpush1.msra.mxu0 0.0
      %878 = vmatprep.subr.mxu0 0.0
      %879 = vmatpush1.msra.mxu0 0.0
      %880 = vmatprep.subr.mxu0 0.0
      %881 = vmatpush1.msra.mxu0 0.0
      %882 = vmatprep.subr.mxu0 0.0
      %883 = vmatpush1.msra.mxu0 0.0
      %884 = vmatprep.subr.mxu0 0.0
      %885 = vmatpush1.msra.mxu0 0.0
      %886 = vmatprep.subr.mxu0 0.0
      %887 = vmatpush1.msra.mxu0 0.0
      %888 = vmatprep.subr.mxu0 0.0
      %889 = vmatpush1.msra.mxu0 0.0
      %890 = vmatprep.subr.mxu0 0.0
      %891 = vmatpush1.msra.mxu0 0.0
      %892 = vmatprep.subr.mxu0 0.0
      %893 = vmatpush1.msra.mxu0 0.0
      %894 = vmatprep.subr.mxu0 0.0
      %895 = vmatpush1.msra.mxu0 0.0
      %896 = vmatprep.subr.mxu0 0.0
      %897 = vmatpush1.msra.mxu0 0.0
      %898 = vmatprep.subr.mxu0 0.0
      %899 = vmatpush1.msra.mxu0 0.0
      %900 = vmatprep.subr.mxu0 0.0
      %901 = vmatpush1.msra.mxu0 0.0
      %902 = vmatprep.subr.mxu0 0.0
      %903 = vmatpush1.msra.mxu0 0.0
      %904 = vmatprep.subr.mxu0 0.0
      %905 = vmatpush1.msra.mxu0 0.0
      %906 = vmatprep.subr.mxu0 0.0
      %907 = vmatpush1.msra.mxu0 0.0
      %908 = vmatprep.mubr.f32.mxu0 0.0
      %909 = vmatmul.mubr.f32.gmra.mrb[0].mxu0 %v700
      %v910 = vpop.f32.mrb[0].mxu0
      %v911 = vadd.f32 %v624, %v910
      %v912 = vpop.f32.mrb[0].mxu0
      %v913 = vadd.f32 %v626, %v912
      %914 = vdwg.mxu0
      %915 = vmatprep.subr.mxu0 %v380
      %916 = vmatpush1.msra.mxu0 %v379
      %917 = vmatprep.subr.mxu0 0.0
      %918 = vmatpush1.msra.mxu0 0.0
      %919 = vmatprep.subr.mxu0 0.0
      %920 = vmatpush1.msra.mxu0 0.0
      %921 = vmatprep.subr.mxu0 0.0
      %922 = vmatpush1.msra.mxu0 0.0
      %923 = vmatprep.subr.mxu0 0.0
      %924 = vmatpush1.msra.mxu0 0.0
      %925 = vmatprep.subr.mxu0 0.0
      %926 = vmatpush1.msra.mxu0 0.0
      %927 = vmatprep.subr.mxu0 0.0
      %928 = vmatpush1.msra.mxu0 0.0
      %929 = vmatprep.subr.mxu0 0.0
      %930 = vmatpush1.msra.mxu0 0.0
      %931 = vmatprep.subr.mxu0 0.0
      %932 = vmatpush1.msra.mxu0 0.0
      %933 = vmatprep.subr.mxu0 0.0
      %934 = vmatpush1.msra.mxu0 0.0
      %935 = vmatprep.subr.mxu0 0.0
      %936 = vmatpush1.msra.mxu0 0.0
      %937 = vmatprep.subr.mxu0 0.0
      %938 = vmatpush1.msra.mxu0 0.0
      %939 = vmatprep.subr.mxu0 0.0
      %940 = vmatpush1.msra.mxu0 0.0
      %941 = vmatprep.subr.mxu0 0.0
      %942 = vmatpush1.msra.mxu0 0.0
      %943 = vmatprep.subr.mxu0 0.0
      %944 = vmatpush1.msra.mxu0 0.0
      %945 = vmatprep.subr.mxu0 0.0
      %946 = vmatpush1.msra.mxu0 0.0
      %947 = vmatprep.subr.mxu0 0.0
      %948 = vmatpush1.msra.mxu0 0.0
      %949 = vmatprep.subr.mxu0 0.0
      %950 = vmatpush1.msra.mxu0 0.0
      %951 = vmatprep.subr.mxu0 0.0
      %952 = vmatpush1.msra.mxu0 0.0
      %953 = vmatprep.subr.mxu0 0.0
      %954 = vmatpush1.msra.mxu0 0.0
      %955 = vmatprep.subr.mxu0 0.0
      %956 = vmatpush1.msra.mxu0 0.0
      %957 = vmatprep.subr.mxu0 0.0
      %958 = vmatpush1.msra.mxu0 0.0
      %959 = vmatprep.subr.mxu0 0.0
      %960 = vmatpush1.msra.mxu0 0.0
      %961 = vmatprep.subr.mxu0 0.0
      %962 = vmatpush1.msra.mxu0 0.0
      %963 = vmatprep.subr.mxu0 0.0
      %964 = vmatpush1.msra.mxu0 0.0
      %965 = vmatprep.subr.mxu0 0.0
      %966 = vmatpush1.msra.mxu0 0.0
      %967 = vmatprep.subr.mxu0 0.0
      %968 = vmatpush1.msra.mxu0 0.0
      %969 = vmatprep.subr.mxu0 0.0
      %970 = vmatpush1.msra.mxu0 0.0
      %971 = vmatprep.subr.mxu0 0.0
      %972 = vmatpush1.msra.mxu0 0.0
      %973 = vmatprep.subr.mxu0 0.0
      %974 = vmatpush1.msra.mxu0 0.0
      %975 = vmatprep.subr.mxu0 0.0
      %976 = vmatpush1.msra.mxu0 0.0
      %977 = vmatprep.subr.mxu0 0.0
      %978 = vmatpush1.msra.mxu0 0.0
      %979 = vmatprep.mubr.f32.mxu0 0.0
      %980 = vmatmul.mubr.f32.gmra.mrb[0].mxu0 %v700
      %v981 = vpop.f32.mrb[0].mxu0
      %v982 = vadd.f32 %v695, %v981
      %v983 = vpop.f32.mrb[0].mxu0
      %v984 = vadd.f32 %v697, %v983
      %985 = vdwg.mxu0
      %986 = vrot.lane.b32.xlu0 %v373, 96
      %v987 = vpop.permute.xlu0 %986
      %988 = vrot.lane.b32.xlu0 %v374, 96
      %v989 = vpop.permute.xlu0 %988
      %990 = vrot.lane.b32.xlu0 %v375, 96
      %v991 = vpop.permute.xlu0 %990
      %992 = vrot.lane.b32.xlu0 %v376, 96
      %v993 = vpop.permute.xlu0 %992
      %994 = vrot.lane.b32.xlu0 %v377, 96
      %v995 = vpop.permute.xlu0 %994
      %996 = vrot.lane.b32.xlu0 %v378, 96
      %v997 = vpop.permute.xlu0 %996
      %998 = vrot.lane.b32.xlu0 %v379, 96
      %v999 = vpop.permute.xlu0 %998
      %1000 = vrot.lane.b32.xlu0 %v380, 96
      %v1001 = vpop.permute.xlu0 %1000
      %vm1002 = vcmp.lt.s32.totalorder %v399, 96
      %v1003 = vsel %vm1002, %v999, %v1001
      %v1004 = vsel %vm1002, %v997, %v999
      %v1005 = vsel %vm1002, %v995, %v997
      %v1006 = vsel %vm1002, %v993, %v995
      %v1007 = vsel %vm1002, %v991, %v993
      %v1008 = vsel %vm1002, %v989, %v991
      %v1009 = vsel %vm1002, %v987, %v989
      %v1010 = vsel %vm1002, %v1001, %v987
      %s1011 = scalar_lea.vmem %s1, 16
      %v1012 = vld [vmem:[%s1011] sm:$0xff]
      %v1014 = vsel %vm411, %v1012, 0
      %1016 = vmatprep.subr.mxu0 %v1008
      %1017 = vmatpush1.msra.mxu0 %v1009
      %1018 = vmatprep.subr.mxu0 0.0
      %1019 = vmatpush1.msra.mxu0 0.0
      %1020 = vmatprep.subr.mxu0 0.0
      %1021 = vmatpush1.msra.mxu0 0.0
      %1022 = vmatprep.subr.mxu0 0.0
      %1023 = vmatpush1.msra.mxu0 0.0
      %1024 = vmatprep.subr.mxu0 0.0
      %1025 = vmatpush1.msra.mxu0 0.0
      %1026 = vmatprep.subr.mxu0 0.0
      %1027 = vmatpush1.msra.mxu0 0.0
      %1028 = vmatprep.subr.mxu0 0.0
      %1029 = vmatpush1.msra.mxu0 0.0
      %1030 = vmatprep.subr.mxu0 0.0
      %1031 = vmatpush1.msra.mxu0 0.0
      %1032 = vmatprep.subr.mxu0 0.0
      %1033 = vmatpush1.msra.mxu0 0.0
      %1034 = vmatprep.subr.mxu0 0.0
      %1035 = vmatpush1.msra.mxu0 0.0
      %1036 = vmatprep.subr.mxu0 0.0
      %1037 = vmatpush1.msra.mxu0 0.0
      %1038 = vmatprep.subr.mxu0 0.0
      %1039 = vmatpush1.msra.mxu0 0.0
      %1040 = vmatprep.subr.mxu0 0.0
      %1041 = vmatpush1.msra.mxu0 0.0
      %1042 = vmatprep.subr.mxu0 0.0
      %1043 = vmatpush1.msra.mxu0 0.0
      %1044 = vmatprep.subr.mxu0 0.0
      %1045 = vmatpush1.msra.mxu0 0.0
      %1046 = vmatprep.subr.mxu0 0.0
      %1047 = vmatpush1.msra.mxu0 0.0
      %1048 = vmatprep.subr.mxu0 0.0
      %1049 = vmatpush1.msra.mxu0 0.0
      %1050 = vmatprep.subr.mxu0 0.0
      %1051 = vmatpush1.msra.mxu0 0.0
      %1052 = vmatprep.subr.mxu0 0.0
      %1053 = vmatpush1.msra.mxu0 0.0
      %1054 = vmatprep.subr.mxu0 0.0
      %1055 = vmatpush1.msra.mxu0 0.0
      %1056 = vmatprep.subr.mxu0 0.0
      %1057 = vmatpush1.msra.mxu0 0.0
      %1058 = vmatprep.subr.mxu0 0.0
      %1059 = vmatpush1.msra.mxu0 0.0
      %1060 = vmatprep.subr.mxu0 0.0
      %1061 = vmatpush1.msra.mxu0 0.0
      %1062 = vmatprep.subr.mxu0 0.0
      %1063 = vmatpush1.msra.mxu0 0.0
      %1064 = vmatprep.subr.mxu0 0.0
      %1065 = vmatpush1.msra.mxu0 0.0
      %1066 = vmatprep.subr.mxu0 0.0
      %1067 = vmatpush1.msra.mxu0 0.0
      %1068 = vmatprep.subr.mxu0 0.0
      %1069 = vmatpush1.msra.mxu0 0.0
      %1070 = vmatprep.subr.mxu0 0.0
      %1071 = vmatpush1.msra.mxu0 0.0
      %1072 = vmatprep.subr.mxu0 0.0
      %1073 = vmatpush1.msra.mxu0 0.0
      %1074 = vmatprep.subr.mxu0 0.0
      %1075 = vmatpush1.msra.mxu0 0.0
      %1076 = vmatprep.subr.mxu0 0.0
      %1077 = vmatpush1.msra.mxu0 0.0
      %1078 = vmatprep.subr.mxu0 0.0
      %1079 = vmatpush1.msra.mxu0 0.0
      %1080 = vmatprep.mubr.f32.mxu0 0.0
      %1081 = vmatmul.mubr.f32.gmra.mrb[0].mxu0 %v1014
      %v1082 = vpop.f32.mrb[0].mxu0
      %v1083 = vadd.f32 0.0, %v1082
      %v1084 = vpop.f32.mrb[0].mxu0
      %v1085 = vadd.f32 0.0, %v1084
      %1086 = vdwg.mxu0
      %1087 = vmatprep.subr.mxu0 %v1006
      %1088 = vmatpush1.msra.mxu0 %v1007
      %1089 = vmatprep.subr.mxu0 0.0
      %1090 = vmatpush1.msra.mxu0 0.0
      %1091 = vmatprep.subr.mxu0 0.0
      %1092 = vmatpush1.msra.mxu0 0.0
      %1093 = vmatprep.subr.mxu0 0.0
      %1094 = vmatpush1.msra.mxu0 0.0
      %1095 = vmatprep.subr.mxu0 0.0
      %1096 = vmatpush1.msra.mxu0 0.0
      %1097 = vmatprep.subr.mxu0 0.0
      %1098 = vmatpush1.msra.mxu0 0.0
      %1099 = vmatprep.subr.mxu0 0.0
      %1100 = vmatpush1.msra.mxu0 0.0
      %1101 = vmatprep.subr.mxu0 0.0
      %1102 = vmatpush1.msra.mxu0 0.0
      %1103 = vmatprep.subr.mxu0 0.0
      %1104 = vmatpush1.msra.mxu0 0.0
      %1105 = vmatprep.subr.mxu0 0.0
      %1106 = vmatpush1.msra.mxu0 0.0
      %1107 = vmatprep.subr.mxu0 0.0
      %1108 = vmatpush1.msra.mxu0 0.0
      %1109 = vmatprep.subr.mxu0 0.0
      %1110 = vmatpush1.msra.mxu0 0.0
      %1111 = vmatprep.subr.mxu0 0.0
      %1112 = vmatpush1.msra.mxu0 0.0
      %1113 = vmatprep.subr.mxu0 0.0
      %1114 = vmatpush1.msra.mxu0 0.0
      %1115 = vmatprep.subr.mxu0 0.0
      %1116 = vmatpush1.msra.mxu0 0.0
      %1117 = vmatprep.subr.mxu0 0.0
      %1118 = vmatpush1.msra.mxu0 0.0
      %1119 = vmatprep.subr.mxu0 0.0
      %1120 = vmatpush1.msra.mxu0 0.0
      %1121 = vmatprep.subr.mxu0 0.0
      %1122 = vmatpush1.msra.mxu0 0.0
      %1123 = vmatprep.subr.mxu0 0.0
      %1124 = vmatpush1.msra.mxu0 0.0
      %1125 = vmatprep.subr.mxu0 0.0
      %1126 = vmatpush1.msra.mxu0 0.0
      %1127 = vmatprep.subr.mxu0 0.0
      %1128 = vmatpush1.msra.mxu0 0.0
      %1129 = vmatprep.subr.mxu0 0.0
      %1130 = vmatpush1.msra.mxu0 0.0
      %1131 = vmatprep.subr.mxu0 0.0
      %1132 = vmatpush1.msra.mxu0 0.0
      %1133 = vmatprep.subr.mxu0 0.0
      %1134 = vmatpush1.msra.mxu0 0.0
      %1135 = vmatprep.subr.mxu0 0.0
      %1136 = vmatpush1.msra.mxu0 0.0
      %1137 = vmatprep.subr.mxu0 0.0
      %1138 = vmatpush1.msra.mxu0 0.0
      %1139 = vmatprep.subr.mxu0 0.0
      %1140 = vmatpush1.msra.mxu0 0.0
      %1141 = vmatprep.subr.mxu0 0.0
      %1142 = vmatpush1.msra.mxu0 0.0
      %1143 = vmatprep.subr.mxu0 0.0
      %1144 = vmatpush1.msra.mxu0 0.0
      %1145 = vmatprep.subr.mxu0 0.0
      %1146 = vmatpush1.msra.mxu0 0.0
      %1147 = vmatprep.subr.mxu0 0.0
      %1148 = vmatpush1.msra.mxu0 0.0
      %1149 = vmatprep.subr.mxu0 0.0
      %1150 = vmatpush1.msra.mxu0 0.0
      %1151 = vmatprep.mubr.f32.mxu0 0.0
      %1152 = vmatmul.mubr.f32.gmra.mrb[0].mxu0 %v1014
      %v1153 = vpop.f32.mrb[0].mxu0
      %v1154 = vadd.f32 0.0, %v1153
      %v1155 = vpop.f32.mrb[0].mxu0
      %v1156 = vadd.f32 0.0, %v1155
      %1157 = vdwg.mxu0
      %1158 = vmatprep.subr.mxu0 %v1004
      %1159 = vmatpush1.msra.mxu0 %v1005
      %1160 = vmatprep.subr.mxu0 0.0
      %1161 = vmatpush1.msra.mxu0 0.0
      %1162 = vmatprep.subr.mxu0 0.0
      %1163 = vmatpush1.msra.mxu0 0.0
      %1164 = vmatprep.subr.mxu0 0.0
      %1165 = vmatpush1.msra.mxu0 0.0
      %1166 = vmatprep.subr.mxu0 0.0
      %1167 = vmatpush1.msra.mxu0 0.0
      %1168 = vmatprep.subr.mxu0 0.0
      %1169 = vmatpush1.msra.mxu0 0.0
      %1170 = vmatprep.subr.mxu0 0.0
      %1171 = vmatpush1.msra.mxu0 0.0
      %1172 = vmatprep.subr.mxu0 0.0
      %1173 = vmatpush1.msra.mxu0 0.0
      %1174 = vmatprep.subr.mxu0 0.0
      %1175 = vmatpush1.msra.mxu0 0.0
      %1176 = vmatprep.subr.mxu0 0.0
      %1177 = vmatpush1.msra.mxu0 0.0
      %1178 = vmatprep.subr.mxu0 0.0
      %1179 = vmatpush1.msra.mxu0 0.0
      %1180 = vmatprep.subr.mxu0 0.0
      %1181 = vmatpush1.msra.mxu0 0.0
      %1182 = vmatprep.subr.mxu0 0.0
      %1183 = vmatpush1.msra.mxu0 0.0
      %1184 = vmatprep.subr.mxu0 0.0
      %1185 = vmatpush1.msra.mxu0 0.0
      %1186 = vmatprep.subr.mxu0 0.0
      %1187 = vmatpush1.msra.mxu0 0.0
      %1188 = vmatprep.subr.mxu0 0.0
      %1189 = vmatpush1.msra.mxu0 0.0
      %1190 = vmatprep.subr.mxu0 0.0
      %1191 = vmatpush1.msra.mxu0 0.0
      %1192 = vmatprep.subr.mxu0 0.0
      %1193 = vmatpush1.msra.mxu0 0.0
      %1194 = vmatprep.subr.mxu0 0.0
      %1195 = vmatpush1.msra.mxu0 0.0
      %1196 = vmatprep.subr.mxu0 0.0
      %1197 = vmatpush1.msra.mxu0 0.0
      %1198 = vmatprep.subr.mxu0 0.0
      %1199 = vmatpush1.msra.mxu0 0.0
      %1200 = vmatprep.subr.mxu0 0.0
      %1201 = vmatpush1.msra.mxu0 0.0
      %1202 = vmatprep.subr.mxu0 0.0
      %1203 = vmatpush1.msra.mxu0 0.0
      %1204 = vmatprep.subr.mxu0 0.0
      %1205 = vmatpush1.msra.mxu0 0.0
      %1206 = vmatprep.subr.mxu0 0.0
      %1207 = vmatpush1.msra.mxu0 0.0
      %1208 = vmatprep.subr.mxu0 0.0
      %1209 = vmatpush1.msra.mxu0 0.0
      %1210 = vmatprep.subr.mxu0 0.0
      %1211 = vmatpush1.msra.mxu0 0.0
      %1212 = vmatprep.subr.mxu0 0.0
      %1213 = vmatpush1.msra.mxu0 0.0
      %1214 = vmatprep.subr.mxu0 0.0
      %1215 = vmatpush1.msra.mxu0 0.0
      %1216 = vmatprep.subr.mxu0 0.0
      %1217 = vmatpush1.msra.mxu0 0.0
      %1218 = vmatprep.subr.mxu0 0.0
      %1219 = vmatpush1.msra.mxu0 0.0
      %1220 = vmatprep.subr.mxu0 0.0
      %1221 = vmatpush1.msra.mxu0 0.0
      %1222 = vmatprep.mubr.f32.mxu0 0.0
      %1223 = vmatmul.mubr.f32.gmra.mrb[0].mxu0 %v1014
      %v1224 = vpop.f32.mrb[0].mxu0
      %v1225 = vadd.f32 0.0, %v1224
      %v1226 = vpop.f32.mrb[0].mxu0
      %v1227 = vadd.f32 0.0, %v1226
      %1228 = vdwg.mxu0
      %1229 = vmatprep.subr.mxu0 %v1010
      %1230 = vmatpush1.msra.mxu0 %v1003
      %1231 = vmatprep.subr.mxu0 0.0
      %1232 = vmatpush1.msra.mxu0 0.0
      %1233 = vmatprep.subr.mxu0 0.0
      %1234 = vmatpush1.msra.mxu0 0.0
      %1235 = vmatprep.subr.mxu0 0.0
      %1236 = vmatpush1.msra.mxu0 0.0
      %1237 = vmatprep.subr.mxu0 0.0
      %1238 = vmatpush1.msra.mxu0 0.0
      %1239 = vmatprep.subr.mxu0 0.0
      %1240 = vmatpush1.msra.mxu0 0.0
      %1241 = vmatprep.subr.mxu0 0.0
      %1242 = vmatpush1.msra.mxu0 0.0
      %1243 = vmatprep.subr.mxu0 0.0
      %1244 = vmatpush1.msra.mxu0 0.0
      %1245 = vmatprep.subr.mxu0 0.0
      %1246 = vmatpush1.msra.mxu0 0.0
      %1247 = vmatprep.subr.mxu0 0.0
      %1248 = vmatpush1.msra.mxu0 0.0
      %1249 = vmatprep.subr.mxu0 0.0
      %1250 = vmatpush1.msra.mxu0 0.0
      %1251 = vmatprep.subr.mxu0 0.0
      %1252 = vmatpush1.msra.mxu0 0.0
      %1253 = vmatprep.subr.mxu0 0.0
      %1254 = vmatpush1.msra.mxu0 0.0
      %1255 = vmatprep.subr.mxu0 0.0
      %1256 = vmatpush1.msra.mxu0 0.0
      %1257 = vmatprep.subr.mxu0 0.0
      %1258 = vmatpush1.msra.mxu0 0.0
      %1259 = vmatprep.subr.mxu0 0.0
      %1260 = vmatpush1.msra.mxu0 0.0
      %1261 = vmatprep.subr.mxu0 0.0
      %1262 = vmatpush1.msra.mxu0 0.0
      %1263 = vmatprep.subr.mxu0 0.0
      %1264 = vmatpush1.msra.mxu0 0.0
      %1265 = vmatprep.subr.mxu0 0.0
      %1266 = vmatpush1.msra.mxu0 0.0
      %1267 = vmatprep.subr.mxu0 0.0
      %1268 = vmatpush1.msra.mxu0 0.0
      %1269 = vmatprep.subr.mxu0 0.0
      %1270 = vmatpush1.msra.mxu0 0.0
      %1271 = vmatprep.subr.mxu0 0.0
      %1272 = vmatpush1.msra.mxu0 0.0
      %1273 = vmatprep.subr.mxu0 0.0
      %1274 = vmatpush1.msra.mxu0 0.0
      %1275 = vmatprep.subr.mxu0 0.0
      %1276 = vmatpush1.msra.mxu0 0.0
      %1277 = vmatprep.subr.mxu0 0.0
      %1278 = vmatpush1.msra.mxu0 0.0
      %1279 = vmatprep.subr.mxu0 0.0
      %1280 = vmatpush1.msra.mxu0 0.0
      %1281 = vmatprep.subr.mxu0 0.0
      %1282 = vmatpush1.msra.mxu0 0.0
      %1283 = vmatprep.subr.mxu0 0.0
      %1284 = vmatpush1.msra.mxu0 0.0
      %1285 = vmatprep.subr.mxu0 0.0
      %1286 = vmatpush1.msra.mxu0 0.0
      %1287 = vmatprep.subr.mxu0 0.0
      %1288 = vmatpush1.msra.mxu0 0.0
      %1289 = vmatprep.subr.mxu0 0.0
      %1290 = vmatpush1.msra.mxu0 0.0
      %1291 = vmatprep.subr.mxu0 0.0
      %1292 = vmatpush1.msra.mxu0 0.0
      %1293 = vmatprep.mubr.f32.mxu0 0.0
      %1294 = vmatmul.mubr.f32.gmra.mrb[0].mxu0 %v1014
      %v1295 = vpop.f32.mrb[0].mxu0
      %v1296 = vadd.f32 0.0, %v1295
      %v1297 = vpop.f32.mrb[0].mxu0
      %v1298 = vadd.f32 0.0, %v1297
      %1299 = vdwg.mxu0
      %v1300 = vadd.f32 %v769, %v1083
      %v1301 = vadd.f32 %v771, %v1085
      %v1302 = vadd.f32 %v840, %v1154
      %v1303 = vadd.f32 %v842, %v1156
      %v1304 = vadd.f32 %v911, %v1225
      %v1305 = vadd.f32 %v913, %v1227
      %v1306 = vadd.f32 %v982, %v1296
      %v1307 = vadd.f32 %v984, %v1298
      %1308 = vrot.lane.b32.xlu0 %v373, 95
      %v1309 = vpop.permute.xlu0 %1308
      %1310 = vrot.lane.b32.xlu0 %v374, 95
      %v1311 = vpop.permute.xlu0 %1310
      %1312 = vrot.lane.b32.xlu0 %v375, 95
      %v1313 = vpop.permute.xlu0 %1312
      %1314 = vrot.lane.b32.xlu0 %v376, 95
      %v1315 = vpop.permute.xlu0 %1314
      %1316 = vrot.lane.b32.xlu0 %v377, 95
      %v1317 = vpop.permute.xlu0 %1316
      %1318 = vrot.lane.b32.xlu0 %v378, 95
      %v1319 = vpop.permute.xlu0 %1318
      %1320 = vrot.lane.b32.xlu0 %v379, 95
      %v1321 = vpop.permute.xlu0 %1320
      %1322 = vrot.lane.b32.xlu0 %v380, 95
      %v1323 = vpop.permute.xlu0 %1322
      %vm1324 = vcmp.lt.s32.totalorder %v399, 95
      %v1325 = vsel %vm1324, %v1321, %v1323
      %v1326 = vsel %vm1324, %v1319, %v1321
      %v1327 = vsel %vm1324, %v1317, %v1319
      %v1328 = vsel %vm1324, %v1315, %v1317
      %v1329 = vsel %vm1324, %v1313, %v1315
      %v1330 = vsel %vm1324, %v1311, %v1313
      %v1331 = vsel %vm1324, %v1309, %v1311
      %v1332 = vsel %vm1324, %v1323, %v1309
      %s1333 = scalar_lea.vmem %s1, 24
      %v1334 = vld [vmem:[%s1333] sm:$0xff]
      %v1336 = vsel %vm411, %v1334, 0
      %1338 = vmatprep.subr.mxu0 %v1330
      %1339 = vmatpush1.msra.mxu0 %v1331
      %1340 = vmatprep.subr.mxu0 0.0
      %1341 = vmatpush1.msra.mxu0 0.0
      %1342 = vmatprep.subr.mxu0 0.0
      %1343 = vmatpush1.msra.mxu0 0.0
      %1344 = vmatprep.subr.mxu0 0.0
      %1345 = vmatpush1.msra.mxu0 0.0
      %1346 = vmatprep.subr.mxu0 0.0
      %1347 = vmatpush1.msra.mxu0 0.0
      %1348 = vmatprep.subr.mxu0 0.0
      %1349 = vmatpush1.msra.mxu0 0.0
      %1350 = vmatprep.subr.mxu0 0.0
      %1351 = vmatpush1.msra.mxu0 0.0
      %1352 = vmatprep.subr.mxu0 0.0
      %1353 = vmatpush1.msra.mxu0 0.0
      %1354 = vmatprep.subr.mxu0 0.0
      %1355 = vmatpush1.msra.mxu0 0.0
      %1356 = vmatprep.subr.mxu0 0.0
      %1357 = vmatpush1.msra.mxu0 0.0
      %1358 = vmatprep.subr.mxu0 0.0
      %1359 = vmatpush1.msra.mxu0 0.0
      %1360 = vmatprep.subr.mxu0 0.0
      %1361 = vmatpush1.msra.mxu0 0.0
      %1362 = vmatprep.subr.mxu0 0.0
      %1363 = vmatpush1.msra.mxu0 0.0
      %1364 = vmatprep.subr.mxu0 0.0
      %1365 = vmatpush1.msra.mxu0 0.0
      %1366 = vmatprep.subr.mxu0 0.0
      %1367 = vmatpush1.msra.mxu0 0.0
      %1368 = vmatprep.subr.mxu0 0.0
      %1369 = vmatpush1.msra.mxu0 0.0
      %1370 = vmatprep.subr.mxu0 0.0
      %1371 = vmatpush1.msra.mxu0 0.0
      %1372 = vmatprep.subr.mxu0 0.0
      %1373 = vmatpush1.msra.mxu0 0.0
      %1374 = vmatprep.subr.mxu0 0.0
      %1375 = vmatpush1.msra.mxu0 0.0
      %1376 = vmatprep.subr.mxu0 0.0
      %1377 = vmatpush1.msra.mxu0 0.0
      %1378 = vmatprep.subr.mxu0 0.0
      %1379 = vmatpush1.msra.mxu0 0.0
      %1380 = vmatprep.subr.mxu0 0.0
      %1381 = vmatpush1.msra.mxu0 0.0
      %1382 = vmatprep.subr.mxu0 0.0
      %1383 = vmatpush1.msra.mxu0 0.0
      %1384 = vmatprep.subr.mxu0 0.0
      %1385 = vmatpush1.msra.mxu0 0.0
      %1386 = vmatprep.subr.mxu0 0.0
      %1387 = vmatpush1.msra.mxu0 0.0
      %1388 = vmatprep.subr.mxu0 0.0
      %1389 = vmatpush1.msra.mxu0 0.0
      %1390 = vmatprep.subr.mxu0 0.0
      %1391 = vmatpush1.msra.mxu0 0.0
      %1392 = vmatprep.subr.mxu0 0.0
      %1393 = vmatpush1.msra.mxu0 0.0
      %1394 = vmatprep.subr.mxu0 0.0
      %1395 = vmatpush1.msra.mxu0 0.0
      %1396 = vmatprep.subr.mxu0 0.0
      %1397 = vmatpush1.msra.mxu0 0.0
      %1398 = vmatprep.subr.mxu0 0.0
      %1399 = vmatpush1.msra.mxu0 0.0
      %1400 = vmatprep.subr.mxu0 0.0
      %1401 = vmatpush1.msra.mxu0 0.0
      %1402 = vmatprep.mubr.f32.mxu0 0.0
      %1403 = vmatmul.mubr.f32.gmra.mrb[0].mxu0 %v1336
      %v1404 = vpop.f32.mrb[0].mxu0
      %v1405 = vadd.f32 0.0, %v1404
      %v1406 = vpop.f32.mrb[0].mxu0
      %v1407 = vadd.f32 0.0, %v1406
      %1408 = vdwg.mxu0
      %1409 = vmatprep.subr.mxu0 %v1328
      %1410 = vmatpush1.msra.mxu0 %v1329
      %1411 = vmatprep.subr.mxu0 0.0
      %1412 = vmatpush1.msra.mxu0 0.0
      %1413 = vmatprep.subr.mxu0 0.0
      %1414 = vmatpush1.msra.mxu0 0.0
      %1415 = vmatprep.subr.mxu0 0.0
      %1416 = vmatpush1.msra.mxu0 0.0
      %1417 = vmatprep.subr.mxu0 0.0
      %1418 = vmatpush1.msra.mxu0 0.0
      %1419 = vmatprep.subr.mxu0 0.0
      %1420 = vmatpush1.msra.mxu0 0.0
      %1421 = vmatprep.subr.mxu0 0.0
      %1422 = vmatpush1.msra.mxu0 0.0
      %1423 = vmatprep.subr.mxu0 0.0
      %1424 = vmatpush1.msra.mxu0 0.0
      %1425 = vmatprep.subr.mxu0 0.0
      %1426 = vmatpush1.msra.mxu0 0.0
      %1427 = vmatprep.subr.mxu0 0.0
      %1428 = vmatpush1.msra.mxu0 0.0
      %1429 = vmatprep.subr.mxu0 0.0
      %1430 = vmatpush1.msra.mxu0 0.0
      %1431 = vmatprep.subr.mxu0 0.0
      %1432 = vmatpush1.msra.mxu0 0.0
      %1433 = vmatprep.subr.mxu0 0.0
      %1434 = vmatpush1.msra.mxu0 0.0
      %1435 = vmatprep.subr.mxu0 0.0
      %1436 = vmatpush1.msra.mxu0 0.0
      %1437 = vmatprep.subr.mxu0 0.0
      %1438 = vmatpush1.msra.mxu0 0.0
      %1439 = vmatprep.subr.mxu0 0.0
      %1440 = vmatpush1.msra.mxu0 0.0
      %1441 = vmatprep.subr.mxu0 0.0
      %1442 = vmatpush1.msra.mxu0 0.0
      %1443 = vmatprep.subr.mxu0 0.0
      %1444 = vmatpush1.msra.mxu0 0.0
      %1445 = vmatprep.subr.mxu0 0.0
      %1446 = vmatpush1.msra.mxu0 0.0
      %1447 = vmatprep.subr.mxu0 0.0
      %1448 = vmatpush1.msra.mxu0 0.0
      %1449 = vmatprep.subr.mxu0 0.0
      %1450 = vmatpush1.msra.mxu0 0.0
      %1451 = vmatprep.subr.mxu0 0.0
      %1452 = vmatpush1.msra.mxu0 0.0
      %1453 = vmatprep.subr.mxu0 0.0
      %1454 = vmatpush1.msra.mxu0 0.0
      %1455 = vmatprep.subr.mxu0 0.0
      %1456 = vmatpush1.msra.mxu0 0.0
      %1457 = vmatprep.subr.mxu0 0.0
      %1458 = vmatpush1.msra.mxu0 0.0
      %1459 = vmatprep.subr.mxu0 0.0
      %1460 = vmatpush1.msra.mxu0 0.0
      %1461 = vmatprep.subr.mxu0 0.0
      %1462 = vmatpush1.msra.mxu0 0.0
      %1463 = vmatprep.subr.mxu0 0.0
      %1464 = vmatpush1.msra.mxu0 0.0
      %1465 = vmatprep.subr.mxu0 0.0
      %1466 = vmatpush1.msra.mxu0 0.0
      %1467 = vmatprep.subr.mxu0 0.0
      %1468 = vmatpush1.msra.mxu0 0.0
      %1469 = vmatprep.subr.mxu0 0.0
      %1470 = vmatpush1.msra.mxu0 0.0
      %1471 = vmatprep.subr.mxu0 0.0
      %1472 = vmatpush1.msra.mxu0 0.0
      %1473 = vmatprep.mubr.f32.mxu0 0.0
      %1474 = vmatmul.mubr.f32.gmra.mrb[0].mxu0 %v1336
      %v1475 = vpop.f32.mrb[0].mxu0
      %v1476 = vadd.f32 0.0, %v1475
      %v1477 = vpop.f32.mrb[0].mxu0
      %v1478 = vadd.f32 0.0, %v1477
      %1479 = vdwg.mxu0
      %1480 = vmatprep.subr.mxu0 %v1326
      %1481 = vmatpush1.msra.mxu0 %v1327
      %1482 = vmatprep.subr.mxu0 0.0
      %1483 = vmatpush1.msra.mxu0 0.0
      %1484 = vmatprep.subr.mxu0 0.0
      %1485 = vmatpush1.msra.mxu0 0.0
      %1486 = vmatprep.subr.mxu0 0.0
      %1487 = vmatpush1.msra.mxu0 0.0
      %1488 = vmatprep.subr.mxu0 0.0
      %1489 = vmatpush1.msra.mxu0 0.0
      %1490 = vmatprep.subr.mxu0 0.0
      %1491 = vmatpush1.msra.mxu0 0.0
      %1492 = vmatprep.subr.mxu0 0.0
      %1493 = vmatpush1.msra.mxu0 0.0
      %1494 = vmatprep.subr.mxu0 0.0
      %1495 = vmatpush1.msra.mxu0 0.0
      %1496 = vmatprep.subr.mxu0 0.0
      %1497 = vmatpush1.msra.mxu0 0.0
      %1498 = vmatprep.subr.mxu0 0.0
      %1499 = vmatpush1.msra.mxu0 0.0
      %1500 = vmatprep.subr.mxu0 0.0
      %1501 = vmatpush1.msra.mxu0 0.0
      %1502 = vmatprep.subr.mxu0 0.0
      %1503 = vmatpush1.msra.mxu0 0.0
      %1504 = vmatprep.subr.mxu0 0.0
      %1505 = vmatpush1.msra.mxu0 0.0
      %1506 = vmatprep.subr.mxu0 0.0
      %1507 = vmatpush1.msra.mxu0 0.0
      %1508 = vmatprep.subr.mxu0 0.0
      %1509 = vmatpush1.msra.mxu0 0.0
      %1510 = vmatprep.subr.mxu0 0.0
      %1511 = vmatpush1.msra.mxu0 0.0
      %1512 = vmatprep.subr.mxu0 0.0
      %1513 = vmatpush1.msra.mxu0 0.0
      %1514 = vmatprep.subr.mxu0 0.0
      %1515 = vmatpush1.msra.mxu0 0.0
      %1516 = vmatprep.subr.mxu0 0.0
      %1517 = vmatpush1.msra.mxu0 0.0
      %1518 = vmatprep.subr.mxu0 0.0
      %1519 = vmatpush1.msra.mxu0 0.0
      %1520 = vmatprep.subr.mxu0 0.0
      %1521 = vmatpush1.msra.mxu0 0.0
      %1522 = vmatprep.subr.mxu0 0.0
      %1523 = vmatpush1.msra.mxu0 0.0
      %1524 = vmatprep.subr.mxu0 0.0
      %1525 = vmatpush1.msra.mxu0 0.0
      %1526 = vmatprep.subr.mxu0 0.0
      %1527 = vmatpush1.msra.mxu0 0.0
      %1528 = vmatprep.subr.mxu0 0.0
      %1529 = vmatpush1.msra.mxu0 0.0
      %1530 = vmatprep.subr.mxu0 0.0
      %1531 = vmatpush1.msra.mxu0 0.0
      %1532 = vmatprep.subr.mxu0 0.0
      %1533 = vmatpush1.msra.mxu0 0.0
      %1534 = vmatprep.subr.mxu0 0.0
      %1535 = vmatpush1.msra.mxu0 0.0
      %1536 = vmatprep.subr.mxu0 0.0
      %1537 = vmatpush1.msra.mxu0 0.0
      %1538 = vmatprep.subr.mxu0 0.0
      %1539 = vmatpush1.msra.mxu0 0.0
      %1540 = vmatprep.subr.mxu0 0.0
      %1541 = vmatpush1.msra.mxu0 0.0
      %1542 = vmatprep.subr.mxu0 0.0
      %1543 = vmatpush1.msra.mxu0 0.0
      %1544 = vmatprep.mubr.f32.mxu0 0.0
      %1545 = vmatmul.mubr.f32.gmra.mrb[0].mxu0 %v1336
      %v1546 = vpop.f32.mrb[0].mxu0
      %v1547 = vadd.f32 0.0, %v1546
      %v1548 = vpop.f32.mrb[0].mxu0
      %v1549 = vadd.f32 0.0, %v1548
      %1550 = vdwg.mxu0
      %1551 = vmatprep.subr.mxu0 %v1332
      %1552 = vmatpush1.msra.mxu0 %v1325
      %1553 = vmatprep.subr.mxu0 0.0
      %1554 = vmatpush1.msra.mxu0 0.0
      %1555 = vmatprep.subr.mxu0 0.0
      %1556 = vmatpush1.msra.mxu0 0.0
      %1557 = vmatprep.subr.mxu0 0.0
      %1558 = vmatpush1.msra.mxu0 0.0
      %1559 = vmatprep.subr.mxu0 0.0
      %1560 = vmatpush1.msra.mxu0 0.0
      %1561 = vmatprep.subr.mxu0 0.0
      %1562 = vmatpush1.msra.mxu0 0.0
      %1563 = vmatprep.subr.mxu0 0.0
      %1564 = vmatpush1.msra.mxu0 0.0
      %1565 = vmatprep.subr.mxu0 0.0
      %1566 = vmatpush1.msra.mxu0 0.0
      %1567 = vmatprep.subr.mxu0 0.0
      %1568 = vmatpush1.msra.mxu0 0.0
      %1569 = vmatprep.subr.mxu0 0.0
      %1570 = vmatpush1.msra.mxu0 0.0
      %1571 = vmatprep.subr.mxu0 0.0
      %1572 = vmatpush1.msra.mxu0 0.0
      %1573 = vmatprep.subr.mxu0 0.0
      %1574 = vmatpush1.msra.mxu0 0.0
      %1575 = vmatprep.subr.mxu0 0.0
      %1576 = vmatpush1.msra.mxu0 0.0
      %1577 = vmatprep.subr.mxu0 0.0
      %1578 = vmatpush1.msra.mxu0 0.0
      %1579 = vmatprep.subr.mxu0 0.0
      %1580 = vmatpush1.msra.mxu0 0.0
      %1581 = vmatprep.subr.mxu0 0.0
      %1582 = vmatpush1.msra.mxu0 0.0
      %1583 = vmatprep.subr.mxu0 0.0
      %1584 = vmatpush1.msra.mxu0 0.0
      %1585 = vmatprep.subr.mxu0 0.0
      %1586 = vmatpush1.msra.mxu0 0.0
      %1587 = vmatprep.subr.mxu0 0.0
      %1588 = vmatpush1.msra.mxu0 0.0
      %1589 = vmatprep.subr.mxu0 0.0
      %1590 = vmatpush1.msra.mxu0 0.0
      %1591 = vmatprep.subr.mxu0 0.0
      %1592 = vmatpush1.msra.mxu0 0.0
      %1593 = vmatprep.subr.mxu0 0.0
      %1594 = vmatpush1.msra.mxu0 0.0
      %1595 = vmatprep.subr.mxu0 0.0
      %1596 = vmatpush1.msra.mxu0 0.0
      %1597 = vmatprep.subr.mxu0 0.0
      %1598 = vmatpush1.msra.mxu0 0.0
      %1599 = vmatprep.subr.mxu0 0.0
      %1600 = vmatpush1.msra.mxu0 0.0
      %1601 = vmatprep.subr.mxu0 0.0
      %1602 = vmatpush1.msra.mxu0 0.0
      %1603 = vmatprep.subr.mxu0 0.0
      %1604 = vmatpush1.msra.mxu0 0.0
      %1605 = vmatprep.subr.mxu0 0.0
      %1606 = vmatpush1.msra.mxu0 0.0
      %1607 = vmatprep.subr.mxu0 0.0
      %1608 = vmatpush1.msra.mxu0 0.0
      %1609 = vmatprep.subr.mxu0 0.0
      %1610 = vmatpush1.msra.mxu0 0.0
      %1611 = vmatprep.subr.mxu0 0.0
      %1612 = vmatpush1.msra.mxu0 0.0
      %1613 = vmatprep.subr.mxu0 0.0
      %1614 = vmatpush1.msra.mxu0 0.0
      %1615 = vmatprep.mubr.f32.mxu0 0.0
      %1616 = vmatmul.mubr.f32.gmra.mrb[0].mxu0 %v1336
      %v1617 = vpop.f32.mrb[0].mxu0
      %v1618 = vadd.f32 0.0, %v1617
      %v1619 = vpop.f32.mrb[0].mxu0
      %v1620 = vadd.f32 0.0, %v1619
      %1621 = vdwg.mxu0
      %v1622 = vadd.f32 %v1300, %v1405
      %v1623 = vadd.f32 %v1301, %v1407
      %v1624 = vadd.f32 %v1302, %v1476
      %v1625 = vadd.f32 %v1303, %v1478
      %v1626 = vadd.f32 %v1304, %v1547
      %v1627 = vadd.f32 %v1305, %v1549
      %v1628 = vadd.f32 %v1306, %v1618
      %v1629 = vadd.f32 %v1307, %v1620
      %v1630 = vld [vmem:[%s2] sm:$0xff]
      %1632 = vset.pattern.permute.xlu0 0
      %1633 = vperm.xlu0 %1632, %v1630
      %v1634 = vpop.permute.xlu0 %1633
      %v1636 = vadd.f32 %v1622, %v1634
      %v1637 = vadd.f32 %v1623, %v1634
      %v1638 = vadd.f32 %v1624, %v1634
      %v1639 = vadd.f32 %v1625, %v1634
      %v1640 = vadd.f32 %v1626, %v1634
      %v1641 = vadd.f32 %v1627, %v1634
      %v1642 = vadd.f32 %v1628, %v1634
      %v1643 = vadd.f32 %v1629, %v1634
      %v1644 = vmax.f32 %v1636, 0.0
      %v1645 = vmax.f32 %v1637, 0.0
      %v1646 = vmax.f32 %v1638, 0.0
      %v1647 = vmax.f32 %v1639, 0.0
      %v1648 = vmax.f32 %v1640, 0.0
      %v1649 = vmax.f32 %v1641, 0.0
      %v1650 = vmax.f32 %v1642, 0.0
      %v1651 = vmax.f32 %v1643, 0.0
      %v1652 = vld [vmem:[%s3] sm:$0xff]
      %1653 = vrot.lane.b32.xlu0 %v1644, 127
      %v1654 = vpop.permute.xlu0 %1653
      %1655 = vrot.lane.b32.xlu0 %v1645, 127
      %v1656 = vpop.permute.xlu0 %1655
      %1657 = vrot.lane.b32.xlu0 %v1646, 127
      %v1658 = vpop.permute.xlu0 %1657
      %1659 = vrot.lane.b32.xlu0 %v1647, 127
      %v1660 = vpop.permute.xlu0 %1659
      %1661 = vrot.lane.b32.xlu0 %v1648, 127
      %v1662 = vpop.permute.xlu0 %1661
      %1663 = vrot.lane.b32.xlu0 %v1649, 127
      %v1664 = vpop.permute.xlu0 %1663
      %1665 = vrot.lane.b32.xlu0 %v1650, 127
      %v1666 = vpop.permute.xlu0 %1665
      %1667 = vrot.lane.b32.xlu0 %v1651, 127
      %v1668 = vpop.permute.xlu0 %1667
      %v1669 = vsel %vm400, %v1666, %v1668
      %v1670 = vsel %vm400, %v1664, %v1666
      %v1671 = vsel %vm400, %v1662, %v1664
      %v1672 = vsel %vm400, %v1660, %v1662
      %v1673 = vsel %vm400, %v1658, %v1660
      %v1674 = vsel %vm400, %v1656, %v1658
      %v1675 = vsel %vm400, %v1654, %v1656
      %v1676 = vsel %vm400, %v1668, %v1654
      %s1677 = scalar_lea.vmem %s3, 8
      %v1678 = vld [vmem:[%s1677] sm:$0xff]
      %v1680 = vsel %vm411, %v1678, 0
      %1682 = vmatprep.subr.mxu0 %v1674
      %1683 = vmatpush1.msra.mxu0 %v1675
      %1684 = vmatprep.subr.mxu0 0.0
      %1685 = vmatpush1.msra.mxu0 0.0
      %1686 = vmatprep.subr.mxu0 0.0
      %1687 = vmatpush1.msra.mxu0 0.0
      %1688 = vmatprep.subr.mxu0 0.0
      %1689 = vmatpush1.msra.mxu0 0.0
      %1690 = vmatprep.subr.mxu0 0.0
      %1691 = vmatpush1.msra.mxu0 0.0
      %1692 = vmatprep.subr.mxu0 0.0
      %1693 = vmatpush1.msra.mxu0 0.0
      %1694 = vmatprep.subr.mxu0 0.0
      %1695 = vmatpush1.msra.mxu0 0.0
      %1696 = vmatprep.subr.mxu0 0.0
      %1697 = vmatpush1.msra.mxu0 0.0
      %1698 = vmatprep.subr.mxu0 0.0
      %1699 = vmatpush1.msra.mxu0 0.0
      %1700 = vmatprep.subr.mxu0 0.0
      %1701 = vmatpush1.msra.mxu0 0.0
      %1702 = vmatprep.subr.mxu0 0.0
      %1703 = vmatpush1.msra.mxu0 0.0
      %1704 = vmatprep.subr.mxu0 0.0
      %1705 = vmatpush1.msra.mxu0 0.0
      %1706 = vmatprep.subr.mxu0 0.0
      %1707 = vmatpush1.msra.mxu0 0.0
      %1708 = vmatprep.subr.mxu0 0.0
      %1709 = vmatpush1.msra.mxu0 0.0
      %1710 = vmatprep.subr.mxu0 0.0
      %1711 = vmatpush1.msra.mxu0 0.0
      %1712 = vmatprep.subr.mxu0 0.0
      %1713 = vmatpush1.msra.mxu0 0.0
      %1714 = vmatprep.subr.mxu0 0.0
      %1715 = vmatpush1.msra.mxu0 0.0
      %1716 = vmatprep.subr.mxu0 0.0
      %1717 = vmatpush1.msra.mxu0 0.0
      %1718 = vmatprep.subr.mxu0 0.0
      %1719 = vmatpush1.msra.mxu0 0.0
      %1720 = vmatprep.subr.mxu0 0.0
      %1721 = vmatpush1.msra.mxu0 0.0
      %1722 = vmatprep.subr.mxu0 0.0
      %1723 = vmatpush1.msra.mxu0 0.0
      %1724 = vmatprep.subr.mxu0 0.0
      %1725 = vmatpush1.msra.mxu0 0.0
      %1726 = vmatprep.subr.mxu0 0.0
      %1727 = vmatpush1.msra.mxu0 0.0
      %1728 = vmatprep.subr.mxu0 0.0
      %1729 = vmatpush1.msra.mxu0 0.0
      %1730 = vmatprep.subr.mxu0 0.0
      %1731 = vmatpush1.msra.mxu0 0.0
      %1732 = vmatprep.subr.mxu0 0.0
      %1733 = vmatpush1.msra.mxu0 0.0
      %1734 = vmatprep.subr.mxu0 0.0
      %1735 = vmatpush1.msra.mxu0 0.0
      %1736 = vmatprep.subr.mxu0 0.0
      %1737 = vmatpush1.msra.mxu0 0.0
      %1738 = vmatprep.subr.mxu0 0.0
      %1739 = vmatpush1.msra.mxu0 0.0
      %1740 = vmatprep.subr.mxu0 0.0
      %1741 = vmatpush1.msra.mxu0 0.0
      %1742 = vmatprep.subr.mxu0 0.0
      %1743 = vmatpush1.msra.mxu0 0.0
      %1744 = vmatprep.subr.mxu0 0.0
      %1745 = vmatpush1.msra.mxu0 0.0
      %1746 = vmatprep.mubr.f32.mxu0 0.0
      %1747 = vmatmul.mubr.f32.gmra.mrb[0].mxu0 %v1680
      %v1748 = vpop.f32.mrb[0].mxu0
      %v1749 = vadd.f32 0.0, %v1748
      %v1750 = vpop.f32.mrb[0].mxu0
      %v1751 = vadd.f32 0.0, %v1750
      %1752 = vdwg.mxu0
      %1753 = vmatprep.subr.mxu0 %v1672
      %1754 = vmatpush1.msra.mxu0 %v1673
      %1755 = vmatprep.subr.mxu0 0.0
      %1756 = vmatpush1.msra.mxu0 0.0
      %1757 = vmatprep.subr.mxu0 0.0
      %1758 = vmatpush1.msra.mxu0 0.0
      %1759 = vmatprep.subr.mxu0 0.0
      %1760 = vmatpush1.msra.mxu0 0.0
      %1761 = vmatprep.subr.mxu0 0.0
      %1762 = vmatpush1.msra.mxu0 0.0
      %1763 = vmatprep.subr.mxu0 0.0
      %1764 = vmatpush1.msra.mxu0 0.0
      %1765 = vmatprep.subr.mxu0 0.0
      %1766 = vmatpush1.msra.mxu0 0.0
      %1767 = vmatprep.subr.mxu0 0.0
      %1768 = vmatpush1.msra.mxu0 0.0
      %1769 = vmatprep.subr.mxu0 0.0
      %1770 = vmatpush1.msra.mxu0 0.0
      %1771 = vmatprep.subr.mxu0 0.0
      %1772 = vmatpush1.msra.mxu0 0.0
      %1773 = vmatprep.subr.mxu0 0.0
      %1774 = vmatpush1.msra.mxu0 0.0
      %1775 = vmatprep.subr.mxu0 0.0
      %1776 = vmatpush1.msra.mxu0 0.0
      %1777 = vmatprep.subr.mxu0 0.0
      %1778 = vmatpush1.msra.mxu0 0.0
      %1779 = vmatprep.subr.mxu0 0.0
      %1780 = vmatpush1.msra.mxu0 0.0
      %1781 = vmatprep.subr.mxu0 0.0
      %1782 = vmatpush1.msra.mxu0 0.0
      %1783 = vmatprep.subr.mxu0 0.0
      %1784 = vmatpush1.msra.mxu0 0.0
      %1785 = vmatprep.subr.mxu0 0.0
      %1786 = vmatpush1.msra.mxu0 0.0
      %1787 = vmatprep.subr.mxu0 0.0
      %1788 = vmatpush1.msra.mxu0 0.0
      %1789 = vmatprep.subr.mxu0 0.0
      %1790 = vmatpush1.msra.mxu0 0.0
      %1791 = vmatprep.subr.mxu0 0.0
      %1792 = vmatpush1.msra.mxu0 0.0
      %1793 = vmatprep.subr.mxu0 0.0
      %1794 = vmatpush1.msra.mxu0 0.0
      %1795 = vmatprep.subr.mxu0 0.0
      %1796 = vmatpush1.msra.mxu0 0.0
      %1797 = vmatprep.subr.mxu0 0.0
      %1798 = vmatpush1.msra.mxu0 0.0
      %1799 = vmatprep.subr.mxu0 0.0
      %1800 = vmatpush1.msra.mxu0 0.0
      %1801 = vmatprep.subr.mxu0 0.0
      %1802 = vmatpush1.msra.mxu0 0.0
      %1803 = vmatprep.subr.mxu0 0.0
      %1804 = vmatpush1.msra.mxu0 0.0
      %1805 = vmatprep.subr.mxu0 0.0
      %1806 = vmatpush1.msra.mxu0 0.0
      %1807 = vmatprep.subr.mxu0 0.0
      %1808 = vmatpush1.msra.mxu0 0.0
      %1809 = vmatprep.subr.mxu0 0.0
      %1810 = vmatpush1.msra.mxu0 0.0
      %1811 = vmatprep.subr.mxu0 0.0
      %1812 = vmatpush1.msra.mxu0 0.0
      %1813 = vmatprep.subr.mxu0 0.0
      %1814 = vmatpush1.msra.mxu0 0.0
      %1815 = vmatprep.subr.mxu0 0.0
      %1816 = vmatpush1.msra.mxu0 0.0
      %1817 = vmatprep.mubr.f32.mxu0 0.0
      %1818 = vmatmul.mubr.f32.gmra.mrb[0].mxu0 %v1680
      %v1819 = vpop.f32.mrb[0].mxu0
      %v1820 = vadd.f32 0.0, %v1819
      %v1821 = vpop.f32.mrb[0].mxu0
      %v1822 = vadd.f32 0.0, %v1821
      %1823 = vdwg.mxu0
      %1824 = vmatprep.subr.mxu0 %v1670
      %1825 = vmatpush1.msra.mxu0 %v1671
      %1826 = vmatprep.subr.mxu0 0.0
      %1827 = vmatpush1.msra.mxu0 0.0
      %1828 = vmatprep.subr.mxu0 0.0
      %1829 = vmatpush1.msra.mxu0 0.0
      %1830 = vmatprep.subr.mxu0 0.0
      %1831 = vmatpush1.msra.mxu0 0.0
      %1832 = vmatprep.subr.mxu0 0.0
      %1833 = vmatpush1.msra.mxu0 0.0
      %1834 = vmatprep.subr.mxu0 0.0
      %1835 = vmatpush1.msra.mxu0 0.0
      %1836 = vmatprep.subr.mxu0 0.0
      %1837 = vmatpush1.msra.mxu0 0.0
      %1838 = vmatprep.subr.mxu0 0.0
      %1839 = vmatpush1.msra.mxu0 0.0
      %1840 = vmatprep.subr.mxu0 0.0
      %1841 = vmatpush1.msra.mxu0 0.0
      %1842 = vmatprep.subr.mxu0 0.0
      %1843 = vmatpush1.msra.mxu0 0.0
      %1844 = vmatprep.subr.mxu0 0.0
      %1845 = vmatpush1.msra.mxu0 0.0
      %1846 = vmatprep.subr.mxu0 0.0
      %1847 = vmatpush1.msra.mxu0 0.0
      %1848 = vmatprep.subr.mxu0 0.0
      %1849 = vmatpush1.msra.mxu0 0.0
      %1850 = vmatprep.subr.mxu0 0.0
      %1851 = vmatpush1.msra.mxu0 0.0
      %1852 = vmatprep.subr.mxu0 0.0
      %1853 = vmatpush1.msra.mxu0 0.0
      %1854 = vmatprep.subr.mxu0 0.0
      %1855 = vmatpush1.msra.mxu0 0.0
      %1856 = vmatprep.subr.mxu0 0.0
      %1857 = vmatpush1.msra.mxu0 0.0
      %1858 = vmatprep.subr.mxu0 0.0
      %1859 = vmatpush1.msra.mxu0 0.0
      %1860 = vmatprep.subr.mxu0 0.0
      %1861 = vmatpush1.msra.mxu0 0.0
      %1862 = vmatprep.subr.mxu0 0.0
      %1863 = vmatpush1.msra.mxu0 0.0
      %1864 = vmatprep.subr.mxu0 0.0
      %1865 = vmatpush1.msra.mxu0 0.0
      %1866 = vmatprep.subr.mxu0 0.0
      %1867 = vmatpush1.msra.mxu0 0.0
      %1868 = vmatprep.subr.mxu0 0.0
      %1869 = vmatpush1.msra.mxu0 0.0
      %1870 = vmatprep.subr.mxu0 0.0
      %1871 = vmatpush1.msra.mxu0 0.0
      %1872 = vmatprep.subr.mxu0 0.0
      %1873 = vmatpush1.msra.mxu0 0.0
      %1874 = vmatprep.subr.mxu0 0.0
      %1875 = vmatpush1.msra.mxu0 0.0
      %1876 = vmatprep.subr.mxu0 0.0
      %1877 = vmatpush1.msra.mxu0 0.0
      %1878 = vmatprep.subr.mxu0 0.0
      %1879 = vmatpush1.msra.mxu0 0.0
      %1880 = vmatprep.subr.mxu0 0.0
      %1881 = vmatpush1.msra.mxu0 0.0
      %1882 = vmatprep.subr.mxu0 0.0
      %1883 = vmatpush1.msra.mxu0 0.0
      %1884 = vmatprep.subr.mxu0 0.0
      %1885 = vmatpush1.msra.mxu0 0.0
      %1886 = vmatprep.subr.mxu0 0.0
      %1887 = vmatpush1.msra.mxu0 0.0
      %1888 = vmatprep.mubr.f32.mxu0 0.0
      %1889 = vmatmul.mubr.f32.gmra.mrb[0].mxu0 %v1680
      %v1890 = vpop.f32.mrb[0].mxu0
      %v1891 = vadd.f32 0.0, %v1890
      %v1892 = vpop.f32.mrb[0].mxu0
      %v1893 = vadd.f32 0.0, %v1892
      %1894 = vdwg.mxu0
      %1895 = vmatprep.subr.mxu0 %v1676
      %1896 = vmatpush1.msra.mxu0 %v1669
      %1897 = vmatprep.subr.mxu0 0.0
      %1898 = vmatpush1.msra.mxu0 0.0
      %1899 = vmatprep.subr.mxu0 0.0
      %1900 = vmatpush1.msra.mxu0 0.0
      %1901 = vmatprep.subr.mxu0 0.0
      %1902 = vmatpush1.msra.mxu0 0.0
      %1903 = vmatprep.subr.mxu0 0.0
      %1904 = vmatpush1.msra.mxu0 0.0
      %1905 = vmatprep.subr.mxu0 0.0
      %1906 = vmatpush1.msra.mxu0 0.0
      %1907 = vmatprep.subr.mxu0 0.0
      %1908 = vmatpush1.msra.mxu0 0.0
      %1909 = vmatprep.subr.mxu0 0.0
      %1910 = vmatpush1.msra.mxu0 0.0
      %1911 = vmatprep.subr.mxu0 0.0
      %1912 = vmatpush1.msra.mxu0 0.0
      %1913 = vmatprep.subr.mxu0 0.0
      %1914 = vmatpush1.msra.mxu0 0.0
      %1915 = vmatprep.subr.mxu0 0.0
      %1916 = vmatpush1.msra.mxu0 0.0
      %1917 = vmatprep.subr.mxu0 0.0
      %1918 = vmatpush1.msra.mxu0 0.0
      %1919 = vmatprep.subr.mxu0 0.0
      %1920 = vmatpush1.msra.mxu0 0.0
      %1921 = vmatprep.subr.mxu0 0.0
      %1922 = vmatpush1.msra.mxu0 0.0
      %1923 = vmatprep.subr.mxu0 0.0
      %1924 = vmatpush1.msra.mxu0 0.0
      %1925 = vmatprep.subr.mxu0 0.0
      %1926 = vmatpush1.msra.mxu0 0.0
      %1927 = vmatprep.subr.mxu0 0.0
      %1928 = vmatpush1.msra.mxu0 0.0
      %1929 = vmatprep.subr.mxu0 0.0
      %1930 = vmatpush1.msra.mxu0 0.0
      %1931 = vmatprep.subr.mxu0 0.0
      %1932 = vmatpush1.msra.mxu0 0.0
      %1933 = vmatprep.subr.mxu0 0.0
      %1934 = vmatpush1.msra.mxu0 0.0
      %1935 = vmatprep.subr.mxu0 0.0
      %1936 = vmatpush1.msra.mxu0 0.0
      %1937 = vmatprep.subr.mxu0 0.0
      %1938 = vmatpush1.msra.mxu0 0.0
      %1939 = vmatprep.subr.mxu0 0.0
      %1940 = vmatpush1.msra.mxu0 0.0
      %1941 = vmatprep.subr.mxu0 0.0
      %1942 = vmatpush1.msra.mxu0 0.0
      %1943 = vmatprep.subr.mxu0 0.0
      %1944 = vmatpush1.msra.mxu0 0.0
      %1945 = vmatprep.subr.mxu0 0.0
      %1946 = vmatpush1.msra.mxu0 0.0
      %1947 = vmatprep.subr.mxu0 0.0
      %1948 = vmatpush1.msra.mxu0 0.0
      %1949 = vmatprep.subr.mxu0 0.0
      %1950 = vmatpush1.msra.mxu0 0.0
      %1951 = vmatprep.subr.mxu0 0.0
      %1952 = vmatpush1.msra.mxu0 0.0
      %1953 = vmatprep.subr.mxu0 0.0
      %1954 = vmatpush1.msra.mxu0 0.0
      %1955 = vmatprep.subr.mxu0 0.0
      %1956 = vmatpush1.msra.mxu0 0.0
      %1957 = vmatprep.subr.mxu0 0.0
      %1958 = vmatpush1.msra.mxu0 0.0
      %1959 = vmatprep.mubr.f32.mxu0 0.0
      %1960 = vmatmul.mubr.f32.gmra.mrb[0].mxu0 %v1680
      %v1961 = vpop.f32.mrb[0].mxu0
      %v1962 = vadd.f32 0.0, %v1961
      %v1963 = vpop.f32.mrb[0].mxu0
      %v1964 = vadd.f32 0.0, %v1963
      %1965 = vdwg.mxu0
      %v1967 = vsel %vm411, %v1652, 0
      %1969 = vmatprep.subr.mxu0 %v1645
      %1970 = vmatpush1.msra.mxu0 %v1644
      %1971 = vmatprep.subr.mxu0 0.0
      %1972 = vmatpush1.msra.mxu0 0.0
      %1973 = vmatprep.subr.mxu0 0.0
      %1974 = vmatpush1.msra.mxu0 0.0
      %1975 = vmatprep.subr.mxu0 0.0
      %1976 = vmatpush1.msra.mxu0 0.0
      %1977 = vmatprep.subr.mxu0 0.0
      %1978 = vmatpush1.msra.mxu0 0.0
      %1979 = vmatprep.subr.mxu0 0.0
      %1980 = vmatpush1.msra.mxu0 0.0
      %1981 = vmatprep.subr.mxu0 0.0
      %1982 = vmatpush1.msra.mxu0 0.0
      %1983 = vmatprep.subr.mxu0 0.0
      %1984 = vmatpush1.msra.mxu0 0.0
      %1985 = vmatprep.subr.mxu0 0.0
      %1986 = vmatpush1.msra.mxu0 0.0
      %1987 = vmatprep.subr.mxu0 0.0
      %1988 = vmatpush1.msra.mxu0 0.0
      %1989 = vmatprep.subr.mxu0 0.0
      %1990 = vmatpush1.msra.mxu0 0.0
      %1991 = vmatprep.subr.mxu0 0.0
      %1992 = vmatpush1.msra.mxu0 0.0
      %1993 = vmatprep.subr.mxu0 0.0
      %1994 = vmatpush1.msra.mxu0 0.0
      %1995 = vmatprep.subr.mxu0 0.0
      %1996 = vmatpush1.msra.mxu0 0.0
      %1997 = vmatprep.subr.mxu0 0.0
      %1998 = vmatpush1.msra.mxu0 0.0
      %1999 = vmatprep.subr.mxu0 0.0
      %2000 = vmatpush1.msra.mxu0 0.0
      %2001 = vmatprep.subr.mxu0 0.0
      %2002 = vmatpush1.msra.mxu0 0.0
      %2003 = vmatprep.subr.mxu0 0.0
      %2004 = vmatpush1.msra.mxu0 0.0
      %2005 = vmatprep.subr.mxu0 0.0
      %2006 = vmatpush1.msra.mxu0 0.0
      %2007 = vmatprep.subr.mxu0 0.0
      %2008 = vmatpush1.msra.mxu0 0.0
      %2009 = vmatprep.subr.mxu0 0.0
      %2010 = vmatpush1.msra.mxu0 0.0
      %2011 = vmatprep.subr.mxu0 0.0
      %2012 = vmatpush1.msra.mxu0 0.0
      %2013 = vmatprep.subr.mxu0 0.0
      %2014 = vmatpush1.msra.mxu0 0.0
      %2015 = vmatprep.subr.mxu0 0.0
      %2016 = vmatpush1.msra.mxu0 0.0
      %2017 = vmatprep.subr.mxu0 0.0
      %2018 = vmatpush1.msra.mxu0 0.0
      %2019 = vmatprep.subr.mxu0 0.0
      %2020 = vmatpush1.msra.mxu0 0.0
      %2021 = vmatprep.subr.mxu0 0.0
      %2022 = vmatpush1.msra.mxu0 0.0
      %2023 = vmatprep.subr.mxu0 0.0
      %2024 = vmatpush1.msra.mxu0 0.0
      %2025 = vmatprep.subr.mxu0 0.0
      %2026 = vmatpush1.msra.mxu0 0.0
      %2027 = vmatprep.subr.mxu0 0.0
      %2028 = vmatpush1.msra.mxu0 0.0
      %2029 = vmatprep.subr.mxu0 0.0
      %2030 = vmatpush1.msra.mxu0 0.0
      %2031 = vmatprep.subr.mxu0 0.0
      %2032 = vmatpush1.msra.mxu0 0.0
      %2033 = vmatprep.mubr.f32.mxu0 0.0
      %2034 = vmatmul.mubr.f32.gmra.mrb[0].mxu0 %v1967
      %v2035 = vpop.f32.mrb[0].mxu0
      %v2036 = vadd.f32 %v1749, %v2035
      %v2037 = vpop.f32.mrb[0].mxu0
      %v2038 = vadd.f32 %v1751, %v2037
      %2039 = vdwg.mxu0
      %2040 = vmatprep.subr.mxu0 %v1647
      %2041 = vmatpush1.msra.mxu0 %v1646
      %2042 = vmatprep.subr.mxu0 0.0
      %2043 = vmatpush1.msra.mxu0 0.0
      %2044 = vmatprep.subr.mxu0 0.0
      %2045 = vmatpush1.msra.mxu0 0.0
      %2046 = vmatprep.subr.mxu0 0.0
      %2047 = vmatpush1.msra.mxu0 0.0
      %2048 = vmatprep.subr.mxu0 0.0
      %2049 = vmatpush1.msra.mxu0 0.0
      %2050 = vmatprep.subr.mxu0 0.0
      %2051 = vmatpush1.msra.mxu0 0.0
      %2052 = vmatprep.subr.mxu0 0.0
      %2053 = vmatpush1.msra.mxu0 0.0
      %2054 = vmatprep.subr.mxu0 0.0
      %2055 = vmatpush1.msra.mxu0 0.0
      %2056 = vmatprep.subr.mxu0 0.0
      %2057 = vmatpush1.msra.mxu0 0.0
      %2058 = vmatprep.subr.mxu0 0.0
      %2059 = vmatpush1.msra.mxu0 0.0
      %2060 = vmatprep.subr.mxu0 0.0
      %2061 = vmatpush1.msra.mxu0 0.0
      %2062 = vmatprep.subr.mxu0 0.0
      %2063 = vmatpush1.msra.mxu0 0.0
      %2064 = vmatprep.subr.mxu0 0.0
      %2065 = vmatpush1.msra.mxu0 0.0
      %2066 = vmatprep.subr.mxu0 0.0
      %2067 = vmatpush1.msra.mxu0 0.0
      %2068 = vmatprep.subr.mxu0 0.0
      %2069 = vmatpush1.msra.mxu0 0.0
      %2070 = vmatprep.subr.mxu0 0.0
      %2071 = vmatpush1.msra.mxu0 0.0
      %2072 = vmatprep.subr.mxu0 0.0
      %2073 = vmatpush1.msra.mxu0 0.0
      %2074 = vmatprep.subr.mxu0 0.0
      %2075 = vmatpush1.msra.mxu0 0.0
      %2076 = vmatprep.subr.mxu0 0.0
      %2077 = vmatpush1.msra.mxu0 0.0
      %2078 = vmatprep.subr.mxu0 0.0
      %2079 = vmatpush1.msra.mxu0 0.0
      %2080 = vmatprep.subr.mxu0 0.0
      %2081 = vmatpush1.msra.mxu0 0.0
      %2082 = vmatprep.subr.mxu0 0.0
      %2083 = vmatpush1.msra.mxu0 0.0
      %2084 = vmatprep.subr.mxu0 0.0
      %2085 = vmatpush1.msra.mxu0 0.0
      %2086 = vmatprep.subr.mxu0 0.0
      %2087 = vmatpush1.msra.mxu0 0.0
      %2088 = vmatprep.subr.mxu0 0.0
      %2089 = vmatpush1.msra.mxu0 0.0
      %2090 = vmatprep.subr.mxu0 0.0
      %2091 = vmatpush1.msra.mxu0 0.0
      %2092 = vmatprep.subr.mxu0 0.0
      %2093 = vmatpush1.msra.mxu0 0.0
      %2094 = vmatprep.subr.mxu0 0.0
      %2095 = vmatpush1.msra.mxu0 0.0
      %2096 = vmatprep.subr.mxu0 0.0
      %2097 = vmatpush1.msra.mxu0 0.0
      %2098 = vmatprep.subr.mxu0 0.0
      %2099 = vmatpush1.msra.mxu0 0.0
      %2100 = vmatprep.subr.mxu0 0.0
      %2101 = vmatpush1.msra.mxu0 0.0
      %2102 = vmatprep.subr.mxu0 0.0
      %2103 = vmatpush1.msra.mxu0 0.0
      %2104 = vmatprep.mubr.f32.mxu0 0.0
      %2105 = vmatmul.mubr.f32.gmra.mrb[0].mxu0 %v1967
      %v2106 = vpop.f32.mrb[0].mxu0
      %v2107 = vadd.f32 %v1820, %v2106
      %v2108 = vpop.f32.mrb[0].mxu0
      %v2109 = vadd.f32 %v1822, %v2108
      %2110 = vdwg.mxu0
      %2111 = vmatprep.subr.mxu0 %v1649
      %2112 = vmatpush1.msra.mxu0 %v1648
      %2113 = vmatprep.subr.mxu0 0.0
      %2114 = vmatpush1.msra.mxu0 0.0
      %2115 = vmatprep.subr.mxu0 0.0
      %2116 = vmatpush1.msra.mxu0 0.0
      %2117 = vmatprep.subr.mxu0 0.0
      %2118 = vmatpush1.msra.mxu0 0.0
      %2119 = vmatprep.subr.mxu0 0.0
      %2120 = vmatpush1.msra.mxu0 0.0
      %2121 = vmatprep.subr.mxu0 0.0
      %2122 = vmatpush1.msra.mxu0 0.0
      %2123 = vmatprep.subr.mxu0 0.0
      %2124 = vmatpush1.msra.mxu0 0.0
      %2125 = vmatprep.subr.mxu0 0.0
      %2126 = vmatpush1.msra.mxu0 0.0
      %2127 = vmatprep.subr.mxu0 0.0
      %2128 = vmatpush1.msra.mxu0 0.0
      %2129 = vmatprep.subr.mxu0 0.0
      %2130 = vmatpush1.msra.mxu0 0.0
      %2131 = vmatprep.subr.mxu0 0.0
      %2132 = vmatpush1.msra.mxu0 0.0
      %2133 = vmatprep.subr.mxu0 0.0
      %2134 = vmatpush1.msra.mxu0 0.0
      %2135 = vmatprep.subr.mxu0 0.0
      %2136 = vmatpush1.msra.mxu0 0.0
      %2137 = vmatprep.subr.mxu0 0.0
      %2138 = vmatpush1.msra.mxu0 0.0
      %2139 = vmatprep.subr.mxu0 0.0
      %2140 = vmatpush1.msra.mxu0 0.0
      %2141 = vmatprep.subr.mxu0 0.0
      %2142 = vmatpush1.msra.mxu0 0.0
      %2143 = vmatprep.subr.mxu0 0.0
      %2144 = vmatpush1.msra.mxu0 0.0
      %2145 = vmatprep.subr.mxu0 0.0
      %2146 = vmatpush1.msra.mxu0 0.0
      %2147 = vmatprep.subr.mxu0 0.0
      %2148 = vmatpush1.msra.mxu0 0.0
      %2149 = vmatprep.subr.mxu0 0.0
      %2150 = vmatpush1.msra.mxu0 0.0
      %2151 = vmatprep.subr.mxu0 0.0
      %2152 = vmatpush1.msra.mxu0 0.0
      %2153 = vmatprep.subr.mxu0 0.0
      %2154 = vmatpush1.msra.mxu0 0.0
      %2155 = vmatprep.subr.mxu0 0.0
      %2156 = vmatpush1.msra.mxu0 0.0
      %2157 = vmatprep.subr.mxu0 0.0
      %2158 = vmatpush1.msra.mxu0 0.0
      %2159 = vmatprep.subr.mxu0 0.0
      %2160 = vmatpush1.msra.mxu0 0.0
      %2161 = vmatprep.subr.mxu0 0.0
      %2162 = vmatpush1.msra.mxu0 0.0
      %2163 = vmatprep.subr.mxu0 0.0
      %2164 = vmatpush1.msra.mxu0 0.0
      %2165 = vmatprep.subr.mxu0 0.0
      %2166 = vmatpush1.msra.mxu0 0.0
      %2167 = vmatprep.subr.mxu0 0.0
      %2168 = vmatpush1.msra.mxu0 0.0
      %2169 = vmatprep.subr.mxu0 0.0
      %2170 = vmatpush1.msra.mxu0 0.0
      %2171 = vmatprep.subr.mxu0 0.0
      %2172 = vmatpush1.msra.mxu0 0.0
      %2173 = vmatprep.subr.mxu0 0.0
      %2174 = vmatpush1.msra.mxu0 0.0
      %2175 = vmatprep.mubr.f32.mxu0 0.0
      %2176 = vmatmul.mubr.f32.gmra.mrb[0].mxu0 %v1967
      %v2177 = vpop.f32.mrb[0].mxu0
      %v2178 = vadd.f32 %v1891, %v2177
      %v2179 = vpop.f32.mrb[0].mxu0
      %v2180 = vadd.f32 %v1893, %v2179
      %2181 = vdwg.mxu0
      %2182 = vmatprep.subr.mxu0 %v1651
      %2183 = vmatpush1.msra.mxu0 %v1650
      %2184 = vmatprep.subr.mxu0 0.0
      %2185 = vmatpush1.msra.mxu0 0.0
      %2186 = vmatprep.subr.mxu0 0.0
      %2187 = vmatpush1.msra.mxu0 0.0
      %2188 = vmatprep.subr.mxu0 0.0
      %2189 = vmatpush1.msra.mxu0 0.0
      %2190 = vmatprep.subr.mxu0 0.0
      %2191 = vmatpush1.msra.mxu0 0.0
      %2192 = vmatprep.subr.mxu0 0.0
      %2193 = vmatpush1.msra.mxu0 0.0
      %2194 = vmatprep.subr.mxu0 0.0
      %2195 = vmatpush1.msra.mxu0 0.0
      %2196 = vmatprep.subr.mxu0 0.0
      %2197 = vmatpush1.msra.mxu0 0.0
      %2198 = vmatprep.subr.mxu0 0.0
      %2199 = vmatpush1.msra.mxu0 0.0
      %2200 = vmatprep.subr.mxu0 0.0
      %2201 = vmatpush1.msra.mxu0 0.0
      %2202 = vmatprep.subr.mxu0 0.0
      %2203 = vmatpush1.msra.mxu0 0.0
      %2204 = vmatprep.subr.mxu0 0.0
      %2205 = vmatpush1.msra.mxu0 0.0
      %2206 = vmatprep.subr.mxu0 0.0
      %2207 = vmatpush1.msra.mxu0 0.0
      %2208 = vmatprep.subr.mxu0 0.0
      %2209 = vmatpush1.msra.mxu0 0.0
      %2210 = vmatprep.subr.mxu0 0.0
      %2211 = vmatpush1.msra.mxu0 0.0
      %2212 = vmatprep.subr.mxu0 0.0
      %2213 = vmatpush1.msra.mxu0 0.0
      %2214 = vmatprep.subr.mxu0 0.0
      %2215 = vmatpush1.msra.mxu0 0.0
      %2216 = vmatprep.subr.mxu0 0.0
      %2217 = vmatpush1.msra.mxu0 0.0
      %2218 = vmatprep.subr.mxu0 0.0
      %2219 = vmatpush1.msra.mxu0 0.0
      %2220 = vmatprep.subr.mxu0 0.0
      %2221 = vmatpush1.msra.mxu0 0.0
      %2222 = vmatprep.subr.mxu0 0.0
      %2223 = vmatpush1.msra.mxu0 0.0
      %2224 = vmatprep.subr.mxu0 0.0
      %2225 = vmatpush1.msra.mxu0 0.0
      %2226 = vmatprep.subr.mxu0 0.0
      %2227 = vmatpush1.msra.mxu0 0.0
      %2228 = vmatprep.subr.mxu0 0.0
      %2229 = vmatpush1.msra.mxu0 0.0
      %2230 = vmatprep.subr.mxu0 0.0
      %2231 = vmatpush1.msra.mxu0 0.0
      %2232 = vmatprep.subr.mxu0 0.0
      %2233 = vmatpush1.msra.mxu0 0.0
      %2234 = vmatprep.subr.mxu0 0.0
      %2235 = vmatpush1.msra.mxu0 0.0
      %2236 = vmatprep.subr.mxu0 0.0
      %2237 = vmatpush1.msra.mxu0 0.0
      %2238 = vmatprep.subr.mxu0 0.0
      %2239 = vmatpush1.msra.mxu0 0.0
      %2240 = vmatprep.subr.mxu0 0.0
      %2241 = vmatpush1.msra.mxu0 0.0
      %2242 = vmatprep.subr.mxu0 0.0
      %2243 = vmatpush1.msra.mxu0 0.0
      %2244 = vmatprep.subr.mxu0 0.0
      %2245 = vmatpush1.msra.mxu0 0.0
      %2246 = vmatprep.mubr.f32.mxu0 0.0
      %2247 = vmatmul.mubr.f32.gmra.mrb[0].mxu0 %v1967
      %v2248 = vpop.f32.mrb[0].mxu0
      %v2249 = vadd.f32 %v1962, %v2248
      %v2250 = vpop.f32.mrb[0].mxu0
      %v2251 = vadd.f32 %v1964, %v2250
      %2252 = vdwg.mxu0
      %2253 = vrot.lane.b32.xlu0 %v1644, 96
      %v2254 = vpop.permute.xlu0 %2253
      %2255 = vrot.lane.b32.xlu0 %v1645, 96
      %v2256 = vpop.permute.xlu0 %2255
      %2257 = vrot.lane.b32.xlu0 %v1646, 96
      %v2258 = vpop.permute.xlu0 %2257
      %2259 = vrot.lane.b32.xlu0 %v1647, 96
      %v2260 = vpop.permute.xlu0 %2259
      %2261 = vrot.lane.b32.xlu0 %v1648, 96
      %v2262 = vpop.permute.xlu0 %2261
      %2263 = vrot.lane.b32.xlu0 %v1649, 96
      %v2264 = vpop.permute.xlu0 %2263
      %2265 = vrot.lane.b32.xlu0 %v1650, 96
      %v2266 = vpop.permute.xlu0 %2265
      %2267 = vrot.lane.b32.xlu0 %v1651, 96
      %v2268 = vpop.permute.xlu0 %2267
      %v2269 = vsel %vm1002, %v2266, %v2268
      %v2270 = vsel %vm1002, %v2264, %v2266
      %v2271 = vsel %vm1002, %v2262, %v2264
      %v2272 = vsel %vm1002, %v2260, %v2262
      %v2273 = vsel %vm1002, %v2258, %v2260
      %v2274 = vsel %vm1002, %v2256, %v2258
      %v2275 = vsel %vm1002, %v2254, %v2256
      %v2276 = vsel %vm1002, %v2268, %v2254
      %s2277 = scalar_lea.vmem %s3, 16
      %v2278 = vld [vmem:[%s2277] sm:$0xff]
      %v2280 = vsel %vm411, %v2278, 0
      %2282 = vmatprep.subr.mxu0 %v2274
      %2283 = vmatpush1.msra.mxu0 %v2275
      %2284 = vmatprep.subr.mxu0 0.0
      %2285 = vmatpush1.msra.mxu0 0.0
      %2286 = vmatprep.subr.mxu0 0.0
      %2287 = vmatpush1.msra.mxu0 0.0
      %2288 = vmatprep.subr.mxu0 0.0
      %2289 = vmatpush1.msra.mxu0 0.0
      %2290 = vmatprep.subr.mxu0 0.0
      %2291 = vmatpush1.msra.mxu0 0.0
      %2292 = vmatprep.subr.mxu0 0.0
      %2293 = vmatpush1.msra.mxu0 0.0
      %2294 = vmatprep.subr.mxu0 0.0
      %2295 = vmatpush1.msra.mxu0 0.0
      %2296 = vmatprep.subr.mxu0 0.0
      %2297 = vmatpush1.msra.mxu0 0.0
      %2298 = vmatprep.subr.mxu0 0.0
      %2299 = vmatpush1.msra.mxu0 0.0
      %2300 = vmatprep.subr.mxu0 0.0
      %2301 = vmatpush1.msra.mxu0 0.0
      %2302 = vmatprep.subr.mxu0 0.0
      %2303 = vmatpush1.msra.mxu0 0.0
      %2304 = vmatprep.subr.mxu0 0.0
      %2305 = vmatpush1.msra.mxu0 0.0
      %2306 = vmatprep.subr.mxu0 0.0
      %2307 = vmatpush1.msra.mxu0 0.0
      %2308 = vmatprep.subr.mxu0 0.0
      %2309 = vmatpush1.msra.mxu0 0.0
      %2310 = vmatprep.subr.mxu0 0.0
      %2311 = vmatpush1.msra.mxu0 0.0
      %2312 = vmatprep.subr.mxu0 0.0
      %2313 = vmatpush1.msra.mxu0 0.0
      %2314 = vmatprep.subr.mxu0 0.0
      %2315 = vmatpush1.msra.mxu0 0.0
      %2316 = vmatprep.subr.mxu0 0.0
      %2317 = vmatpush1.msra.mxu0 0.0
      %2318 = vmatprep.subr.mxu0 0.0
      %2319 = vmatpush1.msra.mxu0 0.0
      %2320 = vmatprep.subr.mxu0 0.0
      %2321 = vmatpush1.msra.mxu0 0.0
      %2322 = vmatprep.subr.mxu0 0.0
      %2323 = vmatpush1.msra.mxu0 0.0
      %2324 = vmatprep.subr.mxu0 0.0
      %2325 = vmatpush1.msra.mxu0 0.0
      %2326 = vmatprep.subr.mxu0 0.0
      %2327 = vmatpush1.msra.mxu0 0.0
      %2328 = vmatprep.subr.mxu0 0.0
      %2329 = vmatpush1.msra.mxu0 0.0
      %2330 = vmatprep.subr.mxu0 0.0
      %2331 = vmatpush1.msra.mxu0 0.0
      %2332 = vmatprep.subr.mxu0 0.0
      %2333 = vmatpush1.msra.mxu0 0.0
      %2334 = vmatprep.subr.mxu0 0.0
      %2335 = vmatpush1.msra.mxu0 0.0
      %2336 = vmatprep.subr.mxu0 0.0
      %2337 = vmatpush1.msra.mxu0 0.0
      %2338 = vmatprep.subr.mxu0 0.0
      %2339 = vmatpush1.msra.mxu0 0.0
      %2340 = vmatprep.subr.mxu0 0.0
      %2341 = vmatpush1.msra.mxu0 0.0
      %2342 = vmatprep.subr.mxu0 0.0
      %2343 = vmatpush1.msra.mxu0 0.0
      %2344 = vmatprep.subr.mxu0 0.0
      %2345 = vmatpush1.msra.mxu0 0.0
      %2346 = vmatprep.mubr.f32.mxu0 0.0
      %2347 = vmatmul.mubr.f32.gmra.mrb[0].mxu0 %v2280
      %v2348 = vpop.f32.mrb[0].mxu0
      %v2349 = vadd.f32 0.0, %v2348
      %v2350 = vpop.f32.mrb[0].mxu0
      %v2351 = vadd.f32 0.0, %v2350
      %2352 = vdwg.mxu0
      %2353 = vmatprep.subr.mxu0 %v2272
      %2354 = vmatpush1.msra.mxu0 %v2273
      %2355 = vmatprep.subr.mxu0 0.0
      %2356 = vmatpush1.msra.mxu0 0.0
      %2357 = vmatprep.subr.mxu0 0.0
      %2358 = vmatpush1.msra.mxu0 0.0
      %2359 = vmatprep.subr.mxu0 0.0
      %2360 = vmatpush1.msra.mxu0 0.0
      %2361 = vmatprep.subr.mxu0 0.0
      %2362 = vmatpush1.msra.mxu0 0.0
      %2363 = vmatprep.subr.mxu0 0.0
      %2364 = vmatpush1.msra.mxu0 0.0
      %2365 = vmatprep.subr.mxu0 0.0
      %2366 = vmatpush1.msra.mxu0 0.0
      %2367 = vmatprep.subr.mxu0 0.0
      %2368 = vmatpush1.msra.mxu0 0.0
      %2369 = vmatprep.subr.mxu0 0.0
      %2370 = vmatpush1.msra.mxu0 0.0
      %2371 = vmatprep.subr.mxu0 0.0
      %2372 = vmatpush1.msra.mxu0 0.0
      %2373 = vmatprep.subr.mxu0 0.0
      %2374 = vmatpush1.msra.mxu0 0.0
      %2375 = vmatprep.subr.mxu0 0.0
      %2376 = vmatpush1.msra.mxu0 0.0
      %2377 = vmatprep.subr.mxu0 0.0
      %2378 = vmatpush1.msra.mxu0 0.0
      %2379 = vmatprep.subr.mxu0 0.0
      %2380 = vmatpush1.msra.mxu0 0.0
      %2381 = vmatprep.subr.mxu0 0.0
      %2382 = vmatpush1.msra.mxu0 0.0
      %2383 = vmatprep.subr.mxu0 0.0
      %2384 = vmatpush1.msra.mxu0 0.0
      %2385 = vmatprep.subr.mxu0 0.0
      %2386 = vmatpush1.msra.mxu0 0.0
      %2387 = vmatprep.subr.mxu0 0.0
      %2388 = vmatpush1.msra.mxu0 0.0
      %2389 = vmatprep.subr.mxu0 0.0
      %2390 = vmatpush1.msra.mxu0 0.0
      %2391 = vmatprep.subr.mxu0 0.0
      %2392 = vmatpush1.msra.mxu0 0.0
      %2393 = vmatprep.subr.mxu0 0.0
      %2394 = vmatpush1.msra.mxu0 0.0
      %2395 = vmatprep.subr.mxu0 0.0
      %2396 = vmatpush1.msra.mxu0 0.0
      %2397 = vmatprep.subr.mxu0 0.0
      %2398 = vmatpush1.msra.mxu0 0.0
      %2399 = vmatprep.subr.mxu0 0.0
      %2400 = vmatpush1.msra.mxu0 0.0
      %2401 = vmatprep.subr.mxu0 0.0
      %2402 = vmatpush1.msra.mxu0 0.0
      %2403 = vmatprep.subr.mxu0 0.0
      %2404 = vmatpush1.msra.mxu0 0.0
      %2405 = vmatprep.subr.mxu0 0.0
      %2406 = vmatpush1.msra.mxu0 0.0
      %2407 = vmatprep.subr.mxu0 0.0
      %2408 = vmatpush1.msra.mxu0 0.0
      %2409 = vmatprep.subr.mxu0 0.0
      %2410 = vmatpush1.msra.mxu0 0.0
      %2411 = vmatprep.subr.mxu0 0.0
      %2412 = vmatpush1.msra.mxu0 0.0
      %2413 = vmatprep.subr.mxu0 0.0
      %2414 = vmatpush1.msra.mxu0 0.0
      %2415 = vmatprep.subr.mxu0 0.0
      %2416 = vmatpush1.msra.mxu0 0.0
      %2417 = vmatprep.mubr.f32.mxu0 0.0
      %2418 = vmatmul.mubr.f32.gmra.mrb[0].mxu0 %v2280
      %v2419 = vpop.f32.mrb[0].mxu0
      %v2420 = vadd.f32 0.0, %v2419
      %v2421 = vpop.f32.mrb[0].mxu0
      %v2422 = vadd.f32 0.0, %v2421
      %2423 = vdwg.mxu0
      %2424 = vmatprep.subr.mxu0 %v2270
      %2425 = vmatpush1.msra.mxu0 %v2271
      %2426 = vmatprep.subr.mxu0 0.0
      %2427 = vmatpush1.msra.mxu0 0.0
      %2428 = vmatprep.subr.mxu0 0.0
      %2429 = vmatpush1.msra.mxu0 0.0
      %2430 = vmatprep.subr.mxu0 0.0
      %2431 = vmatpush1.msra.mxu0 0.0
      %2432 = vmatprep.subr.mxu0 0.0
      %2433 = vmatpush1.msra.mxu0 0.0
      %2434 = vmatprep.subr.mxu0 0.0
      %2435 = vmatpush1.msra.mxu0 0.0
      %2436 = vmatprep.subr.mxu0 0.0
      %2437 = vmatpush1.msra.mxu0 0.0
      %2438 = vmatprep.subr.mxu0 0.0
      %2439 = vmatpush1.msra.mxu0 0.0
      %2440 = vmatprep.subr.mxu0 0.0
      %2441 = vmatpush1.msra.mxu0 0.0
      %2442 = vmatprep.subr.mxu0 0.0
      %2443 = vmatpush1.msra.mxu0 0.0
      %2444 = vmatprep.subr.mxu0 0.0
      %2445 = vmatpush1.msra.mxu0 0.0
      %2446 = vmatprep.subr.mxu0 0.0
      %2447 = vmatpush1.msra.mxu0 0.0
      %2448 = vmatprep.subr.mxu0 0.0
      %2449 = vmatpush1.msra.mxu0 0.0
      %2450 = vmatprep.subr.mxu0 0.0
      %2451 = vmatpush1.msra.mxu0 0.0
      %2452 = vmatprep.subr.mxu0 0.0
      %2453 = vmatpush1.msra.mxu0 0.0
      %2454 = vmatprep.subr.mxu0 0.0
      %2455 = vmatpush1.msra.mxu0 0.0
      %2456 = vmatprep.subr.mxu0 0.0
      %2457 = vmatpush1.msra.mxu0 0.0
      %2458 = vmatprep.subr.mxu0 0.0
      %2459 = vmatpush1.msra.mxu0 0.0
      %2460 = vmatprep.subr.mxu0 0.0
      %2461 = vmatpush1.msra.mxu0 0.0
      %2462 = vmatprep.subr.mxu0 0.0
      %2463 = vmatpush1.msra.mxu0 0.0
      %2464 = vmatprep.subr.mxu0 0.0
      %2465 = vmatpush1.msra.mxu0 0.0
      %2466 = vmatprep.subr.mxu0 0.0
      %2467 = vmatpush1.msra.mxu0 0.0
      %2468 = vmatprep.subr.mxu0 0.0
      %2469 = vmatpush1.msra.mxu0 0.0
      %2470 = vmatprep.subr.mxu0 0.0
      %2471 = vmatpush1.msra.mxu0 0.0
      %2472 = vmatprep.subr.mxu0 0.0
      %2473 = vmatpush1.msra.mxu0 0.0
      %2474 = vmatprep.subr.mxu0 0.0
      %2475 = vmatpush1.msra.mxu0 0.0
      %2476 = vmatprep.subr.mxu0 0.0
      %2477 = vmatpush1.msra.mxu0 0.0
      %2478 = vmatprep.subr.mxu0 0.0
      %2479 = vmatpush1.msra.mxu0 0.0
      %2480 = vmatprep.subr.mxu0 0.0
      %2481 = vmatpush1.msra.mxu0 0.0
      %2482 = vmatprep.subr.mxu0 0.0
      %2483 = vmatpush1.msra.mxu0 0.0
      %2484 = vmatprep.subr.mxu0 0.0
      %2485 = vmatpush1.msra.mxu0 0.0
      %2486 = vmatprep.subr.mxu0 0.0
      %2487 = vmatpush1.msra.mxu0 0.0
      %2488 = vmatprep.mubr.f32.mxu0 0.0
      %2489 = vmatmul.mubr.f32.gmra.mrb[0].mxu0 %v2280
      %v2490 = vpop.f32.mrb[0].mxu0
      %v2491 = vadd.f32 0.0, %v2490
      %v2492 = vpop.f32.mrb[0].mxu0
      %v2493 = vadd.f32 0.0, %v2492
      %2494 = vdwg.mxu0
      %2495 = vmatprep.subr.mxu0 %v2276
      %2496 = vmatpush1.msra.mxu0 %v2269
      %2497 = vmatprep.subr.mxu0 0.0
      %2498 = vmatpush1.msra.mxu0 0.0
      %2499 = vmatprep.subr.mxu0 0.0
      %2500 = vmatpush1.msra.mxu0 0.0
      %2501 = vmatprep.subr.mxu0 0.0
      %2502 = vmatpush1.msra.mxu0 0.0
      %2503 = vmatprep.subr.mxu0 0.0
      %2504 = vmatpush1.msra.mxu0 0.0
      %2505 = vmatprep.subr.mxu0 0.0
      %2506 = vmatpush1.msra.mxu0 0.0
      %2507 = vmatprep.subr.mxu0 0.0
      %2508 = vmatpush1.msra.mxu0 0.0
      %2509 = vmatprep.subr.mxu0 0.0
      %2510 = vmatpush1.msra.mxu0 0.0
      %2511 = vmatprep.subr.mxu0 0.0
      %2512 = vmatpush1.msra.mxu0 0.0
      %2513 = vmatprep.subr.mxu0 0.0
      %2514 = vmatpush1.msra.mxu0 0.0
      %2515 = vmatprep.subr.mxu0 0.0
      %2516 = vmatpush1.msra.mxu0 0.0
      %2517 = vmatprep.subr.mxu0 0.0
      %2518 = vmatpush1.msra.mxu0 0.0
      %2519 = vmatprep.subr.mxu0 0.0
      %2520 = vmatpush1.msra.mxu0 0.0
      %2521 = vmatprep.subr.mxu0 0.0
      %2522 = vmatpush1.msra.mxu0 0.0
      %2523 = vmatprep.subr.mxu0 0.0
      %2524 = vmatpush1.msra.mxu0 0.0
      %2525 = vmatprep.subr.mxu0 0.0
      %2526 = vmatpush1.msra.mxu0 0.0
      %2527 = vmatprep.subr.mxu0 0.0
      %2528 = vmatpush1.msra.mxu0 0.0
      %2529 = vmatprep.subr.mxu0 0.0
      %2530 = vmatpush1.msra.mxu0 0.0
      %2531 = vmatprep.subr.mxu0 0.0
      %2532 = vmatpush1.msra.mxu0 0.0
      %2533 = vmatprep.subr.mxu0 0.0
      %2534 = vmatpush1.msra.mxu0 0.0
      %2535 = vmatprep.subr.mxu0 0.0
      %2536 = vmatpush1.msra.mxu0 0.0
      %2537 = vmatprep.subr.mxu0 0.0
      %2538 = vmatpush1.msra.mxu0 0.0
      %2539 = vmatprep.subr.mxu0 0.0
      %2540 = vmatpush1.msra.mxu0 0.0
      %2541 = vmatprep.subr.mxu0 0.0
      %2542 = vmatpush1.msra.mxu0 0.0
      %2543 = vmatprep.subr.mxu0 0.0
      %2544 = vmatpush1.msra.mxu0 0.0
      %2545 = vmatprep.subr.mxu0 0.0
      %2546 = vmatpush1.msra.mxu0 0.0
      %2547 = vmatprep.subr.mxu0 0.0
      %2548 = vmatpush1.msra.mxu0 0.0
      %2549 = vmatprep.subr.mxu0 0.0
      %2550 = vmatpush1.msra.mxu0 0.0
      %2551 = vmatprep.subr.mxu0 0.0
      %2552 = vmatpush1.msra.mxu0 0.0
      %2553 = vmatprep.subr.mxu0 0.0
      %2554 = vmatpush1.msra.mxu0 0.0
      %2555 = vmatprep.subr.mxu0 0.0
      %2556 = vmatpush1.msra.mxu0 0.0
      %2557 = vmatprep.subr.mxu0 0.0
      %2558 = vmatpush1.msra.mxu0 0.0
      %2559 = vmatprep.mubr.f32.mxu0 0.0
      %2560 = vmatmul.mubr.f32.gmra.mrb[0].mxu0 %v2280
      %v2561 = vpop.f32.mrb[0].mxu0
      %v2562 = vadd.f32 0.0, %v2561
      %v2563 = vpop.f32.mrb[0].mxu0
      %v2564 = vadd.f32 0.0, %v2563
      %2565 = vdwg.mxu0
      %v2566 = vadd.f32 %v2036, %v2349
      %v2567 = vadd.f32 %v2038, %v2351
      %v2568 = vadd.f32 %v2107, %v2420
      %v2569 = vadd.f32 %v2109, %v2422
      %v2570 = vadd.f32 %v2178, %v2491
      %v2571 = vadd.f32 %v2180, %v2493
      %v2572 = vadd.f32 %v2249, %v2562
      %v2573 = vadd.f32 %v2251, %v2564
      %2574 = vrot.lane.b32.xlu0 %v1644, 95
      %v2575 = vpop.permute.xlu0 %2574
      %2576 = vrot.lane.b32.xlu0 %v1645, 95
      %v2577 = vpop.permute.xlu0 %2576
      %2578 = vrot.lane.b32.xlu0 %v1646, 95
      %v2579 = vpop.permute.xlu0 %2578
      %2580 = vrot.lane.b32.xlu0 %v1647, 95
      %v2581 = vpop.permute.xlu0 %2580
      %2582 = vrot.lane.b32.xlu0 %v1648, 95
      %v2583 = vpop.permute.xlu0 %2582
      %2584 = vrot.lane.b32.xlu0 %v1649, 95
      %v2585 = vpop.permute.xlu0 %2584
      %2586 = vrot.lane.b32.xlu0 %v1650, 95
      %v2587 = vpop.permute.xlu0 %2586
      %2588 = vrot.lane.b32.xlu0 %v1651, 95
      %v2589 = vpop.permute.xlu0 %2588
      %v2590 = vsel %vm1324, %v2587, %v2589
      %v2591 = vsel %vm1324, %v2585, %v2587
      %v2592 = vsel %vm1324, %v2583, %v2585
      %v2593 = vsel %vm1324, %v2581, %v2583
      %v2594 = vsel %vm1324, %v2579, %v2581
      %v2595 = vsel %vm1324, %v2577, %v2579
      %v2596 = vsel %vm1324, %v2575, %v2577
      %v2597 = vsel %vm1324, %v2589, %v2575
      %s2598 = scalar_lea.vmem %s3, 24
      %v2599 = vld [vmem:[%s2598] sm:$0xff]
      %v2601 = vsel %vm411, %v2599, 0
      %2603 = vmatprep.subr.mxu0 %v2595
      %2604 = vmatpush1.msra.mxu0 %v2596
      %2605 = vmatprep.subr.mxu0 0.0
      %2606 = vmatpush1.msra.mxu0 0.0
      %2607 = vmatprep.subr.mxu0 0.0
      %2608 = vmatpush1.msra.mxu0 0.0
      %2609 = vmatprep.subr.mxu0 0.0
      %2610 = vmatpush1.msra.mxu0 0.0
      %2611 = vmatprep.subr.mxu0 0.0
      %2612 = vmatpush1.msra.mxu0 0.0
      %2613 = vmatprep.subr.mxu0 0.0
      %2614 = vmatpush1.msra.mxu0 0.0
      %2615 = vmatprep.subr.mxu0 0.0
      %2616 = vmatpush1.msra.mxu0 0.0
      %2617 = vmatprep.subr.mxu0 0.0
      %2618 = vmatpush1.msra.mxu0 0.0
      %2619 = vmatprep.subr.mxu0 0.0
      %2620 = vmatpush1.msra.mxu0 0.0
      %2621 = vmatprep.subr.mxu0 0.0
      %2622 = vmatpush1.msra.mxu0 0.0
      %2623 = vmatprep.subr.mxu0 0.0
      %2624 = vmatpush1.msra.mxu0 0.0
      %2625 = vmatprep.subr.mxu0 0.0
      %2626 = vmatpush1.msra.mxu0 0.0
      %2627 = vmatprep.subr.mxu0 0.0
      %2628 = vmatpush1.msra.mxu0 0.0
      %2629 = vmatprep.subr.mxu0 0.0
      %2630 = vmatpush1.msra.mxu0 0.0
      %2631 = vmatprep.subr.mxu0 0.0
      %2632 = vmatpush1.msra.mxu0 0.0
      %2633 = vmatprep.subr.mxu0 0.0
      %2634 = vmatpush1.msra.mxu0 0.0
      %2635 = vmatprep.subr.mxu0 0.0
      %2636 = vmatpush1.msra.mxu0 0.0
      %2637 = vmatprep.subr.mxu0 0.0
      %2638 = vmatpush1.msra.mxu0 0.0
      %2639 = vmatprep.subr.mxu0 0.0
      %2640 = vmatpush1.msra.mxu0 0.0
      %2641 = vmatprep.subr.mxu0 0.0
      %2642 = vmatpush1.msra.mxu0 0.0
      %2643 = vmatprep.subr.mxu0 0.0
      %2644 = vmatpush1.msra.mxu0 0.0
      %2645 = vmatprep.subr.mxu0 0.0
      %2646 = vmatpush1.msra.mxu0 0.0
      %2647 = vmatprep.subr.mxu0 0.0
      %2648 = vmatpush1.msra.mxu0 0.0
      %2649 = vmatprep.subr.mxu0 0.0
      %2650 = vmatpush1.msra.mxu0 0.0
      %2651 = vmatprep.subr.mxu0 0.0
      %2652 = vmatpush1.msra.mxu0 0.0
      %2653 = vmatprep.subr.mxu0 0.0
      %2654 = vmatpush1.msra.mxu0 0.0
      %2655 = vmatprep.subr.mxu0 0.0
      %2656 = vmatpush1.msra.mxu0 0.0
      %2657 = vmatprep.subr.mxu0 0.0
      %2658 = vmatpush1.msra.mxu0 0.0
      %2659 = vmatprep.subr.mxu0 0.0
      %2660 = vmatpush1.msra.mxu0 0.0
      %2661 = vmatprep.subr.mxu0 0.0
      %2662 = vmatpush1.msra.mxu0 0.0
      %2663 = vmatprep.subr.mxu0 0.0
      %2664 = vmatpush1.msra.mxu0 0.0
      %2665 = vmatprep.subr.mxu0 0.0
      %2666 = vmatpush1.msra.mxu0 0.0
      %2667 = vmatprep.mubr.f32.mxu0 0.0
      %2668 = vmatmul.mubr.f32.gmra.mrb[0].mxu0 %v2601
      %v2669 = vpop.f32.mrb[0].mxu0
      %v2670 = vadd.f32 0.0, %v2669
      %v2671 = vpop.f32.mrb[0].mxu0
      %v2672 = vadd.f32 0.0, %v2671
      %2673 = vdwg.mxu0
      %2674 = vmatprep.subr.mxu0 %v2593
      %2675 = vmatpush1.msra.mxu0 %v2594
      %2676 = vmatprep.subr.mxu0 0.0
      %2677 = vmatpush1.msra.mxu0 0.0
      %2678 = vmatprep.subr.mxu0 0.0
      %2679 = vmatpush1.msra.mxu0 0.0
      %2680 = vmatprep.subr.mxu0 0.0
      %2681 = vmatpush1.msra.mxu0 0.0
      %2682 = vmatprep.subr.mxu0 0.0
      %2683 = vmatpush1.msra.mxu0 0.0
      %2684 = vmatprep.subr.mxu0 0.0
      %2685 = vmatpush1.msra.mxu0 0.0
      %2686 = vmatprep.subr.mxu0 0.0
      %2687 = vmatpush1.msra.mxu0 0.0
      %2688 = vmatprep.subr.mxu0 0.0
      %2689 = vmatpush1.msra.mxu0 0.0
      %2690 = vmatprep.subr.mxu0 0.0
      %2691 = vmatpush1.msra.mxu0 0.0
      %2692 = vmatprep.subr.mxu0 0.0
      %2693 = vmatpush1.msra.mxu0 0.0
      %2694 = vmatprep.subr.mxu0 0.0
      %2695 = vmatpush1.msra.mxu0 0.0
      %2696 = vmatprep.subr.mxu0 0.0
      %2697 = vmatpush1.msra.mxu0 0.0
      %2698 = vmatprep.subr.mxu0 0.0
      %2699 = vmatpush1.msra.mxu0 0.0
      %2700 = vmatprep.subr.mxu0 0.0
      %2701 = vmatpush1.msra.mxu0 0.0
      %2702 = vmatprep.subr.mxu0 0.0
      %2703 = vmatpush1.msra.mxu0 0.0
      %2704 = vmatprep.subr.mxu0 0.0
      %2705 = vmatpush1.msra.mxu0 0.0
      %2706 = vmatprep.subr.mxu0 0.0
      %2707 = vmatpush1.msra.mxu0 0.0
      %2708 = vmatprep.subr.mxu0 0.0
      %2709 = vmatpush1.msra.mxu0 0.0
      %2710 = vmatprep.subr.mxu0 0.0
      %2711 = vmatpush1.msra.mxu0 0.0
      %2712 = vmatprep.subr.mxu0 0.0
      %2713 = vmatpush1.msra.mxu0 0.0
      %2714 = vmatprep.subr.mxu0 0.0
      %2715 = vmatpush1.msra.mxu0 0.0
      %2716 = vmatprep.subr.mxu0 0.0
      %2717 = vmatpush1.msra.mxu0 0.0
      %2718 = vmatprep.subr.mxu0 0.0
      %2719 = vmatpush1.msra.mxu0 0.0
      %2720 = vmatprep.subr.mxu0 0.0
      %2721 = vmatpush1.msra.mxu0 0.0
      %2722 = vmatprep.subr.mxu0 0.0
      %2723 = vmatpush1.msra.mxu0 0.0
      %2724 = vmatprep.subr.mxu0 0.0
      %2725 = vmatpush1.msra.mxu0 0.0
      %2726 = vmatprep.subr.mxu0 0.0
      %2727 = vmatpush1.msra.mxu0 0.0
      %2728 = vmatprep.subr.mxu0 0.0
      %2729 = vmatpush1.msra.mxu0 0.0
      %2730 = vmatprep.subr.mxu0 0.0
      %2731 = vmatpush1.msra.mxu0 0.0
      %2732 = vmatprep.subr.mxu0 0.0
      %2733 = vmatpush1.msra.mxu0 0.0
      %2734 = vmatprep.subr.mxu0 0.0
      %2735 = vmatpush1.msra.mxu0 0.0
      %2736 = vmatprep.subr.mxu0 0.0
      %2737 = vmatpush1.msra.mxu0 0.0
      %2738 = vmatprep.mubr.f32.mxu0 0.0
      %2739 = vmatmul.mubr.f32.gmra.mrb[0].mxu0 %v2601
      %v2740 = vpop.f32.mrb[0].mxu0
      %v2741 = vadd.f32 0.0, %v2740
      %v2742 = vpop.f32.mrb[0].mxu0
      %v2743 = vadd.f32 0.0, %v2742
      %2744 = vdwg.mxu0
      %2745 = vmatprep.subr.mxu0 %v2591
      %2746 = vmatpush1.msra.mxu0 %v2592
      %2747 = vmatprep.subr.mxu0 0.0
      %2748 = vmatpush1.msra.mxu0 0.0
      %2749 = vmatprep.subr.mxu0 0.0
      %2750 = vmatpush1.msra.mxu0 0.0
      %2751 = vmatprep.subr.mxu0 0.0
      %2752 = vmatpush1.msra.mxu0 0.0
      %2753 = vmatprep.subr.mxu0 0.0
      %2754 = vmatpush1.msra.mxu0 0.0
      %2755 = vmatprep.subr.mxu0 0.0
      %2756 = vmatpush1.msra.mxu0 0.0
      %2757 = vmatprep.subr.mxu0 0.0
      %2758 = vmatpush1.msra.mxu0 0.0
      %2759 = vmatprep.subr.mxu0 0.0
      %2760 = vmatpush1.msra.mxu0 0.0
      %2761 = vmatprep.subr.mxu0 0.0
      %2762 = vmatpush1.msra.mxu0 0.0
      %2763 = vmatprep.subr.mxu0 0.0
      %2764 = vmatpush1.msra.mxu0 0.0
      %2765 = vmatprep.subr.mxu0 0.0
      %2766 = vmatpush1.msra.mxu0 0.0
      %2767 = vmatprep.subr.mxu0 0.0
      %2768 = vmatpush1.msra.mxu0 0.0
      %2769 = vmatprep.subr.mxu0 0.0
      %2770 = vmatpush1.msra.mxu0 0.0
      %2771 = vmatprep.subr.mxu0 0.0
      %2772 = vmatpush1.msra.mxu0 0.0
      %2773 = vmatprep.subr.mxu0 0.0
      %2774 = vmatpush1.msra.mxu0 0.0
      %2775 = vmatprep.subr.mxu0 0.0
      %2776 = vmatpush1.msra.mxu0 0.0
      %2777 = vmatprep.subr.mxu0 0.0
      %2778 = vmatpush1.msra.mxu0 0.0
      %2779 = vmatprep.subr.mxu0 0.0
      %2780 = vmatpush1.msra.mxu0 0.0
      %2781 = vmatprep.subr.mxu0 0.0
      %2782 = vmatpush1.msra.mxu0 0.0
      %2783 = vmatprep.subr.mxu0 0.0
      %2784 = vmatpush1.msra.mxu0 0.0
      %2785 = vmatprep.subr.mxu0 0.0
      %2786 = vmatpush1.msra.mxu0 0.0
      %2787 = vmatprep.subr.mxu0 0.0
      %2788 = vmatpush1.msra.mxu0 0.0
      %2789 = vmatprep.subr.mxu0 0.0
      %2790 = vmatpush1.msra.mxu0 0.0
      %2791 = vmatprep.subr.mxu0 0.0
      %2792 = vmatpush1.msra.mxu0 0.0
      %2793 = vmatprep.subr.mxu0 0.0
      %2794 = vmatpush1.msra.mxu0 0.0
      %2795 = vmatprep.subr.mxu0 0.0
      %2796 = vmatpush1.msra.mxu0 0.0
      %2797 = vmatprep.subr.mxu0 0.0
      %2798 = vmatpush1.msra.mxu0 0.0
      %2799 = vmatprep.subr.mxu0 0.0
      %2800 = vmatpush1.msra.mxu0 0.0
      %2801 = vmatprep.subr.mxu0 0.0
      %2802 = vmatpush1.msra.mxu0 0.0
      %2803 = vmatprep.subr.mxu0 0.0
      %2804 = vmatpush1.msra.mxu0 0.0
      %2805 = vmatprep.subr.mxu0 0.0
      %2806 = vmatpush1.msra.mxu0 0.0
      %2807 = vmatprep.subr.mxu0 0.0
      %2808 = vmatpush1.msra.mxu0 0.0
      %2809 = vmatprep.mubr.f32.mxu0 0.0
      %2810 = vmatmul.mubr.f32.gmra.mrb[0].mxu0 %v2601
      %v2811 = vpop.f32.mrb[0].mxu0
      %v2812 = vadd.f32 0.0, %v2811
      %v2813 = vpop.f32.mrb[0].mxu0
      %v2814 = vadd.f32 0.0, %v2813
      %2815 = vdwg.mxu0
      %2816 = vmatprep.subr.mxu0 %v2597
      %2817 = vmatpush1.msra.mxu0 %v2590
      %2818 = vmatprep.subr.mxu0 0.0
      %2819 = vmatpush1.msra.mxu0 0.0
      %2820 = vmatprep.subr.mxu0 0.0
      %2821 = vmatpush1.msra.mxu0 0.0
      %2822 = vmatprep.subr.mxu0 0.0
      %2823 = vmatpush1.msra.mxu0 0.0
      %2824 = vmatprep.subr.mxu0 0.0
      %2825 = vmatpush1.msra.mxu0 0.0
      %2826 = vmatprep.subr.mxu0 0.0
      %2827 = vmatpush1.msra.mxu0 0.0
      %2828 = vmatprep.subr.mxu0 0.0
      %2829 = vmatpush1.msra.mxu0 0.0
      %2830 = vmatprep.subr.mxu0 0.0
      %2831 = vmatpush1.msra.mxu0 0.0
      %2832 = vmatprep.subr.mxu0 0.0
      %2833 = vmatpush1.msra.mxu0 0.0
      %2834 = vmatprep.subr.mxu0 0.0
      %2835 = vmatpush1.msra.mxu0 0.0
      %2836 = vmatprep.subr.mxu0 0.0
      %2837 = vmatpush1.msra.mxu0 0.0
      %2838 = vmatprep.subr.mxu0 0.0
      %2839 = vmatpush1.msra.mxu0 0.0
      %2840 = vmatprep.subr.mxu0 0.0
      %2841 = vmatpush1.msra.mxu0 0.0
      %2842 = vmatprep.subr.mxu0 0.0
      %2843 = vmatpush1.msra.mxu0 0.0
      %2844 = vmatprep.subr.mxu0 0.0
      %2845 = vmatpush1.msra.mxu0 0.0
      %2846 = vmatprep.subr.mxu0 0.0
      %2847 = vmatpush1.msra.mxu0 0.0
      %2848 = vmatprep.subr.mxu0 0.0
      %2849 = vmatpush1.msra.mxu0 0.0
      %2850 = vmatprep.subr.mxu0 0.0
      %2851 = vmatpush1.msra.mxu0 0.0
      %2852 = vmatprep.subr.mxu0 0.0
      %2853 = vmatpush1.msra.mxu0 0.0
      %2854 = vmatprep.subr.mxu0 0.0
      %2855 = vmatpush1.msra.mxu0 0.0
      %2856 = vmatprep.subr.mxu0 0.0
      %2857 = vmatpush1.msra.mxu0 0.0
      %2858 = vmatprep.subr.mxu0 0.0
      %2859 = vmatpush1.msra.mxu0 0.0
      %2860 = vmatprep.subr.mxu0 0.0
      %2861 = vmatpush1.msra.mxu0 0.0
      %2862 = vmatprep.subr.mxu0 0.0
      %2863 = vmatpush1.msra.mxu0 0.0
      %2864 = vmatprep.subr.mxu0 0.0
      %2865 = vmatpush1.msra.mxu0 0.0
      %2866 = vmatprep.subr.mxu0 0.0
      %2867 = vmatpush1.msra.mxu0 0.0
      %2868 = vmatprep.subr.mxu0 0.0
      %2869 = vmatpush1.msra.mxu0 0.0
      %2870 = vmatprep.subr.mxu0 0.0
      %2871 = vmatpush1.msra.mxu0 0.0
      %2872 = vmatprep.subr.mxu0 0.0
      %2873 = vmatpush1.msra.mxu0 0.0
      %2874 = vmatprep.subr.mxu0 0.0
      %2875 = vmatpush1.msra.mxu0 0.0
      %2876 = vmatprep.subr.mxu0 0.0
      %2877 = vmatpush1.msra.mxu0 0.0
      %2878 = vmatprep.subr.mxu0 0.0
      %2879 = vmatpush1.msra.mxu0 0.0
      %2880 = vmatprep.mubr.f32.mxu0 0.0
      %2881 = vmatmul.mubr.f32.gmra.mrb[0].mxu0 %v2601
      %v2882 = vpop.f32.mrb[0].mxu0
      %v2883 = vadd.f32 0.0, %v2882
      %v2884 = vpop.f32.mrb[0].mxu0
      %v2885 = vadd.f32 0.0, %v2884
      %2886 = vdwg.mxu0
      %v2887 = vadd.f32 %v2566, %v2670
      %v2888 = vadd.f32 %v2567, %v2672
      %v2889 = vadd.f32 %v2568, %v2741
      %v2890 = vadd.f32 %v2569, %v2743
      %v2891 = vadd.f32 %v2570, %v2812
      %v2892 = vadd.f32 %v2571, %v2814
      %v2893 = vadd.f32 %v2572, %v2883
      %v2894 = vadd.f32 %v2573, %v2885
      %v2895 = vld [vmem:[%s4] sm:$0xff]
      %2897 = vset.pattern.permute.xlu0 0
      %2898 = vperm.xlu0 %2897, %v2895
      %v2899 = vpop.permute.xlu0 %2898
      %v2901 = vadd.f32 %v2887, %v2899
      %v2902 = vadd.f32 %v2888, %v2899
      %v2903 = vadd.f32 %v2889, %v2899
      %v2904 = vadd.f32 %v2890, %v2899
      %v2905 = vadd.f32 %v2891, %v2899
      %v2906 = vadd.f32 %v2892, %v2899
      %v2907 = vadd.f32 %v2893, %v2899
      %v2908 = vadd.f32 %v2894, %v2899
      %v2909 = vmax.f32 %v2901, 0.0
      %v2910 = vmax.f32 %v2902, 0.0
      %v2911 = vmax.f32 %v2903, 0.0
      %v2912 = vmax.f32 %v2904, 0.0
      %v2913 = vmax.f32 %v2905, 0.0
      %v2914 = vmax.f32 %v2906, 0.0
      %v2915 = vmax.f32 %v2907, 0.0
      %v2916 = vmax.f32 %v2908, 0.0
      %2917 = vst [vmem:[%s367] sm:$0xff] %v2909
      %2918 = vst [vmem:[%s367 + $0x8] sm:$0xff] %v2910
      %2919 = vst [vmem:[%s367 + $0x10] sm:$0xff] %v2911
      %2920 = vst [vmem:[%s367 + $0x18] sm:$0xff] %v2912
      %2921 = vst [vmem:[%s367 + $0x20] sm:$0xff] %v2913
      %2922 = vst [vmem:[%s367 + $0x28] sm:$0xff] %v2914
      %2923 = vst [vmem:[%s367 + $0x30] sm:$0xff] %v2915
      %2924 = vst [vmem:[%s367 + $0x38] sm:$0xff] %v2916
      %2925 = vrot.lane.b32.xlu0 %v2909, 127
      %v2926 = vpop.permute.xlu0 %2925
      %2927 = vrot.lane.b32.xlu0 %v2910, 127
      %v2928 = vpop.permute.xlu0 %2927
      %2929 = vrot.lane.b32.xlu0 %v2911, 127
      %v2930 = vpop.permute.xlu0 %2929
      %2931 = vrot.lane.b32.xlu0 %v2912, 127
      %v2932 = vpop.permute.xlu0 %2931
      %2933 = vrot.lane.b32.xlu0 %v2913, 127
      %v2934 = vpop.permute.xlu0 %2933
      %2935 = vrot.lane.b32.xlu0 %v2914, 127
      %v2936 = vpop.permute.xlu0 %2935
      %2937 = vrot.lane.b32.xlu0 %v2915, 127
      %v2938 = vpop.permute.xlu0 %2937
      %2939 = vrot.lane.b32.xlu0 %v2916, 127
      %v2940 = vpop.permute.xlu0 %2939
      %v2941 = vsel %vm400, %v2938, %v2940
      %v2942 = vsel %vm400, %v2936, %v2938
      %v2943 = vsel %vm400, %v2934, %v2936
      %v2944 = vsel %vm400, %v2932, %v2934
      %v2945 = vsel %vm400, %v2930, %v2932
      %v2946 = vsel %vm400, %v2928, %v2930
      %v2947 = vsel %vm400, %v2926, %v2928
      %v2948 = vsel %vm400, %v2940, %v2926
      %v2949 = vmax.f32 %v2909, %v2947
      %v2950 = vmax.f32 %v2910, %v2946
      %v2951 = vmax.f32 %v2911, %v2945
      %v2952 = vmax.f32 %v2912, %v2944
      %v2953 = vmax.f32 %v2913, %v2943
      %v2954 = vmax.f32 %v2914, %v2942
      %v2955 = vmax.f32 %v2915, %v2941
      %v2956 = vmax.f32 %v2916, %v2948
      %2957 = vrot.lane.b32.xlu0 %v2949, 96
      %v2958 = vpop.permute.xlu0 %2957
      %2959 = vrot.lane.b32.xlu0 %v2950, 96
      %v2960 = vpop.permute.xlu0 %2959
      %2961 = vrot.lane.b32.xlu0 %v2951, 96
      %v2962 = vpop.permute.xlu0 %2961
      %2963 = vrot.lane.b32.xlu0 %v2952, 96
      %v2964 = vpop.permute.xlu0 %2963
      %2965 = vrot.lane.b32.xlu0 %v2953, 96
      %v2966 = vpop.permute.xlu0 %2965
      %2967 = vrot.lane.b32.xlu0 %v2954, 96
      %v2968 = vpop.permute.xlu0 %2967
      %2969 = vrot.lane.b32.xlu0 %v2955, 96
      %v2970 = vpop.permute.xlu0 %2969
      %2971 = vrot.lane.b32.xlu0 %v2956, 96
      %v2972 = vpop.permute.xlu0 %2971
      %v2973 = vsel %vm1002, %v2970, %v2972
      %v2974 = vsel %vm1002, %v2968, %v2970
      %v2975 = vsel %vm1002, %v2966, %v2968
      %v2976 = vsel %vm1002, %v2964, %v2966
      %v2977 = vsel %vm1002, %v2962, %v2964
      %v2978 = vsel %vm1002, %v2960, %v2962
      %v2979 = vsel %vm1002, %v2958, %v2960
      %v2980 = vsel %vm1002, %v2972, %v2958
      %v2981 = vmax.f32 %v2949, %v2979
      %v2982 = vmax.f32 %v2950, %v2978
      %v2983 = vmax.f32 %v2951, %v2977
      %v2984 = vmax.f32 %v2952, %v2976
      %v2985 = vmax.f32 %v2953, %v2975
      %v2986 = vmax.f32 %v2954, %v2974
      %v2987 = vmax.f32 %v2955, %v2973
      %v2988 = vmax.f32 %v2956, %v2980
      %v2989 = vld [vmem:[%s5] sm:$0xff]
      %v2990 = vld [vmem:[%s5 + $0x8] sm:$0xff]
      %2991 = vrot.lane.b32.xlu0 %v2981, 126
      %v2992 = vpop.permute.xlu0 %2991
      %2993 = vrot.lane.b32.xlu0 %v2982, 126
      %v2994 = vpop.permute.xlu0 %2993
      %2995 = vrot.lane.b32.xlu0 %v2983, 126
      %v2996 = vpop.permute.xlu0 %2995
      %2997 = vrot.lane.b32.xlu0 %v2984, 126
      %v2998 = vpop.permute.xlu0 %2997
      %2999 = vrot.lane.b32.xlu0 %v2985, 126
      %v3000 = vpop.permute.xlu0 %2999
      %3001 = vrot.lane.b32.xlu0 %v2986, 126
      %v3002 = vpop.permute.xlu0 %3001
      %3003 = vrot.lane.b32.xlu0 %v2987, 126
      %v3004 = vpop.permute.xlu0 %3003
      %3005 = vrot.lane.b32.xlu0 %v2988, 126
      %v3006 = vpop.permute.xlu0 %3005
      %vm3007 = vcmp.lt.s32.totalorder %v399, 126
      %v3008 = vsel %vm3007, %v3004, %v3006
      %v3009 = vsel %vm3007, %v3002, %v3004
      %v3010 = vsel %vm3007, %v3000, %v3002
      %v3011 = vsel %vm3007, %v2998, %v3000
      %v3012 = vsel %vm3007, %v2996, %v2998
      %v3013 = vsel %vm3007, %v2994, %v2996
      %v3014 = vsel %vm3007, %v2992, %v2994
      %v3015 = vsel %vm3007, %v3006, %v2992
      %s3016 = scalar_lea.vmem %s5, 16
      %v3017 = vld [vmem:[%s3016] sm:$0xff]
      %v3018 = vld [vmem:[%s3016 + $0x8] sm:$0xff]
      %v3020 = vsel %vm411, %v3017, 0
      %v3023 = vsel %vm411, %v3018, 0
      %3025 = vmatprep.subr.mxu0 %v3013
      %3026 = vmatpush1.msra.mxu0 %v3014
      %3027 = vmatprep.subr.mxu0 0.0
      %3028 = vmatpush1.msra.mxu0 0.0
      %3029 = vmatprep.subr.mxu0 0.0
      %3030 = vmatpush1.msra.mxu0 0.0
      %3031 = vmatprep.subr.mxu0 0.0
      %3032 = vmatpush1.msra.mxu0 0.0
      %3033 = vmatprep.subr.mxu0 0.0
      %3034 = vmatpush1.msra.mxu0 0.0
      %3035 = vmatprep.subr.mxu0 0.0
      %3036 = vmatpush1.msra.mxu0 0.0
      %3037 = vmatprep.subr.mxu0 0.0
      %3038 = vmatpush1.msra.mxu0 0.0
      %3039 = vmatprep.subr.mxu0 0.0
      %3040 = vmatpush1.msra.mxu0 0.0
      %3041 = vmatprep.subr.mxu0 0.0
      %3042 = vmatpush1.msra.mxu0 0.0
      %3043 = vmatprep.subr.mxu0 0.0
      %3044 = vmatpush1.msra.mxu0 0.0
      %3045 = vmatprep.subr.mxu0 0.0
      %3046 = vmatpush1.msra.mxu0 0.0
      %3047 = vmatprep.subr.mxu0 0.0
      %3048 = vmatpush1.msra.mxu0 0.0
      %3049 = vmatprep.subr.mxu0 0.0
      %3050 = vmatpush1.msra.mxu0 0.0
      %3051 = vmatprep.subr.mxu0 0.0
      %3052 = vmatpush1.msra.mxu0 0.0
      %3053 = vmatprep.subr.mxu0 0.0
      %3054 = vmatpush1.msra.mxu0 0.0
      %3055 = vmatprep.subr.mxu0 0.0
      %3056 = vmatpush1.msra.mxu0 0.0
      %3057 = vmatprep.subr.mxu0 0.0
      %3058 = vmatpush1.msra.mxu0 0.0
      %3059 = vmatprep.subr.mxu0 0.0
      %3060 = vmatpush1.msra.mxu0 0.0
      %3061 = vmatprep.subr.mxu0 0.0
      %3062 = vmatpush1.msra.mxu0 0.0
      %3063 = vmatprep.subr.mxu0 0.0
      %3064 = vmatpush1.msra.mxu0 0.0
      %3065 = vmatprep.subr.mxu0 0.0
      %3066 = vmatpush1.msra.mxu0 0.0
      %3067 = vmatprep.subr.mxu0 0.0
      %3068 = vmatpush1.msra.mxu0 0.0
      %3069 = vmatprep.subr.mxu0 0.0
      %3070 = vmatpush1.msra.mxu0 0.0
      %3071 = vmatprep.subr.mxu0 0.0
      %3072 = vmatpush1.msra.mxu0 0.0
      %3073 = vmatprep.subr.mxu0 0.0
      %3074 = vmatpush1.msra.mxu0 0.0
      %3075 = vmatprep.subr.mxu0 0.0
      %3076 = vmatpush1.msra.mxu0 0.0
      %3077 = vmatprep.subr.mxu0 0.0
      %3078 = vmatpush1.msra.mxu0 0.0
      %3079 = vmatprep.subr.mxu0 0.0
      %3080 = vmatpush1.msra.mxu0 0.0
      %3081 = vmatprep.subr.mxu0 0.0
      %3082 = vmatpush1.msra.mxu0 0.0
      %3083 = vmatprep.subr.mxu0 0.0
      %3084 = vmatpush1.msra.mxu0 0.0
      %3085 = vmatprep.subr.mxu0 0.0
      %3086 = vmatpush1.msra.mxu0 0.0
      %3087 = vmatprep.subr.mxu0 0.0
      %3088 = vmatpush1.msra.mxu0 0.0
      %3089 = vmatprep.mubr.f32.mxu0 0.0
      %3090 = vmatmul.mubr.f32.gmra.mrb[0].mxu0 %v3020
      %v3091 = vpop.f32.mrb[0].mxu0
      %v3092 = vadd.f32 0.0, %v3091
      %v3093 = vpop.f32.mrb[0].mxu0
      %v3094 = vadd.f32 0.0, %v3093
      %3095 = vmatprep.mubr.f32.mxu0 0.0
      %3096 = vmatmul.mubr.f32.gmra.mrb[0].mxu0 %v3023
      %v3097 = vpop.f32.mrb[0].mxu0
      %v3098 = vadd.f32 0.0, %v3097
      %v3099 = vpop.f32.mrb[0].mxu0
      %v3100 = vadd.f32 0.0, %v3099
      %3101 = vdwg.mxu0
      %3102 = vmatprep.subr.mxu0 %v3011
      %3103 = vmatpush1.msra.mxu0 %v3012
      %3104 = vmatprep.subr.mxu0 0.0
      %3105 = vmatpush1.msra.mxu0 0.0
      %3106 = vmatprep.subr.mxu0 0.0
      %3107 = vmatpush1.msra.mxu0 0.0
      %3108 = vmatprep.subr.mxu0 0.0
      %3109 = vmatpush1.msra.mxu0 0.0
      %3110 = vmatprep.subr.mxu0 0.0
      %3111 = vmatpush1.msra.mxu0 0.0
      %3112 = vmatprep.subr.mxu0 0.0
      %3113 = vmatpush1.msra.mxu0 0.0
      %3114 = vmatprep.subr.mxu0 0.0
      %3115 = vmatpush1.msra.mxu0 0.0
      %3116 = vmatprep.subr.mxu0 0.0
      %3117 = vmatpush1.msra.mxu0 0.0
      %3118 = vmatprep.subr.mxu0 0.0
      %3119 = vmatpush1.msra.mxu0 0.0
      %3120 = vmatprep.subr.mxu0 0.0
      %3121 = vmatpush1.msra.mxu0 0.0
      %3122 = vmatprep.subr.mxu0 0.0
      %3123 = vmatpush1.msra.mxu0 0.0
      %3124 = vmatprep.subr.mxu0 0.0
      %3125 = vmatpush1.msra.mxu0 0.0
      %3126 = vmatprep.subr.mxu0 0.0
      %3127 = vmatpush1.msra.mxu0 0.0
      %3128 = vmatprep.subr.mxu0 0.0
      %3129 = vmatpush1.msra.mxu0 0.0
      %3130 = vmatprep.subr.mxu0 0.0
      %3131 = vmatpush1.msra.mxu0 0.0
      %3132 = vmatprep.subr.mxu0 0.0
      %3133 = vmatpush1.msra.mxu0 0.0
      %3134 = vmatprep.subr.mxu0 0.0
      %3135 = vmatpush1.msra.mxu0 0.0
      %3136 = vmatprep.subr.mxu0 0.0
      %3137 = vmatpush1.msra.mxu0 0.0
      %3138 = vmatprep.subr.mxu0 0.0
      %3139 = vmatpush1.msra.mxu0 0.0
      %3140 = vmatprep.subr.mxu0 0.0
      %3141 = vmatpush1.msra.mxu0 0.0
      %3142 = vmatprep.subr.mxu0 0.0
      %3143 = vmatpush1.msra.mxu0 0.0
      %3144 = vmatprep.subr.mxu0 0.0
      %3145 = vmatpush1.msra.mxu0 0.0
      %3146 = vmatprep.subr.mxu0 0.0
      %3147 = vmatpush1.msra.mxu0 0.0
      %3148 = vmatprep.subr.mxu0 0.0
      %3149 = vmatpush1.msra.mxu0 0.0
      %3150 = vmatprep.subr.mxu0 0.0
      %3151 = vmatpush1.msra.mxu0 0.0
      %3152 = vmatprep.subr.mxu0 0.0
      %3153 = vmatpush1.msra.mxu0 0.0
      %3154 = vmatprep.subr.mxu0 0.0
      %3155 = vmatpush1.msra.mxu0 0.0
      %3156 = vmatprep.subr.mxu0 0.0
      %3157 = vmatpush1.msra.mxu0 0.0
      %3158 = vmatprep.subr.mxu0 0.0
      %3159 = vmatpush1.msra.mxu0 0.0
      %3160 = vmatprep.subr.mxu0 0.0
      %3161 = vmatpush1.msra.mxu0 0.0
      %3162 = vmatprep.subr.mxu0 0.0
      %3163 = vmatpush1.msra.mxu0 0.0
      %3164 = vmatprep.subr.mxu0 0.0
      %3165 = vmatpush1.msra.mxu0 0.0
      %3166 = vmatprep.mubr.f32.mxu0 0.0
      %3167 = vmatmul.mubr.f32.gmra.mrb[0].mxu0 %v3020
      %v3168 = vpop.f32.mrb[0].mxu0
      %v3169 = vadd.f32 0.0, %v3168
      %v3170 = vpop.f32.mrb[0].mxu0
      %v3171 = vadd.f32 0.0, %v3170
      %3172 = vmatprep.mubr.f32.mxu0 0.0
      %3173 = vmatmul.mubr.f32.gmra.mrb[0].mxu0 %v3023
      %v3174 = vpop.f32.mrb[0].mxu0
      %v3175 = vadd.f32 0.0, %v3174
      %v3176 = vpop.f32.mrb[0].mxu0
      %v3177 = vadd.f32 0.0, %v3176
      %3178 = vdwg.mxu0
      %3179 = vmatprep.subr.mxu0 %v3009
      %3180 = vmatpush1.msra.mxu0 %v3010
      %3181 = vmatprep.subr.mxu0 0.0
      %3182 = vmatpush1.msra.mxu0 0.0
      %3183 = vmatprep.subr.mxu0 0.0
      %3184 = vmatpush1.msra.mxu0 0.0
      %3185 = vmatprep.subr.mxu0 0.0
      %3186 = vmatpush1.msra.mxu0 0.0
      %3187 = vmatprep.subr.mxu0 0.0
      %3188 = vmatpush1.msra.mxu0 0.0
      %3189 = vmatprep.subr.mxu0 0.0
      %3190 = vmatpush1.msra.mxu0 0.0
      %3191 = vmatprep.subr.mxu0 0.0
      %3192 = vmatpush1.msra.mxu0 0.0
      %3193 = vmatprep.subr.mxu0 0.0
      %3194 = vmatpush1.msra.mxu0 0.0
      %3195 = vmatprep.subr.mxu0 0.0
      %3196 = vmatpush1.msra.mxu0 0.0
      %3197 = vmatprep.subr.mxu0 0.0
      %3198 = vmatpush1.msra.mxu0 0.0
      %3199 = vmatprep.subr.mxu0 0.0
      %3200 = vmatpush1.msra.mxu0 0.0
      %3201 = vmatprep.subr.mxu0 0.0
      %3202 = vmatpush1.msra.mxu0 0.0
      %3203 = vmatprep.subr.mxu0 0.0
      %3204 = vmatpush1.msra.mxu0 0.0
      %3205 = vmatprep.subr.mxu0 0.0
      %3206 = vmatpush1.msra.mxu0 0.0
      %3207 = vmatprep.subr.mxu0 0.0
      %3208 = vmatpush1.msra.mxu0 0.0
      %3209 = vmatprep.subr.mxu0 0.0
      %3210 = vmatpush1.msra.mxu0 0.0
      %3211 = vmatprep.subr.mxu0 0.0
      %3212 = vmatpush1.msra.mxu0 0.0
      %3213 = vmatprep.subr.mxu0 0.0
      %3214 = vmatpush1.msra.mxu0 0.0
      %3215 = vmatprep.subr.mxu0 0.0
      %3216 = vmatpush1.msra.mxu0 0.0
      %3217 = vmatprep.subr.mxu0 0.0
      %3218 = vmatpush1.msra.mxu0 0.0
      %3219 = vmatprep.subr.mxu0 0.0
      %3220 = vmatpush1.msra.mxu0 0.0
      %3221 = vmatprep.subr.mxu0 0.0
      %3222 = vmatpush1.msra.mxu0 0.0
      %3223 = vmatprep.subr.mxu0 0.0
      %3224 = vmatpush1.msra.mxu0 0.0
      %3225 = vmatprep.subr.mxu0 0.0
      %3226 = vmatpush1.msra.mxu0 0.0
      %3227 = vmatprep.subr.mxu0 0.0
      %3228 = vmatpush1.msra.mxu0 0.0
      %3229 = vmatprep.subr.mxu0 0.0
      %3230 = vmatpush1.msra.mxu0 0.0
      %3231 = vmatprep.subr.mxu0 0.0
      %3232 = vmatpush1.msra.mxu0 0.0
      %3233 = vmatprep.subr.mxu0 0.0
      %3234 = vmatpush1.msra.mxu0 0.0
      %3235 = vmatprep.subr.mxu0 0.0
      %3236 = vmatpush1.msra.mxu0 0.0
      %3237 = vmatprep.subr.mxu0 0.0
      %3238 = vmatpush1.msra.mxu0 0.0
      %3239 = vmatprep.subr.mxu0 0.0
      %3240 = vmatpush1.msra.mxu0 0.0
      %3241 = vmatprep.subr.mxu0 0.0
      %3242 = vmatpush1.msra.mxu0 0.0
      %3243 = vmatprep.mubr.f32.mxu0 0.0
      %3244 = vmatmul.mubr.f32.gmra.mrb[0].mxu0 %v3020
      %v3245 = vpop.f32.mrb[0].mxu0
      %v3246 = vadd.f32 0.0, %v3245
      %v3247 = vpop.f32.mrb[0].mxu0
      %v3248 = vadd.f32 0.0, %v3247
      %3249 = vmatprep.mubr.f32.mxu0 0.0
      %3250 = vmatmul.mubr.f32.gmra.mrb[0].mxu0 %v3023
      %v3251 = vpop.f32.mrb[0].mxu0
      %v3252 = vadd.f32 0.0, %v3251
      %v3253 = vpop.f32.mrb[0].mxu0
      %v3254 = vadd.f32 0.0, %v3253
      %3255 = vdwg.mxu0
      %3256 = vmatprep.subr.mxu0 %v3015
      %3257 = vmatpush1.msra.mxu0 %v3008
      %3258 = vmatprep.subr.mxu0 0.0
      %3259 = vmatpush1.msra.mxu0 0.0
      %3260 = vmatprep.subr.mxu0 0.0
      %3261 = vmatpush1.msra.mxu0 0.0
      %3262 = vmatprep.subr.mxu0 0.0
      %3263 = vmatpush1.msra.mxu0 0.0
      %3264 = vmatprep.subr.mxu0 0.0
      %3265 = vmatpush1.msra.mxu0 0.0
      %3266 = vmatprep.subr.mxu0 0.0
      %3267 = vmatpush1.msra.mxu0 0.0
      %3268 = vmatprep.subr.mxu0 0.0
      %3269 = vmatpush1.msra.mxu0 0.0
      %3270 = vmatprep.subr.mxu0 0.0
      %3271 = vmatpush1.msra.mxu0 0.0
      %3272 = vmatprep.subr.mxu0 0.0
      %3273 = vmatpush1.msra.mxu0 0.0
      %3274 = vmatprep.subr.mxu0 0.0
      %3275 = vmatpush1.msra.mxu0 0.0
      %3276 = vmatprep.subr.mxu0 0.0
      %3277 = vmatpush1.msra.mxu0 0.0
      %3278 = vmatprep.subr.mxu0 0.0
      %3279 = vmatpush1.msra.mxu0 0.0
      %3280 = vmatprep.subr.mxu0 0.0
      %3281 = vmatpush1.msra.mxu0 0.0
      %3282 = vmatprep.subr.mxu0 0.0
      %3283 = vmatpush1.msra.mxu0 0.0
      %3284 = vmatprep.subr.mxu0 0.0
      %3285 = vmatpush1.msra.mxu0 0.0
      %3286 = vmatprep.subr.mxu0 0.0
      %3287 = vmatpush1.msra.mxu0 0.0
      %3288 = vmatprep.subr.mxu0 0.0
      %3289 = vmatpush1.msra.mxu0 0.0
      %3290 = vmatprep.subr.mxu0 0.0
      %3291 = vmatpush1.msra.mxu0 0.0
      %3292 = vmatprep.subr.mxu0 0.0
      %3293 = vmatpush1.msra.mxu0 0.0
      %3294 = vmatprep.subr.mxu0 0.0
      %3295 = vmatpush1.msra.mxu0 0.0
      %3296 = vmatprep.subr.mxu0 0.0
      %3297 = vmatpush1.msra.mxu0 0.0
      %3298 = vmatprep.subr.mxu0 0.0
      %3299 = vmatpush1.msra.mxu0 0.0
      %3300 = vmatprep.subr.mxu0 0.0
      %3301 = vmatpush1.msra.mxu0 0.0
      %3302 = vmatprep.subr.mxu0 0.0
      %3303 = vmatpush1.msra.mxu0 0.0
      %3304 = vmatprep.subr.mxu0 0.0
      %3305 = vmatpush1.msra.mxu0 0.0
      %3306 = vmatprep.subr.mxu0 0.0
      %3307 = vmatpush1.msra.mxu0 0.0
      %3308 = vmatprep.subr.mxu0 0.0
      %3309 = vmatpush1.msra.mxu0 0.0
      %3310 = vmatprep.subr.mxu0 0.0
      %3311 = vmatpush1.msra.mxu0 0.0
      %3312 = vmatprep.subr.mxu0 0.0
      %3313 = vmatpush1.msra.mxu0 0.0
      %3314 = vmatprep.subr.mxu0 0.0
      %3315 = vmatpush1.msra.mxu0 0.0
      %3316 = vmatprep.subr.mxu0 0.0
      %3317 = vmatpush1.msra.mxu0 0.0
      %3318 = vmatprep.subr.mxu0 0.0
      %3319 = vmatpush1.msra.mxu0 0.0
      %3320 = vmatprep.mubr.f32.mxu0 0.0
      %3321 = vmatmul.mubr.f32.gmra.mrb[0].mxu0 %v3020
      %v3322 = vpop.f32.mrb[0].mxu0
      %v3323 = vadd.f32 0.0, %v3322
      %v3324 = vpop.f32.mrb[0].mxu0
      %v3325 = vadd.f32 0.0, %v3324
      %3326 = vmatprep.mubr.f32.mxu0 0.0
      %3327 = vmatmul.mubr.f32.gmra.mrb[0].mxu0 %v3023
      %v3328 = vpop.f32.mrb[0].mxu0
      %v3329 = vadd.f32 0.0, %v3328
      %v3330 = vpop.f32.mrb[0].mxu0
      %v3331 = vadd.f32 0.0, %v3330
      %3332 = vdwg.mxu0
      %v3334 = vsel %vm411, %v2989, 0
      %v3337 = vsel %vm411, %v2990, 0
      %3339 = vmatprep.subr.mxu0 %v2982
      %3340 = vmatpush1.msra.mxu0 %v2981
      %3341 = vmatprep.subr.mxu0 0.0
      %3342 = vmatpush1.msra.mxu0 0.0
      %3343 = vmatprep.subr.mxu0 0.0
      %3344 = vmatpush1.msra.mxu0 0.0
      %3345 = vmatprep.subr.mxu0 0.0
      %3346 = vmatpush1.msra.mxu0 0.0
      %3347 = vmatprep.subr.mxu0 0.0
      %3348 = vmatpush1.msra.mxu0 0.0
      %3349 = vmatprep.subr.mxu0 0.0
      %3350 = vmatpush1.msra.mxu0 0.0
      %3351 = vmatprep.subr.mxu0 0.0
      %3352 = vmatpush1.msra.mxu0 0.0
      %3353 = vmatprep.subr.mxu0 0.0
      %3354 = vmatpush1.msra.mxu0 0.0
      %3355 = vmatprep.subr.mxu0 0.0
      %3356 = vmatpush1.msra.mxu0 0.0
      %3357 = vmatprep.subr.mxu0 0.0
      %3358 = vmatpush1.msra.mxu0 0.0
      %3359 = vmatprep.subr.mxu0 0.0
      %3360 = vmatpush1.msra.mxu0 0.0
      %3361 = vmatprep.subr.mxu0 0.0
      %3362 = vmatpush1.msra.mxu0 0.0
      %3363 = vmatprep.subr.mxu0 0.0
      %3364 = vmatpush1.msra.mxu0 0.0
      %3365 = vmatprep.subr.mxu0 0.0
      %3366 = vmatpush1.msra.mxu0 0.0
      %3367 = vmatprep.subr.mxu0 0.0
      %3368 = vmatpush1.msra.mxu0 0.0
      %3369 = vmatprep.subr.mxu0 0.0
      %3370 = vmatpush1.msra.mxu0 0.0
      %3371 = vmatprep.subr.mxu0 0.0
      %3372 = vmatpush1.msra.mxu0 0.0
      %3373 = vmatprep.subr.mxu0 0.0
      %3374 = vmatpush1.msra.mxu0 0.0
      %3375 = vmatprep.subr.mxu0 0.0
      %3376 = vmatpush1.msra.mxu0 0.0
      %3377 = vmatprep.subr.mxu0 0.0
      %3378 = vmatpush1.msra.mxu0 0.0
      %3379 = vmatprep.subr.mxu0 0.0
      %3380 = vmatpush1.msra.mxu0 0.0
      %3381 = vmatprep.subr.mxu0 0.0
      %3382 = vmatpush1.msra.mxu0 0.0
      %3383 = vmatprep.subr.mxu0 0.0
      %3384 = vmatpush1.msra.mxu0 0.0
      %3385 = vmatprep.subr.mxu0 0.0
      %3386 = vmatpush1.msra.mxu0 0.0
      %3387 = vmatprep.subr.mxu0 0.0
      %3388 = vmatpush1.msra.mxu0 0.0
      %3389 = vmatprep.subr.mxu0 0.0
      %3390 = vmatpush1.msra.mxu0 0.0
      %3391 = vmatprep.subr.mxu0 0.0
      %3392 = vmatpush1.msra.mxu0 0.0
      %3393 = vmatprep.subr.mxu0 0.0
      %3394 = vmatpush1.msra.mxu0 0.0
      %3395 = vmatprep.subr.mxu0 0.0
      %3396 = vmatpush1.msra.mxu0 0.0
      %3397 = vmatprep.subr.mxu0 0.0
      %3398 = vmatpush1.msra.mxu0 0.0
      %3399 = vmatprep.subr.mxu0 0.0
      %3400 = vmatpush1.msra.mxu0 0.0
      %3401 = vmatprep.subr.mxu0 0.0
      %3402 = vmatpush1.msra.mxu0 0.0
      %3403 = vmatprep.mubr.f32.mxu0 0.0
      %3404 = vmatmul.mubr.f32.gmra.mrb[0].mxu0 %v3334
      %v3405 = vpop.f32.mrb[0].mxu0
      %v3406 = vadd.f32 %v3092, %v3405
      %v3407 = vpop.f32.mrb[0].mxu0
      %v3408 = vadd.f32 %v3094, %v3407
      %3409 = vmatprep.mubr.f32.mxu0 0.0
      %3410 = vmatmul.mubr.f32.gmra.mrb[0].mxu0 %v3337
      %v3411 = vpop.f32.mrb[0].mxu0
      %v3412 = vadd.f32 %v3098, %v3411
      %v3413 = vpop.f32.mrb[0].mxu0
      %v3414 = vadd.f32 %v3100, %v3413
      %3415 = vdwg.mxu0
      %3416 = vmatprep.subr.mxu0 %v2984
      %3417 = vmatpush1.msra.mxu0 %v2983
      %3418 = vmatprep.subr.mxu0 0.0
      %3419 = vmatpush1.msra.mxu0 0.0
      %3420 = vmatprep.subr.mxu0 0.0
      %3421 = vmatpush1.msra.mxu0 0.0
      %3422 = vmatprep.subr.mxu0 0.0
      %3423 = vmatpush1.msra.mxu0 0.0
      %3424 = vmatprep.subr.mxu0 0.0
      %3425 = vmatpush1.msra.mxu0 0.0
      %3426 = vmatprep.subr.mxu0 0.0
      %3427 = vmatpush1.msra.mxu0 0.0
      %3428 = vmatprep.subr.mxu0 0.0
      %3429 = vmatpush1.msra.mxu0 0.0
      %3430 = vmatprep.subr.mxu0 0.0
      %3431 = vmatpush1.msra.mxu0 0.0
      %3432 = vmatprep.subr.mxu0 0.0
      %3433 = vmatpush1.msra.mxu0 0.0
      %3434 = vmatprep.subr.mxu0 0.0
      %3435 = vmatpush1.msra.mxu0 0.0
      %3436 = vmatprep.subr.mxu0 0.0
      %3437 = vmatpush1.msra.mxu0 0.0
      %3438 = vmatprep.subr.mxu0 0.0
      %3439 = vmatpush1.msra.mxu0 0.0
      %3440 = vmatprep.subr.mxu0 0.0
      %3441 = vmatpush1.msra.mxu0 0.0
      %3442 = vmatprep.subr.mxu0 0.0
      %3443 = vmatpush1.msra.mxu0 0.0
      %3444 = vmatprep.subr.mxu0 0.0
      %3445 = vmatpush1.msra.mxu0 0.0
      %3446 = vmatprep.subr.mxu0 0.0
      %3447 = vmatpush1.msra.mxu0 0.0
      %3448 = vmatprep.subr.mxu0 0.0
      %3449 = vmatpush1.msra.mxu0 0.0
      %3450 = vmatprep.subr.mxu0 0.0
      %3451 = vmatpush1.msra.mxu0 0.0
      %3452 = vmatprep.subr.mxu0 0.0
      %3453 = vmatpush1.msra.mxu0 0.0
      %3454 = vmatprep.subr.mxu0 0.0
      %3455 = vmatpush1.msra.mxu0 0.0
      %3456 = vmatprep.subr.mxu0 0.0
      %3457 = vmatpush1.msra.mxu0 0.0
      %3458 = vmatprep.subr.mxu0 0.0
      %3459 = vmatpush1.msra.mxu0 0.0
      %3460 = vmatprep.subr.mxu0 0.0
      %3461 = vmatpush1.msra.mxu0 0.0
      %3462 = vmatprep.subr.mxu0 0.0
      %3463 = vmatpush1.msra.mxu0 0.0
      %3464 = vmatprep.subr.mxu0 0.0
      %3465 = vmatpush1.msra.mxu0 0.0
      %3466 = vmatprep.subr.mxu0 0.0
      %3467 = vmatpush1.msra.mxu0 0.0
      %3468 = vmatprep.subr.mxu0 0.0
      %3469 = vmatpush1.msra.mxu0 0.0
      %3470 = vmatprep.subr.mxu0 0.0
      %3471 = vmatpush1.msra.mxu0 0.0
      %3472 = vmatprep.subr.mxu0 0.0
      %3473 = vmatpush1.msra.mxu0 0.0
      %3474 = vmatprep.subr.mxu0 0.0
      %3475 = vmatpush1.msra.mxu0 0.0
      %3476 = vmatprep.subr.mxu0 0.0
      %3477 = vmatpush1.msra.mxu0 0.0
      %3478 = vmatprep.subr.mxu0 0.0
      %3479 = vmatpush1.msra.mxu0 0.0
      %3480 = vmatprep.mubr.f32.mxu0 0.0
      %3481 = vmatmul.mubr.f32.gmra.mrb[0].mxu0 %v3334
      %v3482 = vpop.f32.mrb[0].mxu0
      %v3483 = vadd.f32 %v3169, %v3482
      %v3484 = vpop.f32.mrb[0].mxu0
      %v3485 = vadd.f32 %v3171, %v3484
      %3486 = vmatprep.mubr.f32.mxu0 0.0
      %3487 = vmatmul.mubr.f32.gmra.mrb[0].mxu0 %v3337
      %v3488 = vpop.f32.mrb[0].mxu0
      %v3489 = vadd.f32 %v3175, %v3488
      %v3490 = vpop.f32.mrb[0].mxu0
      %v3491 = vadd.f32 %v3177, %v3490
      %3492 = vdwg.mxu0
      %3493 = vmatprep.subr.mxu0 %v2986
      %3494 = vmatpush1.msra.mxu0 %v2985
      %3495 = vmatprep.subr.mxu0 0.0
      %3496 = vmatpush1.msra.mxu0 0.0
      %3497 = vmatprep.subr.mxu0 0.0
      %3498 = vmatpush1.msra.mxu0 0.0
      %3499 = vmatprep.subr.mxu0 0.0
      %3500 = vmatpush1.msra.mxu0 0.0
      %3501 = vmatprep.subr.mxu0 0.0
      %3502 = vmatpush1.msra.mxu0 0.0
      %3503 = vmatprep.subr.mxu0 0.0
      %3504 = vmatpush1.msra.mxu0 0.0
      %3505 = vmatprep.subr.mxu0 0.0
      %3506 = vmatpush1.msra.mxu0 0.0
      %3507 = vmatprep.subr.mxu0 0.0
      %3508 = vmatpush1.msra.mxu0 0.0
      %3509 = vmatprep.subr.mxu0 0.0
      %3510 = vmatpush1.msra.mxu0 0.0
      %3511 = vmatprep.subr.mxu0 0.0
      %3512 = vmatpush1.msra.mxu0 0.0
      %3513 = vmatprep.subr.mxu0 0.0
      %3514 = vmatpush1.msra.mxu0 0.0
      %3515 = vmatprep.subr.mxu0 0.0
      %3516 = vmatpush1.msra.mxu0 0.0
      %3517 = vmatprep.subr.mxu0 0.0
      %3518 = vmatpush1.msra.mxu0 0.0
      %3519 = vmatprep.subr.mxu0 0.0
      %3520 = vmatpush1.msra.mxu0 0.0
      %3521 = vmatprep.subr.mxu0 0.0
      %3522 = vmatpush1.msra.mxu0 0.0
      %3523 = vmatprep.subr.mxu0 0.0
      %3524 = vmatpush1.msra.mxu0 0.0
      %3525 = vmatprep.subr.mxu0 0.0
      %3526 = vmatpush1.msra.mxu0 0.0
      %3527 = vmatprep.subr.mxu0 0.0
      %3528 = vmatpush1.msra.mxu0 0.0
      %3529 = vmatprep.subr.mxu0 0.0
      %3530 = vmatpush1.msra.mxu0 0.0
      %3531 = vmatprep.subr.mxu0 0.0
      %3532 = vmatpush1.msra.mxu0 0.0
      %3533 = vmatprep.subr.mxu0 0.0
      %3534 = vmatpush1.msra.mxu0 0.0
      %3535 = vmatprep.subr.mxu0 0.0
      %3536 = vmatpush1.msra.mxu0 0.0
      %3537 = vmatprep.subr.mxu0 0.0
      %3538 = vmatpush1.msra.mxu0 0.0
      %3539 = vmatprep.subr.mxu0 0.0
      %3540 = vmatpush1.msra.mxu0 0.0
      %3541 = vmatprep.subr.mxu0 0.0
      %3542 = vmatpush1.msra.mxu0 0.0
      %3543 = vmatprep.subr.mxu0 0.0
      %3544 = vmatpush1.msra.mxu0 0.0
      %3545 = vmatprep.subr.mxu0 0.0
      %3546 = vmatpush1.msra.mxu0 0.0
      %3547 = vmatprep.subr.mxu0 0.0
      %3548 = vmatpush1.msra.mxu0 0.0
      %3549 = vmatprep.subr.mxu0 0.0
      %3550 = vmatpush1.msra.mxu0 0.0
      %3551 = vmatprep.subr.mxu0 0.0
      %3552 = vmatpush1.msra.mxu0 0.0
      %3553 = vmatprep.subr.mxu0 0.0
      %3554 = vmatpush1.msra.mxu0 0.0
      %3555 = vmatprep.subr.mxu0 0.0
      %3556 = vmatpush1.msra.mxu0 0.0
      %3557 = vmatprep.mubr.f32.mxu0 0.0
      %3558 = vmatmul.mubr.f32.gmra.mrb[0].mxu0 %v3334
      %v3559 = vpop.f32.mrb[0].mxu0
      %v3560 = vadd.f32 %v3246, %v3559
      %v3561 = vpop.f32.mrb[0].mxu0
      %v3562 = vadd.f32 %v3248, %v3561
      %3563 = vmatprep.mubr.f32.mxu0 0.0
      %3564 = vmatmul.mubr.f32.gmra.mrb[0].mxu0 %v3337
      %v3565 = vpop.f32.mrb[0].mxu0
      %v3566 = vadd.f32 %v3252, %v3565
      %v3567 = vpop.f32.mrb[0].mxu0
      %v3568 = vadd.f32 %v3254, %v3567
      %3569 = vdwg.mxu0
      %3570 = vmatprep.subr.mxu0 %v2988
      %3571 = vmatpush1.msra.mxu0 %v2987
      %3572 = vmatprep.subr.mxu0 0.0
      %3573 = vmatpush1.msra.mxu0 0.0
      %3574 = vmatprep.subr.mxu0 0.0
      %3575 = vmatpush1.msra.mxu0 0.0
      %3576 = vmatprep.subr.mxu0 0.0
      %3577 = vmatpush1.msra.mxu0 0.0
      %3578 = vmatprep.subr.mxu0 0.0
      %3579 = vmatpush1.msra.mxu0 0.0
      %3580 = vmatprep.subr.mxu0 0.0
      %3581 = vmatpush1.msra.mxu0 0.0
      %3582 = vmatprep.subr.mxu0 0.0
      %3583 = vmatpush1.msra.mxu0 0.0
      %3584 = vmatprep.subr.mxu0 0.0
      %3585 = vmatpush1.msra.mxu0 0.0
      %3586 = vmatprep.subr.mxu0 0.0
      %3587 = vmatpush1.msra.mxu0 0.0
      %3588 = vmatprep.subr.mxu0 0.0
      %3589 = vmatpush1.msra.mxu0 0.0
      %3590 = vmatprep.subr.mxu0 0.0
      %3591 = vmatpush1.msra.mxu0 0.0
      %3592 = vmatprep.subr.mxu0 0.0
      %3593 = vmatpush1.msra.mxu0 0.0
      %3594 = vmatprep.subr.mxu0 0.0
      %3595 = vmatpush1.msra.mxu0 0.0
      %3596 = vmatprep.subr.mxu0 0.0
      %3597 = vmatpush1.msra.mxu0 0.0
      %3598 = vmatprep.subr.mxu0 0.0
      %3599 = vmatpush1.msra.mxu0 0.0
      %3600 = vmatprep.subr.mxu0 0.0
      %3601 = vmatpush1.msra.mxu0 0.0
      %3602 = vmatprep.subr.mxu0 0.0
      %3603 = vmatpush1.msra.mxu0 0.0
      %3604 = vmatprep.subr.mxu0 0.0
      %3605 = vmatpush1.msra.mxu0 0.0
      %3606 = vmatprep.subr.mxu0 0.0
      %3607 = vmatpush1.msra.mxu0 0.0
      %3608 = vmatprep.subr.mxu0 0.0
      %3609 = vmatpush1.msra.mxu0 0.0
      %3610 = vmatprep.subr.mxu0 0.0
      %3611 = vmatpush1.msra.mxu0 0.0
      %3612 = vmatprep.subr.mxu0 0.0
      %3613 = vmatpush1.msra.mxu0 0.0
      %3614 = vmatprep.subr.mxu0 0.0
      %3615 = vmatpush1.msra.mxu0 0.0
      %3616 = vmatprep.subr.mxu0 0.0
      %3617 = vmatpush1.msra.mxu0 0.0
      %3618 = vmatprep.subr.mxu0 0.0
      %3619 = vmatpush1.msra.mxu0 0.0
      %3620 = vmatprep.subr.mxu0 0.0
      %3621 = vmatpush1.msra.mxu0 0.0
      %3622 = vmatprep.subr.mxu0 0.0
      %3623 = vmatpush1.msra.mxu0 0.0
      %3624 = vmatprep.subr.mxu0 0.0
      %3625 = vmatpush1.msra.mxu0 0.0
      %3626 = vmatprep.subr.mxu0 0.0
      %3627 = vmatpush1.msra.mxu0 0.0
      %3628 = vmatprep.subr.mxu0 0.0
      %3629 = vmatpush1.msra.mxu0 0.0
      %3630 = vmatprep.subr.mxu0 0.0
      %3631 = vmatpush1.msra.mxu0 0.0
      %3632 = vmatprep.subr.mxu0 0.0
      %3633 = vmatpush1.msra.mxu0 0.0
      %3634 = vmatprep.mubr.f32.mxu0 0.0
      %3635 = vmatmul.mubr.f32.gmra.mrb[0].mxu0 %v3334
      %v3636 = vpop.f32.mrb[0].mxu0
      %v3637 = vadd.f32 %v3323, %v3636
      %v3638 = vpop.f32.mrb[0].mxu0
      %v3639 = vadd.f32 %v3325, %v3638
      %3640 = vmatprep.mubr.f32.mxu0 0.0
      %3641 = vmatmul.mubr.f32.gmra.mrb[0].mxu0 %v3337
      %v3642 = vpop.f32.mrb[0].mxu0
      %v3643 = vadd.f32 %v3329, %v3642
      %v3644 = vpop.f32.mrb[0].mxu0
      %v3645 = vadd.f32 %v3331, %v3644
      %3646 = vdwg.mxu0
      %3647 = vrot.lane.b32.xlu0 %v2981, 64
      %v3648 = vpop.permute.xlu0 %3647
      %3649 = vrot.lane.b32.xlu0 %v2982, 64
      %v3650 = vpop.permute.xlu0 %3649
      %3651 = vrot.lane.b32.xlu0 %v2983, 64
      %v3652 = vpop.permute.xlu0 %3651
      %3653 = vrot.lane.b32.xlu0 %v2984, 64
      %v3654 = vpop.permute.xlu0 %3653
      %3655 = vrot.lane.b32.xlu0 %v2985, 64
      %v3656 = vpop.permute.xlu0 %3655
      %3657 = vrot.lane.b32.xlu0 %v2986, 64
      %v3658 = vpop.permute.xlu0 %3657
      %3659 = vrot.lane.b32.xlu0 %v2987, 64
      %v3660 = vpop.permute.xlu0 %3659
      %3661 = vrot.lane.b32.xlu0 %v2988, 64
      %v3662 = vpop.permute.xlu0 %3661
      %vm3663 = vcmp.lt.s32.totalorder %v399, 64
      %v3664 = vsel %vm3663, %v3660, %v3662
      %v3665 = vsel %vm3663, %v3658, %v3660
      %v3666 = vsel %vm3663, %v3656, %v3658
      %v3667 = vsel %vm3663, %v3654, %v3656
      %v3668 = vsel %vm3663, %v3652, %v3654
      %v3669 = vsel %vm3663, %v3650, %v3652
      %v3670 = vsel %vm3663, %v3648, %v3650
      %v3671 = vsel %vm3663, %v3662, %v3648
      %s3672 = scalar_lea.vmem %s5, 32
      %v3673 = vld [vmem:[%s3672] sm:$0xff]
      %v3674 = vld [vmem:[%s3672 + $0x8] sm:$0xff]
      %v3676 = vsel %vm411, %v3673, 0
      %v3679 = vsel %vm411, %v3674, 0
      %3681 = vmatprep.subr.mxu0 %v3669
      %3682 = vmatpush1.msra.mxu0 %v3670
      %3683 = vmatprep.subr.mxu0 0.0
      %3684 = vmatpush1.msra.mxu0 0.0
      %3685 = vmatprep.subr.mxu0 0.0
      %3686 = vmatpush1.msra.mxu0 0.0
      %3687 = vmatprep.subr.mxu0 0.0
      %3688 = vmatpush1.msra.mxu0 0.0
      %3689 = vmatprep.subr.mxu0 0.0
      %3690 = vmatpush1.msra.mxu0 0.0
      %3691 = vmatprep.subr.mxu0 0.0
      %3692 = vmatpush1.msra.mxu0 0.0
      %3693 = vmatprep.subr.mxu0 0.0
      %3694 = vmatpush1.msra.mxu0 0.0
      %3695 = vmatprep.subr.mxu0 0.0
      %3696 = vmatpush1.msra.mxu0 0.0
      %3697 = vmatprep.subr.mxu0 0.0
      %3698 = vmatpush1.msra.mxu0 0.0
      %3699 = vmatprep.subr.mxu0 0.0
      %3700 = vmatpush1.msra.mxu0 0.0
      %3701 = vmatprep.subr.mxu0 0.0
      %3702 = vmatpush1.msra.mxu0 0.0
      %3703 = vmatprep.subr.mxu0 0.0
      %3704 = vmatpush1.msra.mxu0 0.0
      %3705 = vmatprep.subr.mxu0 0.0
      %3706 = vmatpush1.msra.mxu0 0.0
      %3707 = vmatprep.subr.mxu0 0.0
      %3708 = vmatpush1.msra.mxu0 0.0
      %3709 = vmatprep.subr.mxu0 0.0
      %3710 = vmatpush1.msra.mxu0 0.0
      %3711 = vmatprep.subr.mxu0 0.0
      %3712 = vmatpush1.msra.mxu0 0.0
      %3713 = vmatprep.subr.mxu0 0.0
      %3714 = vmatpush1.msra.mxu0 0.0
      %3715 = vmatprep.subr.mxu0 0.0
      %3716 = vmatpush1.msra.mxu0 0.0
      %3717 = vmatprep.subr.mxu0 0.0
      %3718 = vmatpush1.msra.mxu0 0.0
      %3719 = vmatprep.subr.mxu0 0.0
      %3720 = vmatpush1.msra.mxu0 0.0
      %3721 = vmatprep.subr.mxu0 0.0
      %3722 = vmatpush1.msra.mxu0 0.0
      %3723 = vmatprep.subr.mxu0 0.0
      %3724 = vmatpush1.msra.mxu0 0.0
      %3725 = vmatprep.subr.mxu0 0.0
      %3726 = vmatpush1.msra.mxu0 0.0
      %3727 = vmatprep.subr.mxu0 0.0
      %3728 = vmatpush1.msra.mxu0 0.0
      %3729 = vmatprep.subr.mxu0 0.0
      %3730 = vmatpush1.msra.mxu0 0.0
      %3731 = vmatprep.subr.mxu0 0.0
      %3732 = vmatpush1.msra.mxu0 0.0
      %3733 = vmatprep.subr.mxu0 0.0
      %3734 = vmatpush1.msra.mxu0 0.0
      %3735 = vmatprep.subr.mxu0 0.0
      %3736 = vmatpush1.msra.mxu0 0.0
      %3737 = vmatprep.subr.mxu0 0.0
      %3738 = vmatpush1.msra.mxu0 0.0
      %3739 = vmatprep.subr.mxu0 0.0
      %3740 = vmatpush1.msra.mxu0 0.0
      %3741 = vmatprep.subr.mxu0 0.0
      %3742 = vmatpush1.msra.mxu0 0.0
      %3743 = vmatprep.subr.mxu0 0.0
      %3744 = vmatpush1.msra.mxu0 0.0
      %3745 = vmatprep.mubr.f32.mxu0 0.0
      %3746 = vmatmul.mubr.f32.gmra.mrb[0].mxu0 %v3676
      %v3747 = vpop.f32.mrb[0].mxu0
      %v3748 = vadd.f32 0.0, %v3747
      %v3749 = vpop.f32.mrb[0].mxu0
      %v3750 = vadd.f32 0.0, %v3749
      %3751 = vmatprep.mubr.f32.mxu0 0.0
      %3752 = vmatmul.mubr.f32.gmra.mrb[0].mxu0 %v3679
      %v3753 = vpop.f32.mrb[0].mxu0
      %v3754 = vadd.f32 0.0, %v3753
      %v3755 = vpop.f32.mrb[0].mxu0
      %v3756 = vadd.f32 0.0, %v3755
      %3757 = vdwg.mxu0
      %3758 = vmatprep.subr.mxu0 %v3667
      %3759 = vmatpush1.msra.mxu0 %v3668
      %3760 = vmatprep.subr.mxu0 0.0
      %3761 = vmatpush1.msra.mxu0 0.0
      %3762 = vmatprep.subr.mxu0 0.0
      %3763 = vmatpush1.msra.mxu0 0.0
      %3764 = vmatprep.subr.mxu0 0.0
      %3765 = vmatpush1.msra.mxu0 0.0
      %3766 = vmatprep.subr.mxu0 0.0
      %3767 = vmatpush1.msra.mxu0 0.0
      %3768 = vmatprep.subr.mxu0 0.0
      %3769 = vmatpush1.msra.mxu0 0.0
      %3770 = vmatprep.subr.mxu0 0.0
      %3771 = vmatpush1.msra.mxu0 0.0
      %3772 = vmatprep.subr.mxu0 0.0
      %3773 = vmatpush1.msra.mxu0 0.0
      %3774 = vmatprep.subr.mxu0 0.0
      %3775 = vmatpush1.msra.mxu0 0.0
      %3776 = vmatprep.subr.mxu0 0.0
      %3777 = vmatpush1.msra.mxu0 0.0
      %3778 = vmatprep.subr.mxu0 0.0
      %3779 = vmatpush1.msra.mxu0 0.0
      %3780 = vmatprep.subr.mxu0 0.0
      %3781 = vmatpush1.msra.mxu0 0.0
      %3782 = vmatprep.subr.mxu0 0.0
      %3783 = vmatpush1.msra.mxu0 0.0
      %3784 = vmatprep.subr.mxu0 0.0
      %3785 = vmatpush1.msra.mxu0 0.0
      %3786 = vmatprep.subr.mxu0 0.0
      %3787 = vmatpush1.msra.mxu0 0.0
      %3788 = vmatprep.subr.mxu0 0.0
      %3789 = vmatpush1.msra.mxu0 0.0
      %3790 = vmatprep.subr.mxu0 0.0
      %3791 = vmatpush1.msra.mxu0 0.0
      %3792 = vmatprep.subr.mxu0 0.0
      %3793 = vmatpush1.msra.mxu0 0.0
      %3794 = vmatprep.subr.mxu0 0.0
      %3795 = vmatpush1.msra.mxu0 0.0
      %3796 = vmatprep.subr.mxu0 0.0
      %3797 = vmatpush1.msra.mxu0 0.0
      %3798 = vmatprep.subr.mxu0 0.0
      %3799 = vmatpush1.msra.mxu0 0.0
      %3800 = vmatprep.subr.mxu0 0.0
      %3801 = vmatpush1.msra.mxu0 0.0
      %3802 = vmatprep.subr.mxu0 0.0
      %3803 = vmatpush1.msra.mxu0 0.0
      %3804 = vmatprep.subr.mxu0 0.0
      %3805 = vmatpush1.msra.mxu0 0.0
      %3806 = vmatprep.subr.mxu0 0.0
      %3807 = vmatpush1.msra.mxu0 0.0
      %3808 = vmatprep.subr.mxu0 0.0
      %3809 = vmatpush1.msra.mxu0 0.0
      %3810 = vmatprep.subr.mxu0 0.0
      %3811 = vmatpush1.msra.mxu0 0.0
      %3812 = vmatprep.subr.mxu0 0.0
      %3813 = vmatpush1.msra.mxu0 0.0
      %3814 = vmatprep.subr.mxu0 0.0
      %3815 = vmatpush1.msra.mxu0 0.0
      %3816 = vmatprep.subr.mxu0 0.0
      %3817 = vmatpush1.msra.mxu0 0.0
      %3818 = vmatprep.subr.mxu0 0.0
      %3819 = vmatpush1.msra.mxu0 0.0
      %3820 = vmatprep.subr.mxu0 0.0
      %3821 = vmatpush1.msra.mxu0 0.0
      %3822 = vmatprep.mubr.f32.mxu0 0.0
      %3823 = vmatmul.mubr.f32.gmra.mrb[0].mxu0 %v3676
      %v3824 = vpop.f32.mrb[0].mxu0
      %v3825 = vadd.f32 0.0, %v3824
      %v3826 = vpop.f32.mrb[0].mxu0
      %v3827 = vadd.f32 0.0, %v3826
      %3828 = vmatprep.mubr.f32.mxu0 0.0
      %3829 = vmatmul.mubr.f32.gmra.mrb[0].mxu0 %v3679
      %v3830 = vpop.f32.mrb[0].mxu0
      %v3831 = vadd.f32 0.0, %v3830
      %v3832 = vpop.f32.mrb[0].mxu0
      %v3833 = vadd.f32 0.0, %v3832
      %3834 = vdwg.mxu0
      %3835 = vmatprep.subr.mxu0 %v3665
      %3836 = vmatpush1.msra.mxu0 %v3666
      %3837 = vmatprep.subr.mxu0 0.0
      %3838 = vmatpush1.msra.mxu0 0.0
      %3839 = vmatprep.subr.mxu0 0.0
      %3840 = vmatpush1.msra.mxu0 0.0
      %3841 = vmatprep.subr.mxu0 0.0
      %3842 = vmatpush1.msra.mxu0 0.0
      %3843 = vmatprep.subr.mxu0 0.0
      %3844 = vmatpush1.msra.mxu0 0.0
      %3845 = vmatprep.subr.mxu0 0.0
      %3846 = vmatpush1.msra.mxu0 0.0
      %3847 = vmatprep.subr.mxu0 0.0
      %3848 = vmatpush1.msra.mxu0 0.0
      %3849 = vmatprep.subr.mxu0 0.0
      %3850 = vmatpush1.msra.mxu0 0.0
      %3851 = vmatprep.subr.mxu0 0.0
      %3852 = vmatpush1.msra.mxu0 0.0
      %3853 = vmatprep.subr.mxu0 0.0
      %3854 = vmatpush1.msra.mxu0 0.0
      %3855 = vmatprep.subr.mxu0 0.0
      %3856 = vmatpush1.msra.mxu0 0.0
      %3857 = vmatprep.subr.mxu0 0.0
      %3858 = vmatpush1.msra.mxu0 0.0
      %3859 = vmatprep.subr.mxu0 0.0
      %3860 = vmatpush1.msra.mxu0 0.0
      %3861 = vmatprep.subr.mxu0 0.0
      %3862 = vmatpush1.msra.mxu0 0.0
      %3863 = vmatprep.subr.mxu0 0.0
      %3864 = vmatpush1.msra.mxu0 0.0
      %3865 = vmatprep.subr.mxu0 0.0
      %3866 = vmatpush1.msra.mxu0 0.0
      %3867 = vmatprep.subr.mxu0 0.0
      %3868 = vmatpush1.msra.mxu0 0.0
      %3869 = vmatprep.subr.mxu0 0.0
      %3870 = vmatpush1.msra.mxu0 0.0
      %3871 = vmatprep.subr.mxu0 0.0
      %3872 = vmatpush1.msra.mxu0 0.0
      %3873 = vmatprep.subr.mxu0 0.0
      %3874 = vmatpush1.msra.mxu0 0.0
      %3875 = vmatprep.subr.mxu0 0.0
      %3876 = vmatpush1.msra.mxu0 0.0
      %3877 = vmatprep.subr.mxu0 0.0
      %3878 = vmatpush1.msra.mxu0 0.0
      %3879 = vmatprep.subr.mxu0 0.0
      %3880 = vmatpush1.msra.mxu0 0.0
      %3881 = vmatprep.subr.mxu0 0.0
      %3882 = vmatpush1.msra.mxu0 0.0
      %3883 = vmatprep.subr.mxu0 0.0
      %3884 = vmatpush1.msra.mxu0 0.0
      %3885 = vmatprep.subr.mxu0 0.0
      %3886 = vmatpush1.msra.mxu0 0.0
      %3887 = vmatprep.subr.mxu0 0.0
      %3888 = vmatpush1.msra.mxu0 0.0
      %3889 = vmatprep.subr.mxu0 0.0
      %3890 = vmatpush1.msra.mxu0 0.0
      %3891 = vmatprep.subr.mxu0 0.0
      %3892 = vmatpush1.msra.mxu0 0.0
      %3893 = vmatprep.subr.mxu0 0.0
      %3894 = vmatpush1.msra.mxu0 0.0
      %3895 = vmatprep.subr.mxu0 0.0
      %3896 = vmatpush1.msra.mxu0 0.0
      %3897 = vmatprep.subr.mxu0 0.0
      %3898 = vmatpush1.msra.mxu0 0.0
      %3899 = vmatprep.mubr.f32.mxu0 0.0
      %3900 = vmatmul.mubr.f32.gmra.mrb[0].mxu0 %v3676
      %v3901 = vpop.f32.mrb[0].mxu0
      %v3902 = vadd.f32 0.0, %v3901
      %v3903 = vpop.f32.mrb[0].mxu0
      %v3904 = vadd.f32 0.0, %v3903
      %3905 = vmatprep.mubr.f32.mxu0 0.0
      %3906 = vmatmul.mubr.f32.gmra.mrb[0].mxu0 %v3679
      %v3907 = vpop.f32.mrb[0].mxu0
      %v3908 = vadd.f32 0.0, %v3907
      %v3909 = vpop.f32.mrb[0].mxu0
      %v3910 = vadd.f32 0.0, %v3909
      %3911 = vdwg.mxu0
      %3912 = vmatprep.subr.mxu0 %v3671
      %3913 = vmatpush1.msra.mxu0 %v3664
      %3914 = vmatprep.subr.mxu0 0.0
      %3915 = vmatpush1.msra.mxu0 0.0
      %3916 = vmatprep.subr.mxu0 0.0
      %3917 = vmatpush1.msra.mxu0 0.0
      %3918 = vmatprep.subr.mxu0 0.0
      %3919 = vmatpush1.msra.mxu0 0.0
      %3920 = vmatprep.subr.mxu0 0.0
      %3921 = vmatpush1.msra.mxu0 0.0
      %3922 = vmatprep.subr.mxu0 0.0
      %3923 = vmatpush1.msra.mxu0 0.0
      %3924 = vmatprep.subr.mxu0 0.0
      %3925 = vmatpush1.msra.mxu0 0.0
      %3926 = vmatprep.subr.mxu0 0.0
      %3927 = vmatpush1.msra.mxu0 0.0
      %3928 = vmatprep.subr.mxu0 0.0
      %3929 = vmatpush1.msra.mxu0 0.0
      %3930 = vmatprep.subr.mxu0 0.0
      %3931 = vmatpush1.msra.mxu0 0.0
      %3932 = vmatprep.subr.mxu0 0.0
      %3933 = vmatpush1.msra.mxu0 0.0
      %3934 = vmatprep.subr.mxu0 0.0
      %3935 = vmatpush1.msra.mxu0 0.0
      %3936 = vmatprep.subr.mxu0 0.0
      %3937 = vmatpush1.msra.mxu0 0.0
      %3938 = vmatprep.subr.mxu0 0.0
      %3939 = vmatpush1.msra.mxu0 0.0
      %3940 = vmatprep.subr.mxu0 0.0
      %3941 = vmatpush1.msra.mxu0 0.0
      %3942 = vmatprep.subr.mxu0 0.0
      %3943 = vmatpush1.msra.mxu0 0.0
      %3944 = vmatprep.subr.mxu0 0.0
      %3945 = vmatpush1.msra.mxu0 0.0
      %3946 = vmatprep.subr.mxu0 0.0
      %3947 = vmatpush1.msra.mxu0 0.0
      %3948 = vmatprep.subr.mxu0 0.0
      %3949 = vmatpush1.msra.mxu0 0.0
      %3950 = vmatprep.subr.mxu0 0.0
      %3951 = vmatpush1.msra.mxu0 0.0
      %3952 = vmatprep.subr.mxu0 0.0
      %3953 = vmatpush1.msra.mxu0 0.0
      %3954 = vmatprep.subr.mxu0 0.0
      %3955 = vmatpush1.msra.mxu0 0.0
      %3956 = vmatprep.subr.mxu0 0.0
      %3957 = vmatpush1.msra.mxu0 0.0
      %3958 = vmatprep.subr.mxu0 0.0
      %3959 = vmatpush1.msra.mxu0 0.0
      %3960 = vmatprep.subr.mxu0 0.0
      %3961 = vmatpush1.msra.mxu0 0.0
      %3962 = vmatprep.subr.mxu0 0.0
      %3963 = vmatpush1.msra.mxu0 0.0
      %3964 = vmatprep.subr.mxu0 0.0
      %3965 = vmatpush1.msra.mxu0 0.0
      %3966 = vmatprep.subr.mxu0 0.0
      %3967 = vmatpush1.msra.mxu0 0.0
      %3968 = vmatprep.subr.mxu0 0.0
      %3969 = vmatpush1.msra.mxu0 0.0
      %3970 = vmatprep.subr.mxu0 0.0
      %3971 = vmatpush1.msra.mxu0 0.0
      %3972 = vmatprep.subr.mxu0 0.0
      %3973 = vmatpush1.msra.mxu0 0.0
      %3974 = vmatprep.subr.mxu0 0.0
      %3975 = vmatpush1.msra.mxu0 0.0
      %3976 = vmatprep.mubr.f32.mxu0 0.0
      %3977 = vmatmul.mubr.f32.gmra.mrb[0].mxu0 %v3676
      %v3978 = vpop.f32.mrb[0].mxu0
      %v3979 = vadd.f32 0.0, %v3978
      %v3980 = vpop.f32.mrb[0].mxu0
      %v3981 = vadd.f32 0.0, %v3980
      %3982 = vmatprep.mubr.f32.mxu0 0.0
      %3983 = vmatmul.mubr.f32.gmra.mrb[0].mxu0 %v3679
      %v3984 = vpop.f32.mrb[0].mxu0
      %v3985 = vadd.f32 0.0, %v3984
      %v3986 = vpop.f32.mrb[0].mxu0
      %v3987 = vadd.f32 0.0, %v3986
      %3988 = vdwg.mxu0
      %v3989 = vadd.f32 %v3406, %v3748
      %v3990 = vadd.f32 %v3408, %v3750
      %v3991 = vadd.f32 %v3483, %v3825
      %v3992 = vadd.f32 %v3485, %v3827
      %v3993 = vadd.f32 %v3560, %v3902
      %v3994 = vadd.f32 %v3562, %v3904
      %v3995 = vadd.f32 %v3637, %v3979
      %v3996 = vadd.f32 %v3639, %v3981
      %v3997 = vadd.f32 %v3412, %v3754
      %v3998 = vadd.f32 %v3414, %v3756
      %v3999 = vadd.f32 %v3489, %v3831
      %v4000 = vadd.f32 %v3491, %v3833
      %v4001 = vadd.f32 %v3566, %v3908
      %v4002 = vadd.f32 %v3568, %v3910
      %v4003 = vadd.f32 %v3643, %v3985
      %v4004 = vadd.f32 %v3645, %v3987
      %4005 = vrot.lane.b32.xlu0 %v2981, 62
      %v4006 = vpop.permute.xlu0 %4005
      %4007 = vrot.lane.b32.xlu0 %v2982, 62
      %v4008 = vpop.permute.xlu0 %4007
      %4009 = vrot.lane.b32.xlu0 %v2983, 62
      %v4010 = vpop.permute.xlu0 %4009
      %4011 = vrot.lane.b32.xlu0 %v2984, 62
      %v4012 = vpop.permute.xlu0 %4011
      %4013 = vrot.lane.b32.xlu0 %v2985, 62
      %v4014 = vpop.permute.xlu0 %4013
      %4015 = vrot.lane.b32.xlu0 %v2986, 62
      %v4016 = vpop.permute.xlu0 %4015
      %4017 = vrot.lane.b32.xlu0 %v2987, 62
      %v4018 = vpop.permute.xlu0 %4017
      %4019 = vrot.lane.b32.xlu0 %v2988, 62
      %v4020 = vpop.permute.xlu0 %4019
      %vm4021 = vcmp.lt.s32.totalorder %v399, 62
      %v4022 = vsel %vm4021, %v4018, %v4020
      %v4023 = vsel %vm4021, %v4016, %v4018
      %v4024 = vsel %vm4021, %v4014, %v4016
      %v4025 = vsel %vm4021, %v4012, %v4014
      %v4026 = vsel %vm4021, %v4010, %v4012
      %v4027 = vsel %vm4021, %v4008, %v4010
      %v4028 = vsel %vm4021, %v4006, %v4008
      %v4029 = vsel %vm4021, %v4020, %v4006
      %s4030 = scalar_lea.vmem %s5, 48
      %v4031 = vld [vmem:[%s4030] sm:$0xff]
      %v4032 = vld [vmem:[%s4030 + $0x8] sm:$0xff]
      %v4034 = vsel %vm411, %v4031, 0
      %v4037 = vsel %vm411, %v4032, 0
      %4039 = vmatprep.subr.mxu0 %v4027
      %4040 = vmatpush1.msra.mxu0 %v4028
      %4041 = vmatprep.subr.mxu0 0.0
      %4042 = vmatpush1.msra.mxu0 0.0
      %4043 = vmatprep.subr.mxu0 0.0
      %4044 = vmatpush1.msra.mxu0 0.0
      %4045 = vmatprep.subr.mxu0 0.0
      %4046 = vmatpush1.msra.mxu0 0.0
      %4047 = vmatprep.subr.mxu0 0.0
      %4048 = vmatpush1.msra.mxu0 0.0
      %4049 = vmatprep.subr.mxu0 0.0
      %4050 = vmatpush1.msra.mxu0 0.0
      %4051 = vmatprep.subr.mxu0 0.0
      %4052 = vmatpush1.msra.mxu0 0.0
      %4053 = vmatprep.subr.mxu0 0.0
      %4054 = vmatpush1.msra.mxu0 0.0
      %4055 = vmatprep.subr.mxu0 0.0
      %4056 = vmatpush1.msra.mxu0 0.0
      %4057 = vmatprep.subr.mxu0 0.0
      %4058 = vmatpush1.msra.mxu0 0.0
      %4059 = vmatprep.subr.mxu0 0.0
      %4060 = vmatpush1.msra.mxu0 0.0
      %4061 = vmatprep.subr.mxu0 0.0
      %4062 = vmatpush1.msra.mxu0 0.0
      %4063 = vmatprep.subr.mxu0 0.0
      %4064 = vmatpush1.msra.mxu0 0.0
      %4065 = vmatprep.subr.mxu0 0.0
      %4066 = vmatpush1.msra.mxu0 0.0
      %4067 = vmatprep.subr.mxu0 0.0
      %4068 = vmatpush1.msra.mxu0 0.0
      %4069 = vmatprep.subr.mxu0 0.0
      %4070 = vmatpush1.msra.mxu0 0.0
      %4071 = vmatprep.subr.mxu0 0.0
      %4072 = vmatpush1.msra.mxu0 0.0
      %4073 = vmatprep.subr.mxu0 0.0
      %4074 = vmatpush1.msra.mxu0 0.0
      %4075 = vmatprep.subr.mxu0 0.0
      %4076 = vmatpush1.msra.mxu0 0.0
      %4077 = vmatprep.subr.mxu0 0.0
      %4078 = vmatpush1.msra.mxu0 0.0
      %4079 = vmatprep.subr.mxu0 0.0
      %4080 = vmatpush1.msra.mxu0 0.0
      %4081 = vmatprep.subr.mxu0 0.0
      %4082 = vmatpush1.msra.mxu0 0.0
      %4083 = vmatprep.subr.mxu0 0.0
      %4084 = vmatpush1.msra.mxu0 0.0
      %4085 = vmatprep.subr.mxu0 0.0
      %4086 = vmatpush1.msra.mxu0 0.0
      %4087 = vmatprep.subr.mxu0 0.0
      %4088 = vmatpush1.msra.mxu0 0.0
      %4089 = vmatprep.subr.mxu0 0.0
      %4090 = vmatpush1.msra.mxu0 0.0
      %4091 = vmatprep.subr.mxu0 0.0
      %4092 = vmatpush1.msra.mxu0 0.0
      %4093 = vmatprep.subr.mxu0 0.0
      %4094 = vmatpush1.msra.mxu0 0.0
      %4095 = vmatprep.subr.mxu0 0.0
      %4096 = vmatpush1.msra.mxu0 0.0
      %4097 = vmatprep.subr.mxu0 0.0
      %4098 = vmatpush1.msra.mxu0 0.0
      %4099 = vmatprep.subr.mxu0 0.0
      %4100 = vmatpush1.msra.mxu0 0.0
      %4101 = vmatprep.subr.mxu0 0.0
      %4102 = vmatpush1.msra.mxu0 0.0
      %4103 = vmatprep.mubr.f32.mxu0 0.0
      %4104 = vmatmul.mubr.f32.gmra.mrb[0].mxu0 %v4034
      %v4105 = vpop.f32.mrb[0].mxu0
      %v4106 = vadd.f32 0.0, %v4105
      %v4107 = vpop.f32.mrb[0].mxu0
      %v4108 = vadd.f32 0.0, %v4107
      %4109 = vmatprep.mubr.f32.mxu0 0.0
      %4110 = vmatmul.mubr.f32.gmra.mrb[0].mxu0 %v4037
      %v4111 = vpop.f32.mrb[0].mxu0
      %v4112 = vadd.f32 0.0, %v4111
      %v4113 = vpop.f32.mrb[0].mxu0
      %v4114 = vadd.f32 0.0, %v4113
      %4115 = vdwg.mxu0
      %4116 = vmatprep.subr.mxu0 %v4025
      %4117 = vmatpush1.msra.mxu0 %v4026
      %4118 = vmatprep.subr.mxu0 0.0
      %4119 = vmatpush1.msra.mxu0 0.0
      %4120 = vmatprep.subr.mxu0 0.0
      %4121 = vmatpush1.msra.mxu0 0.0
      %4122 = vmatprep.subr.mxu0 0.0
      %4123 = vmatpush1.msra.mxu0 0.0
      %4124 = vmatprep.subr.mxu0 0.0
      %4125 = vmatpush1.msra.mxu0 0.0
      %4126 = vmatprep.subr.mxu0 0.0
      %4127 = vmatpush1.msra.mxu0 0.0
      %4128 = vmatprep.subr.mxu0 0.0
      %4129 = vmatpush1.msra.mxu0 0.0
      %4130 = vmatprep.subr.mxu0 0.0
      %4131 = vmatpush1.msra.mxu0 0.0
      %4132 = vmatprep.subr.mxu0 0.0
      %4133 = vmatpush1.msra.mxu0 0.0
      %4134 = vmatprep.subr.mxu0 0.0
      %4135 = vmatpush1.msra.mxu0 0.0
      %4136 = vmatprep.subr.mxu0 0.0
      %4137 = vmatpush1.msra.mxu0 0.0
      %4138 = vmatprep.subr.mxu0 0.0
      %4139 = vmatpush1.msra.mxu0 0.0
      %4140 = vmatprep.subr.mxu0 0.0
      %4141 = vmatpush1.msra.mxu0 0.0
      %4142 = vmatprep.subr.mxu0 0.0
      %4143 = vmatpush1.msra.mxu0 0.0
      %4144 = vmatprep.subr.mxu0 0.0
      %4145 = vmatpush1.msra.mxu0 0.0
      %4146 = vmatprep.subr.mxu0 0.0
      %4147 = vmatpush1.msra.mxu0 0.0
      %4148 = vmatprep.subr.mxu0 0.0
      %4149 = vmatpush1.msra.mxu0 0.0
      %4150 = vmatprep.subr.mxu0 0.0
      %4151 = vmatpush1.msra.mxu0 0.0
      %4152 = vmatprep.subr.mxu0 0.0
      %4153 = vmatpush1.msra.mxu0 0.0
      %4154 = vmatprep.subr.mxu0 0.0
      %4155 = vmatpush1.msra.mxu0 0.0
      %4156 = vmatprep.subr.mxu0 0.0
      %4157 = vmatpush1.msra.mxu0 0.0
      %4158 = vmatprep.subr.mxu0 0.0
      %4159 = vmatpush1.msra.mxu0 0.0
      %4160 = vmatprep.subr.mxu0 0.0
      %4161 = vmatpush1.msra.mxu0 0.0
      %4162 = vmatprep.subr.mxu0 0.0
      %4163 = vmatpush1.msra.mxu0 0.0
      %4164 = vmatprep.subr.mxu0 0.0
      %4165 = vmatpush1.msra.mxu0 0.0
      %4166 = vmatprep.subr.mxu0 0.0
      %4167 = vmatpush1.msra.mxu0 0.0
      %4168 = vmatprep.subr.mxu0 0.0
      %4169 = vmatpush1.msra.mxu0 0.0
      %4170 = vmatprep.subr.mxu0 0.0
      %4171 = vmatpush1.msra.mxu0 0.0
      %4172 = vmatprep.subr.mxu0 0.0
      %4173 = vmatpush1.msra.mxu0 0.0
      %4174 = vmatprep.subr.mxu0 0.0
      %4175 = vmatpush1.msra.mxu0 0.0
      %4176 = vmatprep.subr.mxu0 0.0
      %4177 = vmatpush1.msra.mxu0 0.0
      %4178 = vmatprep.subr.mxu0 0.0
      %4179 = vmatpush1.msra.mxu0 0.0
      %4180 = vmatprep.mubr.f32.mxu0 0.0
      %4181 = vmatmul.mubr.f32.gmra.mrb[0].mxu0 %v4034
      %v4182 = vpop.f32.mrb[0].mxu0
      %v4183 = vadd.f32 0.0, %v4182
      %v4184 = vpop.f32.mrb[0].mxu0
      %v4185 = vadd.f32 0.0, %v4184
      %4186 = vmatprep.mubr.f32.mxu0 0.0
      %4187 = vmatmul.mubr.f32.gmra.mrb[0].mxu0 %v4037
      %v4188 = vpop.f32.mrb[0].mxu0
      %v4189 = vadd.f32 0.0, %v4188
      %v4190 = vpop.f32.mrb[0].mxu0
      %v4191 = vadd.f32 0.0, %v4190
      %4192 = vdwg.mxu0
      %4193 = vmatprep.subr.mxu0 %v4023
      %4194 = vmatpush1.msra.mxu0 %v4024
      %4195 = vmatprep.subr.mxu0 0.0
      %4196 = vmatpush1.msra.mxu0 0.0
      %4197 = vmatprep.subr.mxu0 0.0
      %4198 = vmatpush1.msra.mxu0 0.0
      %4199 = vmatprep.subr.mxu0 0.0
      %4200 = vmatpush1.msra.mxu0 0.0
      %4201 = vmatprep.subr.mxu0 0.0
      %4202 = vmatpush1.msra.mxu0 0.0
      %4203 = vmatprep.subr.mxu0 0.0
      %4204 = vmatpush1.msra.mxu0 0.0
      %4205 = vmatprep.subr.mxu0 0.0
      %4206 = vmatpush1.msra.mxu0 0.0
      %4207 = vmatprep.subr.mxu0 0.0
      %4208 = vmatpush1.msra.mxu0 0.0
      %4209 = vmatprep.subr.mxu0 0.0
      %4210 = vmatpush1.msra.mxu0 0.0
      %4211 = vmatprep.subr.mxu0 0.0
      %4212 = vmatpush1.msra.mxu0 0.0
      %4213 = vmatprep.subr.mxu0 0.0
      %4214 = vmatpush1.msra.mxu0 0.0
      %4215 = vmatprep.subr.mxu0 0.0
      %4216 = vmatpush1.msra.mxu0 0.0
      %4217 = vmatprep.subr.mxu0 0.0
      %4218 = vmatpush1.msra.mxu0 0.0
      %4219 = vmatprep.subr.mxu0 0.0
      %4220 = vmatpush1.msra.mxu0 0.0
      %4221 = vmatprep.subr.mxu0 0.0
      %4222 = vmatpush1.msra.mxu0 0.0
      %4223 = vmatprep.subr.mxu0 0.0
      %4224 = vmatpush1.msra.mxu0 0.0
      %4225 = vmatprep.subr.mxu0 0.0
      %4226 = vmatpush1.msra.mxu0 0.0
      %4227 = vmatprep.subr.mxu0 0.0
      %4228 = vmatpush1.msra.mxu0 0.0
      %4229 = vmatprep.subr.mxu0 0.0
      %4230 = vmatpush1.msra.mxu0 0.0
      %4231 = vmatprep.subr.mxu0 0.0
      %4232 = vmatpush1.msra.mxu0 0.0
      %4233 = vmatprep.subr.mxu0 0.0
      %4234 = vmatpush1.msra.mxu0 0.0
      %4235 = vmatprep.subr.mxu0 0.0
      %4236 = vmatpush1.msra.mxu0 0.0
      %4237 = vmatprep.subr.mxu0 0.0
      %4238 = vmatpush1.msra.mxu0 0.0
      %4239 = vmatprep.subr.mxu0 0.0
      %4240 = vmatpush1.msra.mxu0 0.0
      %4241 = vmatprep.subr.mxu0 0.0
      %4242 = vmatpush1.msra.mxu0 0.0
      %4243 = vmatprep.subr.mxu0 0.0
      %4244 = vmatpush1.msra.mxu0 0.0
      %4245 = vmatprep.subr.mxu0 0.0
      %4246 = vmatpush1.msra.mxu0 0.0
      %4247 = vmatprep.subr.mxu0 0.0
      %4248 = vmatpush1.msra.mxu0 0.0
      %4249 = vmatprep.subr.mxu0 0.0
      %4250 = vmatpush1.msra.mxu0 0.0
      %4251 = vmatprep.subr.mxu0 0.0
      %4252 = vmatpush1.msra.mxu0 0.0
      %4253 = vmatprep.subr.mxu0 0.0
      %4254 = vmatpush1.msra.mxu0 0.0
      %4255 = vmatprep.subr.mxu0 0.0
      %4256 = vmatpush1.msra.mxu0 0.0
      %4257 = vmatprep.mubr.f32.mxu0 0.0
      %4258 = vmatmul.mubr.f32.gmra.mrb[0].mxu0 %v4034
      %v4259 = vpop.f32.mrb[0].mxu0
      %v4260 = vadd.f32 0.0, %v4259
      %v4261 = vpop.f32.mrb[0].mxu0
      %v4262 = vadd.f32 0.0, %v4261
      %4263 = vmatprep.mubr.f32.mxu0 0.0
      %4264 = vmatmul.mubr.f32.gmra.mrb[0].mxu0 %v4037
      %v4265 = vpop.f32.mrb[0].mxu0
      %v4266 = vadd.f32 0.0, %v4265
      %v4267 = vpop.f32.mrb[0].mxu0
      %v4268 = vadd.f32 0.0, %v4267
      %4269 = vdwg.mxu0
      %4270 = vmatprep.subr.mxu0 %v4029
      %4271 = vmatpush1.msra.mxu0 %v4022
      %4272 = vmatprep.subr.mxu0 0.0
      %4273 = vmatpush1.msra.mxu0 0.0
      %4274 = vmatprep.subr.mxu0 0.0
      %4275 = vmatpush1.msra.mxu0 0.0
      %4276 = vmatprep.subr.mxu0 0.0
      %4277 = vmatpush1.msra.mxu0 0.0
      %4278 = vmatprep.subr.mxu0 0.0
      %4279 = vmatpush1.msra.mxu0 0.0
      %4280 = vmatprep.subr.mxu0 0.0
      %4281 = vmatpush1.msra.mxu0 0.0
      %4282 = vmatprep.subr.mxu0 0.0
      %4283 = vmatpush1.msra.mxu0 0.0
      %4284 = vmatprep.subr.mxu0 0.0
      %4285 = vmatpush1.msra.mxu0 0.0
      %4286 = vmatprep.subr.mxu0 0.0
      %4287 = vmatpush1.msra.mxu0 0.0
      %4288 = vmatprep.subr.mxu0 0.0
      %4289 = vmatpush1.msra.mxu0 0.0
      %4290 = vmatprep.subr.mxu0 0.0
      %4291 = vmatpush1.msra.mxu0 0.0
      %4292 = vmatprep.subr.mxu0 0.0
      %4293 = vmatpush1.msra.mxu0 0.0
      %4294 = vmatprep.subr.mxu0 0.0
      %4295 = vmatpush1.msra.mxu0 0.0
      %4296 = vmatprep.subr.mxu0 0.0
      %4297 = vmatpush1.msra.mxu0 0.0
      %4298 = vmatprep.subr.mxu0 0.0
      %4299 = vmatpush1.msra.mxu0 0.0
      %4300 = vmatprep.subr.mxu0 0.0
      %4301 = vmatpush1.msra.mxu0 0.0
      %4302 = vmatprep.subr.mxu0 0.0
      %4303 = vmatpush1.msra.mxu0 0.0
      %4304 = vmatprep.subr.mxu0 0.0
      %4305 = vmatpush1.msra.mxu0 0.0
      %4306 = vmatprep.subr.mxu0 0.0
      %4307 = vmatpush1.msra.mxu0 0.0
      %4308 = vmatprep.subr.mxu0 0.0
      %4309 = vmatpush1.msra.mxu0 0.0
      %4310 = vmatprep.subr.mxu0 0.0
      %4311 = vmatpush1.msra.mxu0 0.0
      %4312 = vmatprep.subr.mxu0 0.0
      %4313 = vmatpush1.msra.mxu0 0.0
      %4314 = vmatprep.subr.mxu0 0.0
      %4315 = vmatpush1.msra.mxu0 0.0
      %4316 = vmatprep.subr.mxu0 0.0
      %4317 = vmatpush1.msra.mxu0 0.0
      %4318 = vmatprep.subr.mxu0 0.0
      %4319 = vmatpush1.msra.mxu0 0.0
      %4320 = vmatprep.subr.mxu0 0.0
      %4321 = vmatpush1.msra.mxu0 0.0
      %4322 = vmatprep.subr.mxu0 0.0
      %4323 = vmatpush1.msra.mxu0 0.0
      %4324 = vmatprep.subr.mxu0 0.0
      %4325 = vmatpush1.msra.mxu0 0.0
      %4326 = vmatprep.subr.mxu0 0.0
      %4327 = vmatpush1.msra.mxu0 0.0
      %4328 = vmatprep.subr.mxu0 0.0
      %4329 = vmatpush1.msra.mxu0 0.0
      %4330 = vmatprep.subr.mxu0 0.0
      %4331 = vmatpush1.msra.mxu0 0.0
      %4332 = vmatprep.subr.mxu0 0.0
      %4333 = vmatpush1.msra.mxu0 0.0
      %4334 = vmatprep.mubr.f32.mxu0 0.0
      %4335 = vmatmul.mubr.f32.gmra.mrb[0].mxu0 %v4034
      %v4336 = vpop.f32.mrb[0].mxu0
      %v4337 = vadd.f32 0.0, %v4336
      %v4338 = vpop.f32.mrb[0].mxu0
      %v4339 = vadd.f32 0.0, %v4338
      %4340 = vmatprep.mubr.f32.mxu0 0.0
      %4341 = vmatmul.mubr.f32.gmra.mrb[0].mxu0 %v4037
      %v4342 = vpop.f32.mrb[0].mxu0
      %v4343 = vadd.f32 0.0, %v4342
      %v4344 = vpop.f32.mrb[0].mxu0
      %v4345 = vadd.f32 0.0, %v4344
      %4346 = vdwg.mxu0
      %v4347 = vadd.f32 %v3989, %v4106
      %v4348 = vadd.f32 %v3990, %v4108
      %v4349 = vadd.f32 %v3991, %v4183
      %v4350 = vadd.f32 %v3992, %v4185
      %v4351 = vadd.f32 %v3993, %v4260
      %v4352 = vadd.f32 %v3994, %v4262
      %v4353 = vadd.f32 %v3995, %v4337
      %v4354 = vadd.f32 %v3996, %v4339
      %v4355 = vadd.f32 %v3997, %v4112
      %v4356 = vadd.f32 %v3998, %v4114
      %v4357 = vadd.f32 %v3999, %v4189
      %v4358 = vadd.f32 %v4000, %v4191
      %v4359 = vadd.f32 %v4001, %v4266
      %v4360 = vadd.f32 %v4002, %v4268
      %v4361 = vadd.f32 %v4003, %v4343
      %v4362 = vadd.f32 %v4004, %v4345
      %v4363 = vld [vmem:[%s6] sm:$0xff]
      %v4364 = vld [vmem:[%s6 + $0x8] sm:$0xff]
      %4366 = vset.pattern.permute.xlu0 0
      %4367 = vperm.xlu0 %4366, %v4363
      %v4368 = vpop.permute.xlu0 %4367
      %4371 = vset.pattern.permute.xlu0 0
      %4372 = vperm.xlu0 %4371, %v4364
      %v4373 = vpop.permute.xlu0 %4372
      %v4375 = vadd.f32 %v4347, %v4368
      %v4376 = vadd.f32 %v4348, %v4368
      %v4377 = vadd.f32 %v4349, %v4368
      %v4378 = vadd.f32 %v4350, %v4368
      %v4379 = vadd.f32 %v4351, %v4368
      %v4380 = vadd.f32 %v4352, %v4368
      %v4381 = vadd.f32 %v4353, %v4368
      %v4382 = vadd.f32 %v4354, %v4368
      %v4383 = vadd.f32 %v4355, %v4373
      %v4384 = vadd.f32 %v4356, %v4373
      %v4385 = vadd.f32 %v4357, %v4373
      %v4386 = vadd.f32 %v4358, %v4373
      %v4387 = vadd.f32 %v4359, %v4373
      %v4388 = vadd.f32 %v4360, %v4373
      %v4389 = vadd.f32 %v4361, %v4373
      %v4390 = vadd.f32 %v4362, %v4373
      %v4391 = vmax.f32 %v4375, 0.0
      %v4392 = vmax.f32 %v4376, 0.0
      %v4393 = vmax.f32 %v4377, 0.0
      %v4394 = vmax.f32 %v4378, 0.0
      %v4395 = vmax.f32 %v4379, 0.0
      %v4396 = vmax.f32 %v4380, 0.0
      %v4397 = vmax.f32 %v4381, 0.0
      %v4398 = vmax.f32 %v4382, 0.0
      %v4399 = vmax.f32 %v4383, 0.0
      %v4400 = vmax.f32 %v4384, 0.0
      %v4401 = vmax.f32 %v4385, 0.0
      %v4402 = vmax.f32 %v4386, 0.0
      %v4403 = vmax.f32 %v4387, 0.0
      %v4404 = vmax.f32 %v4388, 0.0
      %v4405 = vmax.f32 %v4389, 0.0
      %v4406 = vmax.f32 %v4390, 0.0
      %v4407 = vld [vmem:[%s7] sm:$0xff]
      %v4408 = vld [vmem:[%s7 + $0x8] sm:$0xff]
      %4409 = vrot.lane.b32.xlu0 %v4391, 126
      %v4410 = vpop.permute.xlu0 %4409
      %4411 = vrot.lane.b32.xlu0 %v4399, 126
      %v4412 = vpop.permute.xlu0 %4411
      %4413 = vrot.lane.b32.xlu0 %v4392, 126
      %v4414 = vpop.permute.xlu0 %4413
      %4415 = vrot.lane.b32.xlu0 %v4400, 126
      %v4416 = vpop.permute.xlu0 %4415
      %4417 = vrot.lane.b32.xlu0 %v4393, 126
      %v4418 = vpop.permute.xlu0 %4417
      %4419 = vrot.lane.b32.xlu0 %v4401, 126
      %v4420 = vpop.permute.xlu0 %4419
      %4421 = vrot.lane.b32.xlu0 %v4394, 126
      %v4422 = vpop.permute.xlu0 %4421
      %4423 = vrot.lane.b32.xlu0 %v4402, 126
      %v4424 = vpop.permute.xlu0 %4423
      %4425 = vrot.lane.b32.xlu0 %v4395, 126
      %v4426 = vpop.permute.xlu0 %4425
      %4427 = vrot.lane.b32.xlu0 %v4403, 126
      %v4428 = vpop.permute.xlu0 %4427
      %4429 = vrot.lane.b32.xlu0 %v4396, 126
      %v4430 = vpop.permute.xlu0 %4429
      %4431 = vrot.lane.b32.xlu0 %v4404, 126
      %v4432 = vpop.permute.xlu0 %4431
      %4433 = vrot.lane.b32.xlu0 %v4397, 126
      %v4434 = vpop.permute.xlu0 %4433
      %4435 = vrot.lane.b32.xlu0 %v4405, 126
      %v4436 = vpop.permute.xlu0 %4435
      %4437 = vrot.lane.b32.xlu0 %v4398, 126
      %v4438 = vpop.permute.xlu0 %4437
      %4439 = vrot.lane.b32.xlu0 %v4406, 126
      %v4440 = vpop.permute.xlu0 %4439
      %v4441 = vsel %vm3007, %v4434, %v4438
      %v4442 = vsel %vm3007, %v4436, %v4440
      %v4443 = vsel %vm3007, %v4430, %v4434
      %v4444 = vsel %vm3007, %v4432, %v4436
      %v4445 = vsel %vm3007, %v4426, %v4430
      %v4446 = vsel %vm3007, %v4428, %v4432
      %v4447 = vsel %vm3007, %v4422, %v4426
      %v4448 = vsel %vm3007, %v4424, %v4428
      %v4449 = vsel %vm3007, %v4418, %v4422
      %v4450 = vsel %vm3007, %v4420, %v4424
      %v4451 = vsel %vm3007, %v4414, %v4418
      %v4452 = vsel %vm3007, %v4416, %v4420
      %v4453 = vsel %vm3007, %v4410, %v4414
      %v4454 = vsel %vm3007, %v4412, %v4416
      %v4455 = vsel %vm3007, %v4438, %v4410
      %v4456 = vsel %vm3007, %v4440, %v4412
      %s4457 = scalar_lea.vmem %s7, 16
      %v4458 = vld [vmem:[%s4457] sm:$0xff]
      %v4459 = vld [vmem:[%s4457 + $0x8] sm:$0xff]
      %vm4460 = vcmask 130048
      %v4462 = vsel %vm4460, %v4458, 0
      %v4465 = vsel %vm4460, %v4459, 0
      %4467 = vmatprep.subr.mxu0 %v4451
      %4468 = vmatpush1.msra.mxu0 %v4453
      %4469 = vmatprep.subr.mxu0 %v4452
      %4470 = vmatpush1.msra.mxu0 %v4454
      %4471 = vmatprep.subr.mxu0 0.0
      %4472 = vmatpush1.msra.mxu0 0.0
      %4473 = vmatprep.subr.mxu0 0.0
      %4474 = vmatpush1.msra.mxu0 0.0
      %4475 = vmatprep.subr.mxu0 0.0
      %4476 = vmatpush1.msra.mxu0 0.0
      %4477 = vmatprep.subr.mxu0 0.0
      %4478 = vmatpush1.msra.mxu0 0.0
      %4479 = vmatprep.subr.mxu0 0.0
      %4480 = vmatpush1.msra.mxu0 0.0
      %4481 = vmatprep.subr.mxu0 0.0
      %4482 = vmatpush1.msra.mxu0 0.0
      %4483 = vmatprep.subr.mxu0 0.0
      %4484 = vmatpush1.msra.mxu0 0.0
      %4485 = vmatprep.subr.mxu0 0.0
      %4486 = vmatpush1.msra.mxu0 0.0
      %4487 = vmatprep.subr.mxu0 0.0
      %4488 = vmatpush1.msra.mxu0 0.0
      %4489 = vmatprep.subr.mxu0 0.0
      %4490 = vmatpush1.msra.mxu0 0.0
      %4491 = vmatprep.subr.mxu0 0.0
      %4492 = vmatpush1.msra.mxu0 0.0
      %4493 = vmatprep.subr.mxu0 0.0
      %4494 = vmatpush1.msra.mxu0 0.0
      %4495 = vmatprep.subr.mxu0 0.0
      %4496 = vmatpush1.msra.mxu0 0.0
      %4497 = vmatprep.subr.mxu0 0.0
      %4498 = vmatpush1.msra.mxu0 0.0
      %4499 = vmatprep.subr.mxu0 0.0
      %4500 = vmatpush1.msra.mxu0 0.0
      %4501 = vmatprep.subr.mxu0 0.0
      %4502 = vmatpush1.msra.mxu0 0.0
      %4503 = vmatprep.subr.mxu0 0.0
      %4504 = vmatpush1.msra.mxu0 0.0
      %4505 = vmatprep.subr.mxu0 0.0
      %4506 = vmatpush1.msra.mxu0 0.0
      %4507 = vmatprep.subr.mxu0 0.0
      %4508 = vmatpush1.msra.mxu0 0.0
      %4509 = vmatprep.subr.mxu0 0.0
      %4510 = vmatpush1.msra.mxu0 0.0
      %4511 = vmatprep.subr.mxu0 0.0
      %4512 = vmatpush1.msra.mxu0 0.0
      %4513 = vmatprep.subr.mxu0 0.0
      %4514 = vmatpush1.msra.mxu0 0.0
      %4515 = vmatprep.subr.mxu0 0.0
      %4516 = vmatpush1.msra.mxu0 0.0
      %4517 = vmatprep.subr.mxu0 0.0
      %4518 = vmatpush1.msra.mxu0 0.0
      %4519 = vmatprep.subr.mxu0 0.0
      %4520 = vmatpush1.msra.mxu0 0.0
      %4521 = vmatprep.subr.mxu0 0.0
      %4522 = vmatpush1.msra.mxu0 0.0
      %4523 = vmatprep.subr.mxu0 0.0
      %4524 = vmatpush1.msra.mxu0 0.0
      %4525 = vmatprep.subr.mxu0 0.0
      %4526 = vmatpush1.msra.mxu0 0.0
      %4527 = vmatprep.subr.mxu0 0.0
      %4528 = vmatpush1.msra.mxu0 0.0
      %4529 = vmatprep.subr.mxu0 0.0
      %4530 = vmatpush1.msra.mxu0 0.0
      %4531 = vmatprep.mubr.f32.mxu0 0.0
      %4532 = vmatmul.mubr.f32.gmra.mrb[0].mxu0 %v4462
      %v4533 = vpop.f32.mrb[0].mxu0
      %v4534 = vadd.f32 0.0, %v4533
      %v4535 = vpop.f32.mrb[0].mxu0
      %v4536 = vadd.f32 0.0, %v4535
      %4537 = vmatprep.mubr.f32.mxu0 0.0
      %4538 = vmatmul.mubr.f32.gmra.mrb[0].mxu0 %v4465
      %v4539 = vpop.f32.mrb[0].mxu0
      %v4540 = vadd.f32 0.0, %v4539
      %v4541 = vpop.f32.mrb[0].mxu0
      %v4542 = vadd.f32 0.0, %v4541
      %4543 = vdwg.mxu0
      %4544 = vmatprep.subr.mxu0 %v4447
      %4545 = vmatpush1.msra.mxu0 %v4449
      %4546 = vmatprep.subr.mxu0 %v4448
      %4547 = vmatpush1.msra.mxu0 %v4450
      %4548 = vmatprep.subr.mxu0 0.0
      %4549 = vmatpush1.msra.mxu0 0.0
      %4550 = vmatprep.subr.mxu0 0.0
      %4551 = vmatpush1.msra.mxu0 0.0
      %4552 = vmatprep.subr.mxu0 0.0
      %4553 = vmatpush1.msra.mxu0 0.0
      %4554 = vmatprep.subr.mxu0 0.0
      %4555 = vmatpush1.msra.mxu0 0.0
      %4556 = vmatprep.subr.mxu0 0.0
      %4557 = vmatpush1.msra.mxu0 0.0
      %4558 = vmatprep.subr.mxu0 0.0
      %4559 = vmatpush1.msra.mxu0 0.0
      %4560 = vmatprep.subr.mxu0 0.0
      %4561 = vmatpush1.msra.mxu0 0.0
      %4562 = vmatprep.subr.mxu0 0.0
      %4563 = vmatpush1.msra.mxu0 0.0
      %4564 = vmatprep.subr.mxu0 0.0
      %4565 = vmatpush1.msra.mxu0 0.0
      %4566 = vmatprep.subr.mxu0 0.0
      %4567 = vmatpush1.msra.mxu0 0.0
      %4568 = vmatprep.subr.mxu0 0.0
      %4569 = vmatpush1.msra.mxu0 0.0
      %4570 = vmatprep.subr.mxu0 0.0
      %4571 = vmatpush1.msra.mxu0 0.0
      %4572 = vmatprep.subr.mxu0 0.0
      %4573 = vmatpush1.msra.mxu0 0.0
      %4574 = vmatprep.subr.mxu0 0.0
      %4575 = vmatpush1.msra.mxu0 0.0
      %4576 = vmatprep.subr.mxu0 0.0
      %4577 = vmatpush1.msra.mxu0 0.0
      %4578 = vmatprep.subr.mxu0 0.0
      %4579 = vmatpush1.msra.mxu0 0.0
      %4580 = vmatprep.subr.mxu0 0.0
      %4581 = vmatpush1.msra.mxu0 0.0
      %4582 = vmatprep.subr.mxu0 0.0
      %4583 = vmatpush1.msra.mxu0 0.0
      %4584 = vmatprep.subr.mxu0 0.0
      %4585 = vmatpush1.msra.mxu0 0.0
      %4586 = vmatprep.subr.mxu0 0.0
      %4587 = vmatpush1.msra.mxu0 0.0
      %4588 = vmatprep.subr.mxu0 0.0
      %4589 = vmatpush1.msra.mxu0 0.0
      %4590 = vmatprep.subr.mxu0 0.0
      %4591 = vmatpush1.msra.mxu0 0.0
      %4592 = vmatprep.subr.mxu0 0.0
      %4593 = vmatpush1.msra.mxu0 0.0
      %4594 = vmatprep.subr.mxu0 0.0
      %4595 = vmatpush1.msra.mxu0 0.0
      %4596 = vmatprep.subr.mxu0 0.0
      %4597 = vmatpush1.msra.mxu0 0.0
      %4598 = vmatprep.subr.mxu0 0.0
      %4599 = vmatpush1.msra.mxu0 0.0
      %4600 = vmatprep.subr.mxu0 0.0
      %4601 = vmatpush1.msra.mxu0 0.0
      %4602 = vmatprep.subr.mxu0 0.0
      %4603 = vmatpush1.msra.mxu0 0.0
      %4604 = vmatprep.subr.mxu0 0.0
      %4605 = vmatpush1.msra.mxu0 0.0
      %4606 = vmatprep.subr.mxu0 0.0
      %4607 = vmatpush1.msra.mxu0 0.0
      %4608 = vmatprep.mubr.f32.mxu0 0.0
      %4609 = vmatmul.mubr.f32.gmra.mrb[0].mxu0 %v4462
      %v4610 = vpop.f32.mrb[0].mxu0
      %v4611 = vadd.f32 0.0, %v4610
      %v4612 = vpop.f32.mrb[0].mxu0
      %v4613 = vadd.f32 0.0, %v4612
      %4614 = vmatprep.mubr.f32.mxu0 0.0
      %4615 = vmatmul.mubr.f32.gmra.mrb[0].mxu0 %v4465
      %v4616 = vpop.f32.mrb[0].mxu0
      %v4617 = vadd.f32 0.0, %v4616
      %v4618 = vpop.f32.mrb[0].mxu0
      %v4619 = vadd.f32 0.0, %v4618
      %4620 = vdwg.mxu0
      %4621 = vmatprep.subr.mxu0 %v4443
      %4622 = vmatpush1.msra.mxu0 %v4445
      %4623 = vmatprep.subr.mxu0 %v4444
      %4624 = vmatpush1.msra.mxu0 %v4446
      %4625 = vmatprep.subr.mxu0 0.0
      %4626 = vmatpush1.msra.mxu0 0.0
      %4627 = vmatprep.subr.mxu0 0.0
      %4628 = vmatpush1.msra.mxu0 0.0
      %4629 = vmatprep.subr.mxu0 0.0
      %4630 = vmatpush1.msra.mxu0 0.0
      %4631 = vmatprep.subr.mxu0 0.0
      %4632 = vmatpush1.msra.mxu0 0.0
      %4633 = vmatprep.subr.mxu0 0.0
      %4634 = vmatpush1.msra.mxu0 0.0
      %4635 = vmatprep.subr.mxu0 0.0
      %4636 = vmatpush1.msra.mxu0 0.0
      %4637 = vmatprep.subr.mxu0 0.0
      %4638 = vmatpush1.msra.mxu0 0.0
      %4639 = vmatprep.subr.mxu0 0.0
      %4640 = vmatpush1.msra.mxu0 0.0
      %4641 = vmatprep.subr.mxu0 0.0
      %4642 = vmatpush1.msra.mxu0 0.0
      %4643 = vmatprep.subr.mxu0 0.0
      %4644 = vmatpush1.msra.mxu0 0.0
      %4645 = vmatprep.subr.mxu0 0.0
      %4646 = vmatpush1.msra.mxu0 0.0
      %4647 = vmatprep.subr.mxu0 0.0
      %4648 = vmatpush1.msra.mxu0 0.0
      %4649 = vmatprep.subr.mxu0 0.0
      %4650 = vmatpush1.msra.mxu0 0.0
      %4651 = vmatprep.subr.mxu0 0.0
      %4652 = vmatpush1.msra.mxu0 0.0
      %4653 = vmatprep.subr.mxu0 0.0
      %4654 = vmatpush1.msra.mxu0 0.0
      %4655 = vmatprep.subr.mxu0 0.0
      %4656 = vmatpush1.msra.mxu0 0.0
      %4657 = vmatprep.subr.mxu0 0.0
      %4658 = vmatpush1.msra.mxu0 0.0
      %4659 = vmatprep.subr.mxu0 0.0
      %4660 = vmatpush1.msra.mxu0 0.0
      %4661 = vmatprep.subr.mxu0 0.0
      %4662 = vmatpush1.msra.mxu0 0.0
      %4663 = vmatprep.subr.mxu0 0.0
      %4664 = vmatpush1.msra.mxu0 0.0
      %4665 = vmatprep.subr.mxu0 0.0
      %4666 = vmatpush1.msra.mxu0 0.0
      %4667 = vmatprep.subr.mxu0 0.0
      %4668 = vmatpush1.msra.mxu0 0.0
      %4669 = vmatprep.subr.mxu0 0.0
      %4670 = vmatpush1.msra.mxu0 0.0
      %4671 = vmatprep.subr.mxu0 0.0
      %4672 = vmatpush1.msra.mxu0 0.0
      %4673 = vmatprep.subr.mxu0 0.0
      %4674 = vmatpush1.msra.mxu0 0.0
      %4675 = vmatprep.subr.mxu0 0.0
      %4676 = vmatpush1.msra.mxu0 0.0
      %4677 = vmatprep.subr.mxu0 0.0
      %4678 = vmatpush1.msra.mxu0 0.0
      %4679 = vmatprep.subr.mxu0 0.0
      %4680 = vmatpush1.msra.mxu0 0.0
      %4681 = vmatprep.subr.mxu0 0.0
      %4682 = vmatpush1.msra.mxu0 0.0
      %4683 = vmatprep.subr.mxu0 0.0
      %4684 = vmatpush1.msra.mxu0 0.0
      %4685 = vmatprep.mubr.f32.mxu0 0.0
      %4686 = vmatmul.mubr.f32.gmra.mrb[0].mxu0 %v4462
      %v4687 = vpop.f32.mrb[0].mxu0
      %v4688 = vadd.f32 0.0, %v4687
      %v4689 = vpop.f32.mrb[0].mxu0
      %v4690 = vadd.f32 0.0, %v4689
      %4691 = vmatprep.mubr.f32.mxu0 0.0
      %4692 = vmatmul.mubr.f32.gmra.mrb[0].mxu0 %v4465
      %v4693 = vpop.f32.mrb[0].mxu0
      %v4694 = vadd.f32 0.0, %v4693
      %v4695 = vpop.f32.mrb[0].mxu0
      %v4696 = vadd.f32 0.0, %v4695
      %4697 = vdwg.mxu0
      %4698 = vmatprep.subr.mxu0 %v4455
      %4699 = vmatpush1.msra.mxu0 %v4441
      %4700 = vmatprep.subr.mxu0 %v4456
      %4701 = vmatpush1.msra.mxu0 %v4442
      %4702 = vmatprep.subr.mxu0 0.0
      %4703 = vmatpush1.msra.mxu0 0.0
      %4704 = vmatprep.subr.mxu0 0.0
      %4705 = vmatpush1.msra.mxu0 0.0
      %4706 = vmatprep.subr.mxu0 0.0
      %4707 = vmatpush1.msra.mxu0 0.0
      %4708 = vmatprep.subr.mxu0 0.0
      %4709 = vmatpush1.msra.mxu0 0.0
      %4710 = vmatprep.subr.mxu0 0.0
      %4711 = vmatpush1.msra.mxu0 0.0
      %4712 = vmatprep.subr.mxu0 0.0
      %4713 = vmatpush1.msra.mxu0 0.0
      %4714 = vmatprep.subr.mxu0 0.0
      %4715 = vmatpush1.msra.mxu0 0.0
      %4716 = vmatprep.subr.mxu0 0.0
      %4717 = vmatpush1.msra.mxu0 0.0
      %4718 = vmatprep.subr.mxu0 0.0
      %4719 = vmatpush1.msra.mxu0 0.0
      %4720 = vmatprep.subr.mxu0 0.0
      %4721 = vmatpush1.msra.mxu0 0.0
      %4722 = vmatprep.subr.mxu0 0.0
      %4723 = vmatpush1.msra.mxu0 0.0
      %4724 = vmatprep.subr.mxu0 0.0
      %4725 = vmatpush1.msra.mxu0 0.0
      %4726 = vmatprep.subr.mxu0 0.0
      %4727 = vmatpush1.msra.mxu0 0.0
      %4728 = vmatprep.subr.mxu0 0.0
      %4729 = vmatpush1.msra.mxu0 0.0
      %4730 = vmatprep.subr.mxu0 0.0
      %4731 = vmatpush1.msra.mxu0 0.0
      %4732 = vmatprep.subr.mxu0 0.0
      %4733 = vmatpush1.msra.mxu0 0.0
      %4734 = vmatprep.subr.mxu0 0.0
      %4735 = vmatpush1.msra.mxu0 0.0
      %4736 = vmatprep.subr.mxu0 0.0
      %4737 = vmatpush1.msra.mxu0 0.0
      %4738 = vmatprep.subr.mxu0 0.0
      %4739 = vmatpush1.msra.mxu0 0.0
      %4740 = vmatprep.subr.mxu0 0.0
      %4741 = vmatpush1.msra.mxu0 0.0
      %4742 = vmatprep.subr.mxu0 0.0
      %4743 = vmatpush1.msra.mxu0 0.0
      %4744 = vmatprep.subr.mxu0 0.0
      %4745 = vmatpush1.msra.mxu0 0.0
      %4746 = vmatprep.subr.mxu0 0.0
      %4747 = vmatpush1.msra.mxu0 0.0
      %4748 = vmatprep.subr.mxu0 0.0
      %4749 = vmatpush1.msra.mxu0 0.0
      %4750 = vmatprep.subr.mxu0 0.0
      %4751 = vmatpush1.msra.mxu0 0.0
      %4752 = vmatprep.subr.mxu0 0.0
      %4753 = vmatpush1.msra.mxu0 0.0
      %4754 = vmatprep.subr.mxu0 0.0
      %4755 = vmatpush1.msra.mxu0 0.0
      %4756 = vmatprep.subr.mxu0 0.0
      %4757 = vmatpush1.msra.mxu0 0.0
      %4758 = vmatprep.subr.mxu0 0.0
      %4759 = vmatpush1.msra.mxu0 0.0
      %4760 = vmatprep.subr.mxu0 0.0
      %4761 = vmatpush1.msra.mxu0 0.0
      %4762 = vmatprep.mubr.f32.mxu0 0.0
      %4763 = vmatmul.mubr.f32.gmra.mrb[0].mxu0 %v4462
      %v4764 = vpop.f32.mrb[0].mxu0
      %v4765 = vadd.f32 0.0, %v4764
      %v4766 = vpop.f32.mrb[0].mxu0
      %v4767 = vadd.f32 0.0, %v4766
      %4768 = vmatprep.mubr.f32.mxu0 0.0
      %4769 = vmatmul.mubr.f32.gmra.mrb[0].mxu0 %v4465
      %v4770 = vpop.f32.mrb[0].mxu0
      %v4771 = vadd.f32 0.0, %v4770
      %v4772 = vpop.f32.mrb[0].mxu0
      %v4773 = vadd.f32 0.0, %v4772
      %4774 = vdwg.mxu0
      %v4776 = vsel %vm4460, %v4407, 0
      %v4779 = vsel %vm4460, %v4408, 0
      %4781 = vmatprep.subr.mxu0 %v4392
      %4782 = vmatpush1.msra.mxu0 %v4391
      %4783 = vmatprep.subr.mxu0 %v4400
      %4784 = vmatpush1.msra.mxu0 %v4399
      %4785 = vmatprep.subr.mxu0 0.0
      %4786 = vmatpush1.msra.mxu0 0.0
      %4787 = vmatprep.subr.mxu0 0.0
      %4788 = vmatpush1.msra.mxu0 0.0
      %4789 = vmatprep.subr.mxu0 0.0
      %4790 = vmatpush1.msra.mxu0 0.0
      %4791 = vmatprep.subr.mxu0 0.0
      %4792 = vmatpush1.msra.mxu0 0.0
      %4793 = vmatprep.subr.mxu0 0.0
      %4794 = vmatpush1.msra.mxu0 0.0
      %4795 = vmatprep.subr.mxu0 0.0
      %4796 = vmatpush1.msra.mxu0 0.0
      %4797 = vmatprep.subr.mxu0 0.0
      %4798 = vmatpush1.msra.mxu0 0.0
      %4799 = vmatprep.subr.mxu0 0.0
      %4800 = vmatpush1.msra.mxu0 0.0
      %4801 = vmatprep.subr.mxu0 0.0
      %4802 = vmatpush1.msra.mxu0 0.0
      %4803 = vmatprep.subr.mxu0 0.0
      %4804 = vmatpush1.msra.mxu0 0.0
      %4805 = vmatprep.subr.mxu0 0.0
      %4806 = vmatpush1.msra.mxu0 0.0
      %4807 = vmatprep.subr.mxu0 0.0
      %4808 = vmatpush1.msra.mxu0 0.0
      %4809 = vmatprep.subr.mxu0 0.0
      %4810 = vmatpush1.msra.mxu0 0.0
      %4811 = vmatprep.subr.mxu0 0.0
      %4812 = vmatpush1.msra.mxu0 0.0
      %4813 = vmatprep.subr.mxu0 0.0
      %4814 = vmatpush1.msra.mxu0 0.0
      %4815 = vmatprep.subr.mxu0 0.0
      %4816 = vmatpush1.msra.mxu0 0.0
      %4817 = vmatprep.subr.mxu0 0.0
      %4818 = vmatpush1.msra.mxu0 0.0
      %4819 = vmatprep.subr.mxu0 0.0
      %4820 = vmatpush1.msra.mxu0 0.0
      %4821 = vmatprep.subr.mxu0 0.0
      %4822 = vmatpush1.msra.mxu0 0.0
      %4823 = vmatprep.subr.mxu0 0.0
      %4824 = vmatpush1.msra.mxu0 0.0
      %4825 = vmatprep.subr.mxu0 0.0
      %4826 = vmatpush1.msra.mxu0 0.0
      %4827 = vmatprep.subr.mxu0 0.0
      %4828 = vmatpush1.msra.mxu0 0.0
      %4829 = vmatprep.subr.mxu0 0.0
      %4830 = vmatpush1.msra.mxu0 0.0
      %4831 = vmatprep.subr.mxu0 0.0
      %4832 = vmatpush1.msra.mxu0 0.0
      %4833 = vmatprep.subr.mxu0 0.0
      %4834 = vmatpush1.msra.mxu0 0.0
      %4835 = vmatprep.subr.mxu0 0.0
      %4836 = vmatpush1.msra.mxu0 0.0
      %4837 = vmatprep.subr.mxu0 0.0
      %4838 = vmatpush1.msra.mxu0 0.0
      %4839 = vmatprep.subr.mxu0 0.0
      %4840 = vmatpush1.msra.mxu0 0.0
      %4841 = vmatprep.subr.mxu0 0.0
      %4842 = vmatpush1.msra.mxu0 0.0
      %4843 = vmatprep.subr.mxu0 0.0
      %4844 = vmatpush1.msra.mxu0 0.0
      %4845 = vmatprep.mubr.f32.mxu0 0.0
      %4846 = vmatmul.mubr.f32.gmra.mrb[0].mxu0 %v4776
      %v4847 = vpop.f32.mrb[0].mxu0
      %v4848 = vadd.f32 %v4534, %v4847
      %v4849 = vpop.f32.mrb[0].mxu0
      %v4850 = vadd.f32 %v4536, %v4849
      %4851 = vmatprep.mubr.f32.mxu0 0.0
      %4852 = vmatmul.mubr.f32.gmra.mrb[0].mxu0 %v4779
      %v4853 = vpop.f32.mrb[0].mxu0
      %v4854 = vadd.f32 %v4540, %v4853
      %v4855 = vpop.f32.mrb[0].mxu0
      %v4856 = vadd.f32 %v4542, %v4855
      %4857 = vdwg.mxu0
      %4858 = vmatprep.subr.mxu0 %v4394
      %4859 = vmatpush1.msra.mxu0 %v4393
      %4860 = vmatprep.subr.mxu0 %v4402
      %4861 = vmatpush1.msra.mxu0 %v4401
      %4862 = vmatprep.subr.mxu0 0.0
      %4863 = vmatpush1.msra.mxu0 0.0
      %4864 = vmatprep.subr.mxu0 0.0
      %4865 = vmatpush1.msra.mxu0 0.0
      %4866 = vmatprep.subr.mxu0 0.0
      %4867 = vmatpush1.msra.mxu0 0.0
      %4868 = vmatprep.subr.mxu0 0.0
      %4869 = vmatpush1.msra.mxu0 0.0
      %4870 = vmatprep.subr.mxu0 0.0
      %4871 = vmatpush1.msra.mxu0 0.0
      %4872 = vmatprep.subr.mxu0 0.0
      %4873 = vmatpush1.msra.mxu0 0.0
      %4874 = vmatprep.subr.mxu0 0.0
      %4875 = vmatpush1.msra.mxu0 0.0
      %4876 = vmatprep.subr.mxu0 0.0
      %4877 = vmatpush1.msra.mxu0 0.0
      %4878 = vmatprep.subr.mxu0 0.0
      %4879 = vmatpush1.msra.mxu0 0.0
      %4880 = vmatprep.subr.mxu0 0.0
      %4881 = vmatpush1.msra.mxu0 0.0
      %4882 = vmatprep.subr.mxu0 0.0
      %4883 = vmatpush1.msra.mxu0 0.0
      %4884 = vmatprep.subr.mxu0 0.0
      %4885 = vmatpush1.msra.mxu0 0.0
      %4886 = vmatprep.subr.mxu0 0.0
      %4887 = vmatpush1.msra.mxu0 0.0
      %4888 = vmatprep.subr.mxu0 0.0
      %4889 = vmatpush1.msra.mxu0 0.0
      %4890 = vmatprep.subr.mxu0 0.0
      %4891 = vmatpush1.msra.mxu0 0.0
      %4892 = vmatprep.subr.mxu0 0.0
      %4893 = vmatpush1.msra.mxu0 0.0
      %4894 = vmatprep.subr.mxu0 0.0
      %4895 = vmatpush1.msra.mxu0 0.0
      %4896 = vmatprep.subr.mxu0 0.0
      %4897 = vmatpush1.msra.mxu0 0.0
      %4898 = vmatprep.subr.mxu0 0.0
      %4899 = vmatpush1.msra.mxu0 0.0
      %4900 = vmatprep.subr.mxu0 0.0
      %4901 = vmatpush1.msra.mxu0 0.0
      %4902 = vmatprep.subr.mxu0 0.0
      %4903 = vmatpush1.msra.mxu0 0.0
      %4904 = vmatprep.subr.mxu0 0.0
      %4905 = vmatpush1.msra.mxu0 0.0
      %4906 = vmatprep.subr.mxu0 0.0
      %4907 = vmatpush1.msra.mxu0 0.0
      %4908 = vmatprep.subr.mxu0 0.0
      %4909 = vmatpush1.msra.mxu0 0.0
      %4910 = vmatprep.subr.mxu0 0.0
      %4911 = vmatpush1.msra.mxu0 0.0
      %4912 = vmatprep.subr.mxu0 0.0
      %4913 = vmatpush1.msra.mxu0 0.0
      %4914 = vmatprep.subr.mxu0 0.0
      %4915 = vmatpush1.msra.mxu0 0.0
      %4916 = vmatprep.subr.mxu0 0.0
      %4917 = vmatpush1.msra.mxu0 0.0
      %4918 = vmatprep.subr.mxu0 0.0
      %4919 = vmatpush1.msra.mxu0 0.0
      %4920 = vmatprep.subr.mxu0 0.0
      %4921 = vmatpush1.msra.mxu0 0.0
      %4922 = vmatprep.mubr.f32.mxu0 0.0
      %4923 = vmatmul.mubr.f32.gmra.mrb[0].mxu0 %v4776
      %v4924 = vpop.f32.mrb[0].mxu0
      %v4925 = vadd.f32 %v4611, %v4924
      %v4926 = vpop.f32.mrb[0].mxu0
      %v4927 = vadd.f32 %v4613, %v4926
      %4928 = vmatprep.mubr.f32.mxu0 0.0
      %4929 = vmatmul.mubr.f32.gmra.mrb[0].mxu0 %v4779
      %v4930 = vpop.f32.mrb[0].mxu0
      %v4931 = vadd.f32 %v4617, %v4930
      %v4932 = vpop.f32.mrb[0].mxu0
      %v4933 = vadd.f32 %v4619, %v4932
      %4934 = vdwg.mxu0
      %4935 = vmatprep.subr.mxu0 %v4396
      %4936 = vmatpush1.msra.mxu0 %v4395
      %4937 = vmatprep.subr.mxu0 %v4404
      %4938 = vmatpush1.msra.mxu0 %v4403
      %4939 = vmatprep.subr.mxu0 0.0
      %4940 = vmatpush1.msra.mxu0 0.0
      %4941 = vmatprep.subr.mxu0 0.0
      %4942 = vmatpush1.msra.mxu0 0.0
      %4943 = vmatprep.subr.mxu0 0.0
      %4944 = vmatpush1.msra.mxu0 0.0
      %4945 = vmatprep.subr.mxu0 0.0
      %4946 = vmatpush1.msra.mxu0 0.0
      %4947 = vmatprep.subr.mxu0 0.0
      %4948 = vmatpush1.msra.mxu0 0.0
      %4949 = vmatprep.subr.mxu0 0.0
      %4950 = vmatpush1.msra.mxu0 0.0
      %4951 = vmatprep.subr.mxu0 0.0
      %4952 = vmatpush1.msra.mxu0 0.0
      %4953 = vmatprep.subr.mxu0 0.0
      %4954 = vmatpush1.msra.mxu0 0.0
      %4955 = vmatprep.subr.mxu0 0.0
      %4956 = vmatpush1.msra.mxu0 0.0
      %4957 = vmatprep.subr.mxu0 0.0
      %4958 = vmatpush1.msra.mxu0 0.0
      %4959 = vmatprep.subr.mxu0 0.0
      %4960 = vmatpush1.msra.mxu0 0.0
      %4961 = vmatprep.subr.mxu0 0.0
      %4962 = vmatpush1.msra.mxu0 0.0
      %4963 = vmatprep.subr.mxu0 0.0
      %4964 = vmatpush1.msra.mxu0 0.0
      %4965 = vmatprep.subr.mxu0 0.0
      %4966 = vmatpush1.msra.mxu0 0.0
      %4967 = vmatprep.subr.mxu0 0.0
      %4968 = vmatpush1.msra.mxu0 0.0
      %4969 = vmatprep.subr.mxu0 0.0
      %4970 = vmatpush1.msra.mxu0 0.0
      %4971 = vmatprep.subr.mxu0 0.0
      %4972 = vmatpush1.msra.mxu0 0.0
      %4973 = vmatprep.subr.mxu0 0.0
      %4974 = vmatpush1.msra.mxu0 0.0
      %4975 = vmatprep.subr.mxu0 0.0
      %4976 = vmatpush1.msra.mxu0 0.0
      %4977 = vmatprep.subr.mxu0 0.0
      %4978 = vmatpush1.msra.mxu0 0.0
      %4979 = vmatprep.subr.mxu0 0.0
      %4980 = vmatpush1.msra.mxu0 0.0
      %4981 = vmatprep.subr.mxu0 0.0
      %4982 = vmatpush1.msra.mxu0 0.0
      %4983 = vmatprep.subr.mxu0 0.0
      %4984 = vmatpush1.msra.mxu0 0.0
      %4985 = vmatprep.subr.mxu0 0.0
      %4986 = vmatpush1.msra.mxu0 0.0
      %4987 = vmatprep.subr.mxu0 0.0
      %4988 = vmatpush1.msra.mxu0 0.0
      %4989 = vmatprep.subr.mxu0 0.0
      %4990 = vmatpush1.msra.mxu0 0.0
      %4991 = vmatprep.subr.mxu0 0.0
      %4992 = vmatpush1.msra.mxu0 0.0
      %4993 = vmatprep.subr.mxu0 0.0
      %4994 = vmatpush1.msra.mxu0 0.0
      %4995 = vmatprep.subr.mxu0 0.0
      %4996 = vmatpush1.msra.mxu0 0.0
      %4997 = vmatprep.subr.mxu0 0.0
      %4998 = vmatpush1.msra.mxu0 0.0
      %4999 = vmatprep.mubr.f32.mxu0 0.0
      %5000 = vmatmul.mubr.f32.gmra.mrb[0].mxu0 %v4776
      %v5001 = vpop.f32.mrb[0].mxu0
      %v5002 = vadd.f32 %v4688, %v5001
      %v5003 = vpop.f32.mrb[0].mxu0
      %v5004 = vadd.f32 %v4690, %v5003
      %5005 = vmatprep.mubr.f32.mxu0 0.0
      %5006 = vmatmul.mubr.f32.gmra.mrb[0].mxu0 %v4779
      %v5007 = vpop.f32.mrb[0].mxu0
      %v5008 = vadd.f32 %v4694, %v5007
      %v5009 = vpop.f32.mrb[0].mxu0
      %v5010 = vadd.f32 %v4696, %v5009
      %5011 = vdwg.mxu0
      %5012 = vmatprep.subr.mxu0 %v4398
      %5013 = vmatpush1.msra.mxu0 %v4397
      %5014 = vmatprep.subr.mxu0 %v4406
      %5015 = vmatpush1.msra.mxu0 %v4405
      %5016 = vmatprep.subr.mxu0 0.0
      %5017 = vmatpush1.msra.mxu0 0.0
      %5018 = vmatprep.subr.mxu0 0.0
      %5019 = vmatpush1.msra.mxu0 0.0
      %5020 = vmatprep.subr.mxu0 0.0
      %5021 = vmatpush1.msra.mxu0 0.0
      %5022 = vmatprep.subr.mxu0 0.0
      %5023 = vmatpush1.msra.mxu0 0.0
      %5024 = vmatprep.subr.mxu0 0.0
      %5025 = vmatpush1.msra.mxu0 0.0
      %5026 = vmatprep.subr.mxu0 0.0
      %5027 = vmatpush1.msra.mxu0 0.0
      %5028 = vmatprep.subr.mxu0 0.0
      %5029 = vmatpush1.msra.mxu0 0.0
      %5030 = vmatprep.subr.mxu0 0.0
      %5031 = vmatpush1.msra.mxu0 0.0
      %5032 = vmatprep.subr.mxu0 0.0
      %5033 = vmatpush1.msra.mxu0 0.0
      %5034 = vmatprep.subr.mxu0 0.0
      %5035 = vmatpush1.msra.mxu0 0.0
      %5036 = vmatprep.subr.mxu0 0.0
      %5037 = vmatpush1.msra.mxu0 0.0
      %5038 = vmatprep.subr.mxu0 0.0
      %5039 = vmatpush1.msra.mxu0 0.0
      %5040 = vmatprep.subr.mxu0 0.0
      %5041 = vmatpush1.msra.mxu0 0.0
      %5042 = vmatprep.subr.mxu0 0.0
      %5043 = vmatpush1.msra.mxu0 0.0
      %5044 = vmatprep.subr.mxu0 0.0
      %5045 = vmatpush1.msra.mxu0 0.0
      %5046 = vmatprep.subr.mxu0 0.0
      %5047 = vmatpush1.msra.mxu0 0.0
      %5048 = vmatprep.subr.mxu0 0.0
      %5049 = vmatpush1.msra.mxu0 0.0
      %5050 = vmatprep.subr.mxu0 0.0
      %5051 = vmatpush1.msra.mxu0 0.0
      %5052 = vmatprep.subr.mxu0 0.0
      %5053 = vmatpush1.msra.mxu0 0.0
      %5054 = vmatprep.subr.mxu0 0.0
      %5055 = vmatpush1.msra.mxu0 0.0
      %5056 = vmatprep.subr.mxu0 0.0
      %5057 = vmatpush1.msra.mxu0 0.0
      %5058 = vmatprep.subr.mxu0 0.0
      %5059 = vmatpush1.msra.mxu0 0.0
      %5060 = vmatprep.subr.mxu0 0.0
      %5061 = vmatpush1.msra.mxu0 0.0
      %5062 = vmatprep.subr.mxu0 0.0
      %5063 = vmatpush1.msra.mxu0 0.0
      %5064 = vmatprep.subr.mxu0 0.0
      %5065 = vmatpush1.msra.mxu0 0.0
      %5066 = vmatprep.subr.mxu0 0.0
      %5067 = vmatpush1.msra.mxu0 0.0
      %5068 = vmatprep.subr.mxu0 0.0
      %5069 = vmatpush1.msra.mxu0 0.0
      %5070 = vmatprep.subr.mxu0 0.0
      %5071 = vmatpush1.msra.mxu0 0.0
      %5072 = vmatprep.subr.mxu0 0.0
      %5073 = vmatpush1.msra.mxu0 0.0
      %5074 = vmatprep.subr.mxu0 0.0
      %5075 = vmatpush1.msra.mxu0 0.0
      %5076 = vmatprep.mubr.f32.mxu0 0.0
      %5077 = vmatmul.mubr.f32.gmra.mrb[0].mxu0 %v4776
      %v5078 = vpop.f32.mrb[0].mxu0
      %v5079 = vadd.f32 %v4765, %v5078
      %v5080 = vpop.f32.mrb[0].mxu0
      %v5081 = vadd.f32 %v4767, %v5080
      %5082 = vmatprep.mubr.f32.mxu0 0.0
      %5083 = vmatmul.mubr.f32.gmra.mrb[0].mxu0 %v4779
      %v5084 = vpop.f32.mrb[0].mxu0
      %v5085 = vadd.f32 %v4771, %v5084
      %v5086 = vpop.f32.mrb[0].mxu0
      %v5087 = vadd.f32 %v4773, %v5086
      %5088 = vdwg.mxu0
      %5089 = vrot.lane.b32.xlu0 %v4391, 64
      %v5090 = vpop.permute.xlu0 %5089
      %5091 = vrot.lane.b32.xlu0 %v4399, 64
      %v5092 = vpop.permute.xlu0 %5091
      %5093 = vrot.lane.b32.xlu0 %v4392, 64
      %v5094 = vpop.permute.xlu0 %5093
      %5095 = vrot.lane.b32.xlu0 %v4400, 64
      %v5096 = vpop.permute.xlu0 %5095
      %5097 = vrot.lane.b32.xlu0 %v4393, 64
      %v5098 = vpop.permute.xlu0 %5097
      %5099 = vrot.lane.b32.xlu0 %v4401, 64
      %v5100 = vpop.permute.xlu0 %5099
      %5101 = vrot.lane.b32.xlu0 %v4394, 64
      %v5102 = vpop.permute.xlu0 %5101
      %5103 = vrot.lane.b32.xlu0 %v4402, 64
      %v5104 = vpop.permute.xlu0 %5103
      %5105 = vrot.lane.b32.xlu0 %v4395, 64
      %v5106 = vpop.permute.xlu0 %5105
      %5107 = vrot.lane.b32.xlu0 %v4403, 64
      %v5108 = vpop.permute.xlu0 %5107
      %5109 = vrot.lane.b32.xlu0 %v4396, 64
      %v5110 = vpop.permute.xlu0 %5109
      %5111 = vrot.lane.b32.xlu0 %v4404, 64
      %v5112 = vpop.permute.xlu0 %5111
      %5113 = vrot.lane.b32.xlu0 %v4397, 64
      %v5114 = vpop.permute.xlu0 %5113
      %5115 = vrot.lane.b32.xlu0 %v4405, 64
      %v5116 = vpop.permute.xlu0 %5115
      %5117 = vrot.lane.b32.xlu0 %v4398, 64
      %v5118 = vpop.permute.xlu0 %5117
      %5119 = vrot.lane.b32.xlu0 %v4406, 64
      %v5120 = vpop.permute.xlu0 %5119
      %v5121 = vsel %vm3663, %v5114, %v5118
      %v5122 = vsel %vm3663, %v5116, %v5120
      %v5123 = vsel %vm3663, %v5110, %v5114
      %v5124 = vsel %vm3663, %v5112, %v5116
      %v5125 = vsel %vm3663, %v5106, %v5110
      %v5126 = vsel %vm3663, %v5108, %v5112
      %v5127 = vsel %vm3663, %v5102, %v5106
      %v5128 = vsel %vm3663, %v5104, %v5108
      %v5129 = vsel %vm3663, %v5098, %v5102
      %v5130 = vsel %vm3663, %v5100, %v5104
      %v5131 = vsel %vm3663, %v5094, %v5098
      %v5132 = vsel %vm3663, %v5096, %v5100
      %v5133 = vsel %vm3663, %v5090, %v5094
      %v5134 = vsel %vm3663, %v5092, %v5096
      %v5135 = vsel %vm3663, %v5118, %v5090
      %v5136 = vsel %vm3663, %v5120, %v5092
      %s5137 = scalar_lea.vmem %s7, 32
      %v5138 = vld [vmem:[%s5137] sm:$0xff]
      %v5139 = vld [vmem:[%s5137 + $0x8] sm:$0xff]
      %v5141 = vsel %vm4460, %v5138, 0
      %v5144 = vsel %vm4460, %v5139, 0
      %5146 = vmatprep.subr.mxu0 %v5131
      %5147 = vmatpush1.msra.mxu0 %v5133
      %5148 = vmatprep.subr.mxu0 %v5132
      %5149 = vmatpush1.msra.mxu0 %v5134
      %5150 = vmatprep.subr.mxu0 0.0
      %5151 = vmatpush1.msra.mxu0 0.0
      %5152 = vmatprep.subr.mxu0 0.0
      %5153 = vmatpush1.msra.mxu0 0.0
      %5154 = vmatprep.subr.mxu0 0.0
      %5155 = vmatpush1.msra.mxu0 0.0
      %5156 = vmatprep.subr.mxu0 0.0
      %5157 = vmatpush1.msra.mxu0 0.0
      %5158 = vmatprep.subr.mxu0 0.0
      %5159 = vmatpush1.msra.mxu0 0.0
      %5160 = vmatprep.subr.mxu0 0.0
      %5161 = vmatpush1.msra.mxu0 0.0
      %5162 = vmatprep.subr.mxu0 0.0
      %5163 = vmatpush1.msra.mxu0 0.0
      %5164 = vmatprep.subr.mxu0 0.0
      %5165 = vmatpush1.msra.mxu0 0.0
      %5166 = vmatprep.subr.mxu0 0.0
      %5167 = vmatpush1.msra.mxu0 0.0
      %5168 = vmatprep.subr.mxu0 0.0
      %5169 = vmatpush1.msra.mxu0 0.0
      %5170 = vmatprep.subr.mxu0 0.0
      %5171 = vmatpush1.msra.mxu0 0.0
      %5172 = vmatprep.subr.mxu0 0.0
      %5173 = vmatpush1.msra.mxu0 0.0
      %5174 = vmatprep.subr.mxu0 0.0
      %5175 = vmatpush1.msra.mxu0 0.0
      %5176 = vmatprep.subr.mxu0 0.0
      %5177 = vmatpush1.msra.mxu0 0.0
      %5178 = vmatprep.subr.mxu0 0.0
      %5179 = vmatpush1.msra.mxu0 0.0
      %5180 = vmatprep.subr.mxu0 0.0
      %5181 = vmatpush1.msra.mxu0 0.0
      %5182 = vmatprep.subr.mxu0 0.0
      %5183 = vmatpush1.msra.mxu0 0.0
      %5184 = vmatprep.subr.mxu0 0.0
      %5185 = vmatpush1.msra.mxu0 0.0
      %5186 = vmatprep.subr.mxu0 0.0
      %5187 = vmatpush1.msra.mxu0 0.0
      %5188 = vmatprep.subr.mxu0 0.0
      %5189 = vmatpush1.msra.mxu0 0.0
      %5190 = vmatprep.subr.mxu0 0.0
      %5191 = vmatpush1.msra.mxu0 0.0
      %5192 = vmatprep.subr.mxu0 0.0
      %5193 = vmatpush1.msra.mxu0 0.0
      %5194 = vmatprep.subr.mxu0 0.0
      %5195 = vmatpush1.msra.mxu0 0.0
      %5196 = vmatprep.subr.mxu0 0.0
      %5197 = vmatpush1.msra.mxu0 0.0
      %5198 = vmatprep.subr.mxu0 0.0
      %5199 = vmatpush1.msra.mxu0 0.0
      %5200 = vmatprep.subr.mxu0 0.0
      %5201 = vmatpush1.msra.mxu0 0.0
      %5202 = vmatprep.subr.mxu0 0.0
      %5203 = vmatpush1.msra.mxu0 0.0
      %5204 = vmatprep.subr.mxu0 0.0
      %5205 = vmatpush1.msra.mxu0 0.0
      %5206 = vmatprep.subr.mxu0 0.0
      %5207 = vmatpush1.msra.mxu0 0.0
      %5208 = vmatprep.subr.mxu0 0.0
      %5209 = vmatpush1.msra.mxu0 0.0
      %5210 = vmatprep.mubr.f32.mxu0 0.0
      %5211 = vmatmul.mubr.f32.gmra.mrb[0].mxu0 %v5141
      %v5212 = vpop.f32.mrb[0].mxu0
      %v5213 = vadd.f32 0.0, %v5212
      %v5214 = vpop.f32.mrb[0].mxu0
      %v5215 = vadd.f32 0.0, %v5214
      %5216 = vmatprep.mubr.f32.mxu0 0.0
      %5217 = vmatmul.mubr.f32.gmra.mrb[0].mxu0 %v5144
      %v5218 = vpop.f32.mrb[0].mxu0
      %v5219 = vadd.f32 0.0, %v5218
      %v5220 = vpop.f32.mrb[0].mxu0
      %v5221 = vadd.f32 0.0, %v5220
      %5222 = vdwg.mxu0
      %5223 = vmatprep.subr.mxu0 %v5127
      %5224 = vmatpush1.msra.mxu0 %v5129
      %5225 = vmatprep.subr.mxu0 %v5128
      %5226 = vmatpush1.msra.mxu0 %v5130
      %5227 = vmatprep.subr.mxu0 0.0
      %5228 = vmatpush1.msra.mxu0 0.0
      %5229 = vmatprep.subr.mxu0 0.0
      %5230 = vmatpush1.msra.mxu0 0.0
      %5231 = vmatprep.subr.mxu0 0.0
      %5232 = vmatpush1.msra.mxu0 0.0
      %5233 = vmatprep.subr.mxu0 0.0
      %5234 = vmatpush1.msra.mxu0 0.0
      %5235 = vmatprep.subr.mxu0 0.0
      %5236 = vmatpush1.msra.mxu0 0.0
      %5237 = vmatprep.subr.mxu0 0.0
      %5238 = vmatpush1.msra.mxu0 0.0
      %5239 = vmatprep.subr.mxu0 0.0
      %5240 = vmatpush1.msra.mxu0 0.0
      %5241 = vmatprep.subr.mxu0 0.0
      %5242 = vmatpush1.msra.mxu0 0.0
      %5243 = vmatprep.subr.mxu0 0.0
      %5244 = vmatpush1.msra.mxu0 0.0
      %5245 = vmatprep.subr.mxu0 0.0
      %5246 = vmatpush1.msra.mxu0 0.0
      %5247 = vmatprep.subr.mxu0 0.0
      %5248 = vmatpush1.msra.mxu0 0.0
      %5249 = vmatprep.subr.mxu0 0.0
      %5250 = vmatpush1.msra.mxu0 0.0
      %5251 = vmatprep.subr.mxu0 0.0
      %5252 = vmatpush1.msra.mxu0 0.0
      %5253 = vmatprep.subr.mxu0 0.0
      %5254 = vmatpush1.msra.mxu0 0.0
      %5255 = vmatprep.subr.mxu0 0.0
      %5256 = vmatpush1.msra.mxu0 0.0
      %5257 = vmatprep.subr.mxu0 0.0
      %5258 = vmatpush1.msra.mxu0 0.0
      %5259 = vmatprep.subr.mxu0 0.0
      %5260 = vmatpush1.msra.mxu0 0.0
      %5261 = vmatprep.subr.mxu0 0.0
      %5262 = vmatpush1.msra.mxu0 0.0
      %5263 = vmatprep.subr.mxu0 0.0
      %5264 = vmatpush1.msra.mxu0 0.0
      %5265 = vmatprep.subr.mxu0 0.0
      %5266 = vmatpush1.msra.mxu0 0.0
      %5267 = vmatprep.subr.mxu0 0.0
      %5268 = vmatpush1.msra.mxu0 0.0
      %5269 = vmatprep.subr.mxu0 0.0
      %5270 = vmatpush1.msra.mxu0 0.0
      %5271 = vmatprep.subr.mxu0 0.0
      %5272 = vmatpush1.msra.mxu0 0.0
      %5273 = vmatprep.subr.mxu0 0.0
      %5274 = vmatpush1.msra.mxu0 0.0
      %5275 = vmatprep.subr.mxu0 0.0
      %5276 = vmatpush1.msra.mxu0 0.0
      %5277 = vmatprep.subr.mxu0 0.0
      %5278 = vmatpush1.msra.mxu0 0.0
      %5279 = vmatprep.subr.mxu0 0.0
      %5280 = vmatpush1.msra.mxu0 0.0
      %5281 = vmatprep.subr.mxu0 0.0
      %5282 = vmatpush1.msra.mxu0 0.0
      %5283 = vmatprep.subr.mxu0 0.0
      %5284 = vmatpush1.msra.mxu0 0.0
      %5285 = vmatprep.subr.mxu0 0.0
      %5286 = vmatpush1.msra.mxu0 0.0
      %5287 = vmatprep.mubr.f32.mxu0 0.0
      %5288 = vmatmul.mubr.f32.gmra.mrb[0].mxu0 %v5141
      %v5289 = vpop.f32.mrb[0].mxu0
      %v5290 = vadd.f32 0.0, %v5289
      %v5291 = vpop.f32.mrb[0].mxu0
      %v5292 = vadd.f32 0.0, %v5291
      %5293 = vmatprep.mubr.f32.mxu0 0.0
      %5294 = vmatmul.mubr.f32.gmra.mrb[0].mxu0 %v5144
      %v5295 = vpop.f32.mrb[0].mxu0
      %v5296 = vadd.f32 0.0, %v5295
      %v5297 = vpop.f32.mrb[0].mxu0
      %v5298 = vadd.f32 0.0, %v5297
      %5299 = vdwg.mxu0
      %5300 = vmatprep.subr.mxu0 %v5123
      %5301 = vmatpush1.msra.mxu0 %v5125
      %5302 = vmatprep.subr.mxu0 %v5124
      %5303 = vmatpush1.msra.mxu0 %v5126
      %5304 = vmatprep.subr.mxu0 0.0
      %5305 = vmatpush1.msra.mxu0 0.0
      %5306 = vmatprep.subr.mxu0 0.0
      %5307 = vmatpush1.msra.mxu0 0.0
      %5308 = vmatprep.subr.mxu0 0.0
      %5309 = vmatpush1.msra.mxu0 0.0
      %5310 = vmatprep.subr.mxu0 0.0
      %5311 = vmatpush1.msra.mxu0 0.0
      %5312 = vmatprep.subr.mxu0 0.0
      %5313 = vmatpush1.msra.mxu0 0.0
      %5314 = vmatprep.subr.mxu0 0.0
      %5315 = vmatpush1.msra.mxu0 0.0
      %5316 = vmatprep.subr.mxu0 0.0
      %5317 = vmatpush1.msra.mxu0 0.0
      %5318 = vmatprep.subr.mxu0 0.0
      %5319 = vmatpush1.msra.mxu0 0.0
      %5320 = vmatprep.subr.mxu0 0.0
      %5321 = vmatpush1.msra.mxu0 0.0
      %5322 = vmatprep.subr.mxu0 0.0
      %5323 = vmatpush1.msra.mxu0 0.0
      %5324 = vmatprep.subr.mxu0 0.0
      %5325 = vmatpush1.msra.mxu0 0.0
      %5326 = vmatprep.subr.mxu0 0.0
      %5327 = vmatpush1.msra.mxu0 0.0
      %5328 = vmatprep.subr.mxu0 0.0
      %5329 = vmatpush1.msra.mxu0 0.0
      %5330 = vmatprep.subr.mxu0 0.0
      %5331 = vmatpush1.msra.mxu0 0.0
      %5332 = vmatprep.subr.mxu0 0.0
      %5333 = vmatpush1.msra.mxu0 0.0
      %5334 = vmatprep.subr.mxu0 0.0
      %5335 = vmatpush1.msra.mxu0 0.0
      %5336 = vmatprep.subr.mxu0 0.0
      %5337 = vmatpush1.msra.mxu0 0.0
      %5338 = vmatprep.subr.mxu0 0.0
      %5339 = vmatpush1.msra.mxu0 0.0
      %5340 = vmatprep.subr.mxu0 0.0
      %5341 = vmatpush1.msra.mxu0 0.0
      %5342 = vmatprep.subr.mxu0 0.0
      %5343 = vmatpush1.msra.mxu0 0.0
      %5344 = vmatprep.subr.mxu0 0.0
      %5345 = vmatpush1.msra.mxu0 0.0
      %5346 = vmatprep.subr.mxu0 0.0
      %5347 = vmatpush1.msra.mxu0 0.0
      %5348 = vmatprep.subr.mxu0 0.0
      %5349 = vmatpush1.msra.mxu0 0.0
      %5350 = vmatprep.subr.mxu0 0.0
      %5351 = vmatpush1.msra.mxu0 0.0
      %5352 = vmatprep.subr.mxu0 0.0
      %5353 = vmatpush1.msra.mxu0 0.0
      %5354 = vmatprep.subr.mxu0 0.0
      %5355 = vmatpush1.msra.mxu0 0.0
      %5356 = vmatprep.subr.mxu0 0.0
      %5357 = vmatpush1.msra.mxu0 0.0
      %5358 = vmatprep.subr.mxu0 0.0
      %5359 = vmatpush1.msra.mxu0 0.0
      %5360 = vmatprep.subr.mxu0 0.0
      %5361 = vmatpush1.msra.mxu0 0.0
      %5362 = vmatprep.subr.mxu0 0.0
      %5363 = vmatpush1.msra.mxu0 0.0
      %5364 = vmatprep.mubr.f32.mxu0 0.0
      %5365 = vmatmul.mubr.f32.gmra.mrb[0].mxu0 %v5141
      %v5366 = vpop.f32.mrb[0].mxu0
      %v5367 = vadd.f32 0.0, %v5366
      %v5368 = vpop.f32.mrb[0].mxu0
      %v5369 = vadd.f32 0.0, %v5368
      %5370 = vmatprep.mubr.f32.mxu0 0.0
      %5371 = vmatmul.mubr.f32.gmra.mrb[0].mxu0 %v5144
      %v5372 = vpop.f32.mrb[0].mxu0
      %v5373 = vadd.f32 0.0, %v5372
      %v5374 = vpop.f32.mrb[0].mxu0
      %v5375 = vadd.f32 0.0, %v5374
      %5376 = vdwg.mxu0
      %5377 = vmatprep.subr.mxu0 %v5135
      %5378 = vmatpush1.msra.mxu0 %v5121
      %5379 = vmatprep.subr.mxu0 %v5136
      %5380 = vmatpush1.msra.mxu0 %v5122
      %5381 = vmatprep.subr.mxu0 0.0
      %5382 = vmatpush1.msra.mxu0 0.0
      %5383 = vmatprep.subr.mxu0 0.0
      %5384 = vmatpush1.msra.mxu0 0.0
      %5385 = vmatprep.subr.mxu0 0.0
      %5386 = vmatpush1.msra.mxu0 0.0
      %5387 = vmatprep.subr.mxu0 0.0
      %5388 = vmatpush1.msra.mxu0 0.0
      %5389 = vmatprep.subr.mxu0 0.0
      %5390 = vmatpush1.msra.mxu0 0.0
      %5391 = vmatprep.subr.mxu0 0.0
      %5392 = vmatpush1.msra.mxu0 0.0
      %5393 = vmatprep.subr.mxu0 0.0
      %5394 = vmatpush1.msra.mxu0 0.0
      %5395 = vmatprep.subr.mxu0 0.0
      %5396 = vmatpush1.msra.mxu0 0.0
      %5397 = vmatprep.subr.mxu0 0.0
      %5398 = vmatpush1.msra.mxu0 0.0
      %5399 = vmatprep.subr.mxu0 0.0
      %5400 = vmatpush1.msra.mxu0 0.0
      %5401 = vmatprep.subr.mxu0 0.0
      %5402 = vmatpush1.msra.mxu0 0.0
      %5403 = vmatprep.subr.mxu0 0.0
      %5404 = vmatpush1.msra.mxu0 0.0
      %5405 = vmatprep.subr.mxu0 0.0
      %5406 = vmatpush1.msra.mxu0 0.0
      %5407 = vmatprep.subr.mxu0 0.0
      %5408 = vmatpush1.msra.mxu0 0.0
      %5409 = vmatprep.subr.mxu0 0.0
      %5410 = vmatpush1.msra.mxu0 0.0
      %5411 = vmatprep.subr.mxu0 0.0
      %5412 = vmatpush1.msra.mxu0 0.0
      %5413 = vmatprep.subr.mxu0 0.0
      %5414 = vmatpush1.msra.mxu0 0.0
      %5415 = vmatprep.subr.mxu0 0.0
      %5416 = vmatpush1.msra.mxu0 0.0
      %5417 = vmatprep.subr.mxu0 0.0
      %5418 = vmatpush1.msra.mxu0 0.0
      %5419 = vmatprep.subr.mxu0 0.0
      %5420 = vmatpush1.msra.mxu0 0.0
      %5421 = vmatprep.subr.mxu0 0.0
      %5422 = vmatpush1.msra.mxu0 0.0
      %5423 = vmatprep.subr.mxu0 0.0
      %5424 = vmatpush1.msra.mxu0 0.0
      %5425 = vmatprep.subr.mxu0 0.0
      %5426 = vmatpush1.msra.mxu0 0.0
      %5427 = vmatprep.subr.mxu0 0.0
      %5428 = vmatpush1.msra.mxu0 0.0
      %5429 = vmatprep.subr.mxu0 0.0
      %5430 = vmatpush1.msra.mxu0 0.0
      %5431 = vmatprep.subr.mxu0 0.0
      %5432 = vmatpush1.msra.mxu0 0.0
      %5433 = vmatprep.subr.mxu0 0.0
      %5434 = vmatpush1.msra.mxu0 0.0
      %5435 = vmatprep.subr.mxu0 0.0
      %5436 = vmatpush1.msra.mxu0 0.0
      %5437 = vmatprep.subr.mxu0 0.0
      %5438 = vmatpush1.msra.mxu0 0.0
      %5439 = vmatprep.subr.mxu0 0.0
      %5440 = vmatpush1.msra.mxu0 0.0
      %5441 = vmatprep.mubr.f32.mxu0 0.0
      %5442 = vmatmul.mubr.f32.gmra.mrb[0].mxu0 %v5141
      %v5443 = vpop.f32.mrb[0].mxu0
      %v5444 = vadd.f32 0.0, %v5443
      %v5445 = vpop.f32.mrb[0].mxu0
      %v5446 = vadd.f32 0.0, %v5445
      %5447 = vmatprep.mubr.f32.mxu0 0.0
      %5448 = vmatmul.mubr.f32.gmra.mrb[0].mxu0 %v5144
      %v5449 = vpop.f32.mrb[0].mxu0
      %v5450 = vadd.f32 0.0, %v5449
      %v5451 = vpop.f32.mrb[0].mxu0
      %v5452 = vadd.f32 0.0, %v5451
      %5453 = vdwg.mxu0
      %v5454 = vadd.f32 %v4848, %v5213
      %v5455 = vadd.f32 %v4850, %v5215
      %v5456 = vadd.f32 %v4925, %v5290
      %v5457 = vadd.f32 %v4927, %v5292
      %v5458 = vadd.f32 %v5002, %v5367
      %v5459 = vadd.f32 %v5004, %v5369
      %v5460 = vadd.f32 %v5079, %v5444
      %v5461 = vadd.f32 %v5081, %v5446
      %v5462 = vadd.f32 %v4854, %v5219
      %v5463 = vadd.f32 %v4856, %v5221
      %v5464 = vadd.f32 %v4931, %v5296
      %v5465 = vadd.f32 %v4933, %v5298
      %v5466 = vadd.f32 %v5008, %v5373
      %v5467 = vadd.f32 %v5010, %v5375
      %v5468 = vadd.f32 %v5085, %v5450
      %v5469 = vadd.f32 %v5087, %v5452
      %5470 = vrot.lane.b32.xlu0 %v4391, 62
      %v5471 = vpop.permute.xlu0 %5470
      %5472 = vrot.lane.b32.xlu0 %v4399, 62
      %v5473 = vpop.permute.xlu0 %5472
      %5474 = vrot.lane.b32.xlu0 %v4392, 62
      %v5475 = vpop.permute.xlu0 %5474
      %5476 = vrot.lane.b32.xlu0 %v4400, 62
      %v5477 = vpop.permute.xlu0 %5476
      %5478 = vrot.lane.b32.xlu0 %v4393, 62
      %v5479 = vpop.permute.xlu0 %5478
      %5480 = vrot.lane.b32.xlu0 %v4401, 62
      %v5481 = vpop.permute.xlu0 %5480
      %5482 = vrot.lane.b32.xlu0 %v4394, 62
      %v5483 = vpop.permute.xlu0 %5482
      %5484 = vrot.lane.b32.xlu0 %v4402, 62
      %v5485 = vpop.permute.xlu0 %5484
      %5486 = vrot.lane.b32.xlu0 %v4395, 62
      %v5487 = vpop.permute.xlu0 %5486
      %5488 = vrot.lane.b32.xlu0 %v4403, 62
      %v5489 = vpop.permute.xlu0 %5488
      %5490 = vrot.lane.b32.xlu0 %v4396, 62
      %v5491 = vpop.permute.xlu0 %5490
      %5492 = vrot.lane.b32.xlu0 %v4404, 62
      %v5493 = vpop.permute.xlu0 %5492
      %5494 = vrot.lane.b32.xlu0 %v4397, 62
      %v5495 = vpop.permute.xlu0 %5494
      %5496 = vrot.lane.b32.xlu0 %v4405, 62
      %v5497 = vpop.permute.xlu0 %5496
      %5498 = vrot.lane.b32.xlu0 %v4398, 62
      %v5499 = vpop.permute.xlu0 %5498
      %5500 = vrot.lane.b32.xlu0 %v4406, 62
      %v5501 = vpop.permute.xlu0 %5500
      %v5502 = vsel %vm4021, %v5495, %v5499
      %v5503 = vsel %vm4021, %v5497, %v5501
      %v5504 = vsel %vm4021, %v5491, %v5495
      %v5505 = vsel %vm4021, %v5493, %v5497
      %v5506 = vsel %vm4021, %v5487, %v5491
      %v5507 = vsel %vm4021, %v5489, %v5493
      %v5508 = vsel %vm4021, %v5483, %v5487
      %v5509 = vsel %vm4021, %v5485, %v5489
      %v5510 = vsel %vm4021, %v5479, %v5483
      %v5511 = vsel %vm4021, %v5481, %v5485
      %v5512 = vsel %vm4021, %v5475, %v5479
      %v5513 = vsel %vm4021, %v5477, %v5481
      %v5514 = vsel %vm4021, %v5471, %v5475
      %v5515 = vsel %vm4021, %v5473, %v5477
      %v5516 = vsel %vm4021, %v5499, %v5471
      %v5517 = vsel %vm4021, %v5501, %v5473
      %s5518 = scalar_lea.vmem %s7, 48
      %v5519 = vld [vmem:[%s5518] sm:$0xff]
      %v5520 = vld [vmem:[%s5518 + $0x8] sm:$0xff]
      %v5522 = vsel %vm4460, %v5519, 0
      %v5525 = vsel %vm4460, %v5520, 0
      %5527 = vmatprep.subr.mxu0 %v5512
      %5528 = vmatpush1.msra.mxu0 %v5514
      %5529 = vmatprep.subr.mxu0 %v5513
      %5530 = vmatpush1.msra.mxu0 %v5515
      %5531 = vmatprep.subr.mxu0 0.0
      %5532 = vmatpush1.msra.mxu0 0.0
      %5533 = vmatprep.subr.mxu0 0.0
      %5534 = vmatpush1.msra.mxu0 0.0
      %5535 = vmatprep.subr.mxu0 0.0
      %5536 = vmatpush1.msra.mxu0 0.0
      %5537 = vmatprep.subr.mxu0 0.0
      %5538 = vmatpush1.msra.mxu0 0.0
      %5539 = vmatprep.subr.mxu0 0.0
      %5540 = vmatpush1.msra.mxu0 0.0
      %5541 = vmatprep.subr.mxu0 0.0
      %5542 = vmatpush1.msra.mxu0 0.0
      %5543 = vmatprep.subr.mxu0 0.0
      %5544 = vmatpush1.msra.mxu0 0.0
      %5545 = vmatprep.subr.mxu0 0.0
      %5546 = vmatpush1.msra.mxu0 0.0
      %5547 = vmatprep.subr.mxu0 0.0
      %5548 = vmatpush1.msra.mxu0 0.0
      %5549 = vmatprep.subr.mxu0 0.0
      %5550 = vmatpush1.msra.mxu0 0.0
      %5551 = vmatprep.subr.mxu0 0.0
      %5552 = vmatpush1.msra.mxu0 0.0
      %5553 = vmatprep.subr.mxu0 0.0
      %5554 = vmatpush1.msra.mxu0 0.0
      %5555 = vmatprep.subr.mxu0 0.0
      %5556 = vmatpush1.msra.mxu0 0.0
      %5557 = vmatprep.subr.mxu0 0.0
      %5558 = vmatpush1.msra.mxu0 0.0
      %5559 = vmatprep.subr.mxu0 0.0
      %5560 = vmatpush1.msra.mxu0 0.0
      %5561 = vmatprep.subr.mxu0 0.0
      %5562 = vmatpush1.msra.mxu0 0.0
      %5563 = vmatprep.subr.mxu0 0.0
      %5564 = vmatpush1.msra.mxu0 0.0
      %5565 = vmatprep.subr.mxu0 0.0
      %5566 = vmatpush1.msra.mxu0 0.0
      %5567 = vmatprep.subr.mxu0 0.0
      %5568 = vmatpush1.msra.mxu0 0.0
      %5569 = vmatprep.subr.mxu0 0.0
      %5570 = vmatpush1.msra.mxu0 0.0
      %5571 = vmatprep.subr.mxu0 0.0
      %5572 = vmatpush1.msra.mxu0 0.0
      %5573 = vmatprep.subr.mxu0 0.0
      %5574 = vmatpush1.msra.mxu0 0.0
      %5575 = vmatprep.subr.mxu0 0.0
      %5576 = vmatpush1.msra.mxu0 0.0
      %5577 = vmatprep.subr.mxu0 0.0
      %5578 = vmatpush1.msra.mxu0 0.0
      %5579 = vmatprep.subr.mxu0 0.0
      %5580 = vmatpush1.msra.mxu0 0.0
      %5581 = vmatprep.subr.mxu0 0.0
      %5582 = vmatpush1.msra.mxu0 0.0
      %5583 = vmatprep.subr.mxu0 0.0
      %5584 = vmatpush1.msra.mxu0 0.0
      %5585 = vmatprep.subr.mxu0 0.0
      %5586 = vmatpush1.msra.mxu0 0.0
      %5587 = vmatprep.subr.mxu0 0.0
      %5588 = vmatpush1.msra.mxu0 0.0
      %5589 = vmatprep.subr.mxu0 0.0
      %5590 = vmatpush1.msra.mxu0 0.0
      %5591 = vmatprep.mubr.f32.mxu0 0.0
      %5592 = vmatmul.mubr.f32.gmra.mrb[0].mxu0 %v5522
      %v5593 = vpop.f32.mrb[0].mxu0
      %v5594 = vadd.f32 0.0, %v5593
      %v5595 = vpop.f32.mrb[0].mxu0
      %v5596 = vadd.f32 0.0, %v5595
      %5597 = vmatprep.mubr.f32.mxu0 0.0
      %5598 = vmatmul.mubr.f32.gmra.mrb[0].mxu0 %v5525
      %v5599 = vpop.f32.mrb[0].mxu0
      %v5600 = vadd.f32 0.0, %v5599
      %v5601 = vpop.f32.mrb[0].mxu0
      %v5602 = vadd.f32 0.0, %v5601
      %5603 = vdwg.mxu0
      %5604 = vmatprep.subr.mxu0 %v5508
      %5605 = vmatpush1.msra.mxu0 %v5510
      %5606 = vmatprep.subr.mxu0 %v5509
      %5607 = vmatpush1.msra.mxu0 %v5511
      %5608 = vmatprep.subr.mxu0 0.0
      %5609 = vmatpush1.msra.mxu0 0.0
      %5610 = vmatprep.subr.mxu0 0.0
      %5611 = vmatpush1.msra.mxu0 0.0
      %5612 = vmatprep.subr.mxu0 0.0
      %5613 = vmatpush1.msra.mxu0 0.0
      %5614 = vmatprep.subr.mxu0 0.0
      %5615 = vmatpush1.msra.mxu0 0.0
      %5616 = vmatprep.subr.mxu0 0.0
      %5617 = vmatpush1.msra.mxu0 0.0
      %5618 = vmatprep.subr.mxu0 0.0
      %5619 = vmatpush1.msra.mxu0 0.0
      %5620 = vmatprep.subr.mxu0 0.0
      %5621 = vmatpush1.msra.mxu0 0.0
      %5622 = vmatprep.subr.mxu0 0.0
      %5623 = vmatpush1.msra.mxu0 0.0
      %5624 = vmatprep.subr.mxu0 0.0
      %5625 = vmatpush1.msra.mxu0 0.0
      %5626 = vmatprep.subr.mxu0 0.0
      %5627 = vmatpush1.msra.mxu0 0.0
      %5628 = vmatprep.subr.mxu0 0.0
      %5629 = vmatpush1.msra.mxu0 0.0
      %5630 = vmatprep.subr.mxu0 0.0
      %5631 = vmatpush1.msra.mxu0 0.0
      %5632 = vmatprep.subr.mxu0 0.0
      %5633 = vmatpush1.msra.mxu0 0.0
      %5634 = vmatprep.subr.mxu0 0.0
      %5635 = vmatpush1.msra.mxu0 0.0
      %5636 = vmatprep.subr.mxu0 0.0
      %5637 = vmatpush1.msra.mxu0 0.0
      %5638 = vmatprep.subr.mxu0 0.0
      %5639 = vmatpush1.msra.mxu0 0.0
      %5640 = vmatprep.subr.mxu0 0.0
      %5641 = vmatpush1.msra.mxu0 0.0
      %5642 = vmatprep.subr.mxu0 0.0
      %5643 = vmatpush1.msra.mxu0 0.0
      %5644 = vmatprep.subr.mxu0 0.0
      %5645 = vmatpush1.msra.mxu0 0.0
      %5646 = vmatprep.subr.mxu0 0.0
      %5647 = vmatpush1.msra.mxu0 0.0
      %5648 = vmatprep.subr.mxu0 0.0
      %5649 = vmatpush1.msra.mxu0 0.0
      %5650 = vmatprep.subr.mxu0 0.0
      %5651 = vmatpush1.msra.mxu0 0.0
      %5652 = vmatprep.subr.mxu0 0.0
      %5653 = vmatpush1.msra.mxu0 0.0
      %5654 = vmatprep.subr.mxu0 0.0
      %5655 = vmatpush1.msra.mxu0 0.0
      %5656 = vmatprep.subr.mxu0 0.0
      %5657 = vmatpush1.msra.mxu0 0.0
      %5658 = vmatprep.subr.mxu0 0.0
      %5659 = vmatpush1.msra.mxu0 0.0
      %5660 = vmatprep.subr.mxu0 0.0
      %5661 = vmatpush1.msra.mxu0 0.0
      %5662 = vmatprep.subr.mxu0 0.0
      %5663 = vmatpush1.msra.mxu0 0.0
      %5664 = vmatprep.subr.mxu0 0.0
      %5665 = vmatpush1.msra.mxu0 0.0
      %5666 = vmatprep.subr.mxu0 0.0
      %5667 = vmatpush1.msra.mxu0 0.0
      %5668 = vmatprep.mubr.f32.mxu0 0.0
      %5669 = vmatmul.mubr.f32.gmra.mrb[0].mxu0 %v5522
      %v5670 = vpop.f32.mrb[0].mxu0
      %v5671 = vadd.f32 0.0, %v5670
      %v5672 = vpop.f32.mrb[0].mxu0
      %v5673 = vadd.f32 0.0, %v5672
      %5674 = vmatprep.mubr.f32.mxu0 0.0
      %5675 = vmatmul.mubr.f32.gmra.mrb[0].mxu0 %v5525
      %v5676 = vpop.f32.mrb[0].mxu0
      %v5677 = vadd.f32 0.0, %v5676
      %v5678 = vpop.f32.mrb[0].mxu0
      %v5679 = vadd.f32 0.0, %v5678
      %5680 = vdwg.mxu0
      %5681 = vmatprep.subr.mxu0 %v5504
      %5682 = vmatpush1.msra.mxu0 %v5506
      %5683 = vmatprep.subr.mxu0 %v5505
      %5684 = vmatpush1.msra.mxu0 %v5507
      %5685 = vmatprep.subr.mxu0 0.0
      %5686 = vmatpush1.msra.mxu0 0.0
      %5687 = vmatprep.subr.mxu0 0.0
      %5688 = vmatpush1.msra.mxu0 0.0
      %5689 = vmatprep.subr.mxu0 0.0
      %5690 = vmatpush1.msra.mxu0 0.0
      %5691 = vmatprep.subr.mxu0 0.0
      %5692 = vmatpush1.msra.mxu0 0.0
      %5693 = vmatprep.subr.mxu0 0.0
      %5694 = vmatpush1.msra.mxu0 0.0
      %5695 = vmatprep.subr.mxu0 0.0
      %5696 = vmatpush1.msra.mxu0 0.0
      %5697 = vmatprep.subr.mxu0 0.0
      %5698 = vmatpush1.msra.mxu0 0.0
      %5699 = vmatprep.subr.mxu0 0.0
      %5700 = vmatpush1.msra.mxu0 0.0
      %5701 = vmatprep.subr.mxu0 0.0
      %5702 = vmatpush1.msra.mxu0 0.0
      %5703 = vmatprep.subr.mxu0 0.0
      %5704 = vmatpush1.msra.mxu0 0.0
      %5705 = vmatprep.subr.mxu0 0.0
      %5706 = vmatpush1.msra.mxu0 0.0
      %5707 = vmatprep.subr.mxu0 0.0
      %5708 = vmatpush1.msra.mxu0 0.0
      %5709 = vmatprep.subr.mxu0 0.0
      %5710 = vmatpush1.msra.mxu0 0.0
      %5711 = vmatprep.subr.mxu0 0.0
      %5712 = vmatpush1.msra.mxu0 0.0
      %5713 = vmatprep.subr.mxu0 0.0
      %5714 = vmatpush1.msra.mxu0 0.0
      %5715 = vmatprep.subr.mxu0 0.0
      %5716 = vmatpush1.msra.mxu0 0.0
      %5717 = vmatprep.subr.mxu0 0.0
      %5718 = vmatpush1.msra.mxu0 0.0
      %5719 = vmatprep.subr.mxu0 0.0
      %5720 = vmatpush1.msra.mxu0 0.0
      %5721 = vmatprep.subr.mxu0 0.0
      %5722 = vmatpush1.msra.mxu0 0.0
      %5723 = vmatprep.subr.mxu0 0.0
      %5724 = vmatpush1.msra.mxu0 0.0
      %5725 = vmatprep.subr.mxu0 0.0
      %5726 = vmatpush1.msra.mxu0 0.0
      %5727 = vmatprep.subr.mxu0 0.0
      %5728 = vmatpush1.msra.mxu0 0.0
      %5729 = vmatprep.subr.mxu0 0.0
      %5730 = vmatpush1.msra.mxu0 0.0
      %5731 = vmatprep.subr.mxu0 0.0
      %5732 = vmatpush1.msra.mxu0 0.0
      %5733 = vmatprep.subr.mxu0 0.0
      %5734 = vmatpush1.msra.mxu0 0.0
      %5735 = vmatprep.subr.mxu0 0.0
      %5736 = vmatpush1.msra.mxu0 0.0
      %5737 = vmatprep.subr.mxu0 0.0
      %5738 = vmatpush1.msra.mxu0 0.0
      %5739 = vmatprep.subr.mxu0 0.0
      %5740 = vmatpush1.msra.mxu0 0.0
      %5741 = vmatprep.subr.mxu0 0.0
      %5742 = vmatpush1.msra.mxu0 0.0
      %5743 = vmatprep.subr.mxu0 0.0
      %5744 = vmatpush1.msra.mxu0 0.0
      %5745 = vmatprep.mubr.f32.mxu0 0.0
      %5746 = vmatmul.mubr.f32.gmra.mrb[0].mxu0 %v5522
      %v5747 = vpop.f32.mrb[0].mxu0
      %v5748 = vadd.f32 0.0, %v5747
      %v5749 = vpop.f32.mrb[0].mxu0
      %v5750 = vadd.f32 0.0, %v5749
      %5751 = vmatprep.mubr.f32.mxu0 0.0
      %5752 = vmatmul.mubr.f32.gmra.mrb[0].mxu0 %v5525
      %v5753 = vpop.f32.mrb[0].mxu0
      %v5754 = vadd.f32 0.0, %v5753
      %v5755 = vpop.f32.mrb[0].mxu0
      %v5756 = vadd.f32 0.0, %v5755
      %5757 = vdwg.mxu0
      %5758 = vmatprep.subr.mxu0 %v5516
      %5759 = vmatpush1.msra.mxu0 %v5502
      %5760 = vmatprep.subr.mxu0 %v5517
      %5761 = vmatpush1.msra.mxu0 %v5503
      %5762 = vmatprep.subr.mxu0 0.0
      %5763 = vmatpush1.msra.mxu0 0.0
      %5764 = vmatprep.subr.mxu0 0.0
      %5765 = vmatpush1.msra.mxu0 0.0
      %5766 = vmatprep.subr.mxu0 0.0
      %5767 = vmatpush1.msra.mxu0 0.0
      %5768 = vmatprep.subr.mxu0 0.0
      %5769 = vmatpush1.msra.mxu0 0.0
      %5770 = vmatprep.subr.mxu0 0.0
      %5771 = vmatpush1.msra.mxu0 0.0
      %5772 = vmatprep.subr.mxu0 0.0
      %5773 = vmatpush1.msra.mxu0 0.0
      %5774 = vmatprep.subr.mxu0 0.0
      %5775 = vmatpush1.msra.mxu0 0.0
      %5776 = vmatprep.subr.mxu0 0.0
      %5777 = vmatpush1.msra.mxu0 0.0
      %5778 = vmatprep.subr.mxu0 0.0
      %5779 = vmatpush1.msra.mxu0 0.0
      %5780 = vmatprep.subr.mxu0 0.0
      %5781 = vmatpush1.msra.mxu0 0.0
      %5782 = vmatprep.subr.mxu0 0.0
      %5783 = vmatpush1.msra.mxu0 0.0
      %5784 = vmatprep.subr.mxu0 0.0
      %5785 = vmatpush1.msra.mxu0 0.0
      %5786 = vmatprep.subr.mxu0 0.0
      %5787 = vmatpush1.msra.mxu0 0.0
      %5788 = vmatprep.subr.mxu0 0.0
      %5789 = vmatpush1.msra.mxu0 0.0
      %5790 = vmatprep.subr.mxu0 0.0
      %5791 = vmatpush1.msra.mxu0 0.0
      %5792 = vmatprep.subr.mxu0 0.0
      %5793 = vmatpush1.msra.mxu0 0.0
      %5794 = vmatprep.subr.mxu0 0.0
      %5795 = vmatpush1.msra.mxu0 0.0
      %5796 = vmatprep.subr.mxu0 0.0
      %5797 = vmatpush1.msra.mxu0 0.0
      %5798 = vmatprep.subr.mxu0 0.0
      %5799 = vmatpush1.msra.mxu0 0.0
      %5800 = vmatprep.subr.mxu0 0.0
      %5801 = vmatpush1.msra.mxu0 0.0
      %5802 = vmatprep.subr.mxu0 0.0
      %5803 = vmatpush1.msra.mxu0 0.0
      %5804 = vmatprep.subr.mxu0 0.0
      %5805 = vmatpush1.msra.mxu0 0.0
      %5806 = vmatprep.subr.mxu0 0.0
      %5807 = vmatpush1.msra.mxu0 0.0
      %5808 = vmatprep.subr.mxu0 0.0
      %5809 = vmatpush1.msra.mxu0 0.0
      %5810 = vmatprep.subr.mxu0 0.0
      %5811 = vmatpush1.msra.mxu0 0.0
      %5812 = vmatprep.subr.mxu0 0.0
      %5813 = vmatpush1.msra.mxu0 0.0
      %5814 = vmatprep.subr.mxu0 0.0
      %5815 = vmatpush1.msra.mxu0 0.0
      %5816 = vmatprep.subr.mxu0 0.0
      %5817 = vmatpush1.msra.mxu0 0.0
      %5818 = vmatprep.subr.mxu0 0.0
      %5819 = vmatpush1.msra.mxu0 0.0
      %5820 = vmatprep.subr.mxu0 0.0
      %5821 = vmatpush1.msra.mxu0 0.0
      %5822 = vmatprep.mubr.f32.mxu0 0.0
      %5823 = vmatmul.mubr.f32.gmra.mrb[0].mxu0 %v5522
      %v5824 = vpop.f32.mrb[0].mxu0
      %v5825 = vadd.f32 0.0, %v5824
      %v5826 = vpop.f32.mrb[0].mxu0
      %v5827 = vadd.f32 0.0, %v5826
      %5828 = vmatprep.mubr.f32.mxu0 0.0
      %5829 = vmatmul.mubr.f32.gmra.mrb[0].mxu0 %v5525
      %v5830 = vpop.f32.mrb[0].mxu0
      %v5831 = vadd.f32 0.0, %v5830
      %v5832 = vpop.f32.mrb[0].mxu0
      %v5833 = vadd.f32 0.0, %v5832
      %5834 = vdwg.mxu0
      %v5835 = vadd.f32 %v5454, %v5594
      %v5836 = vadd.f32 %v5455, %v5596
      %v5837 = vadd.f32 %v5456, %v5671
      %v5838 = vadd.f32 %v5457, %v5673
      %v5839 = vadd.f32 %v5458, %v5748
      %v5840 = vadd.f32 %v5459, %v5750
      %v5841 = vadd.f32 %v5460, %v5825
      %v5842 = vadd.f32 %v5461, %v5827
      %v5843 = vadd.f32 %v5462, %v5600
      %v5844 = vadd.f32 %v5463, %v5602
      %v5845 = vadd.f32 %v5464, %v5677
      %v5846 = vadd.f32 %v5465, %v5679
      %v5847 = vadd.f32 %v5466, %v5754
      %v5848 = vadd.f32 %v5467, %v5756
      %v5849 = vadd.f32 %v5468, %v5831
      %v5850 = vadd.f32 %v5469, %v5833
      %v5851 = vld [vmem:[%s8] sm:$0xff]
      %v5852 = vld [vmem:[%s8 + $0x8] sm:$0xff]
      %5854 = vset.pattern.permute.xlu0 0
      %5855 = vperm.xlu0 %5854, %v5851
      %v5856 = vpop.permute.xlu0 %5855
      %5859 = vset.pattern.permute.xlu0 0
      %5860 = vperm.xlu0 %5859, %v5852
      %v5861 = vpop.permute.xlu0 %5860
      %v5863 = vadd.f32 %v5835, %v5856
      %v5864 = vadd.f32 %v5836, %v5856
      %v5865 = vadd.f32 %v5837, %v5856
      %v5866 = vadd.f32 %v5838, %v5856
      %v5867 = vadd.f32 %v5839, %v5856
      %v5868 = vadd.f32 %v5840, %v5856
      %v5869 = vadd.f32 %v5841, %v5856
      %v5870 = vadd.f32 %v5842, %v5856
      %v5871 = vadd.f32 %v5843, %v5861
      %v5872 = vadd.f32 %v5844, %v5861
      %v5873 = vadd.f32 %v5845, %v5861
      %v5874 = vadd.f32 %v5846, %v5861
      %v5875 = vadd.f32 %v5847, %v5861
      %v5876 = vadd.f32 %v5848, %v5861
      %v5877 = vadd.f32 %v5849, %v5861
      %v5878 = vadd.f32 %v5850, %v5861
      %v5879 = vmax.f32 %v5863, 0.0
      %v5880 = vmax.f32 %v5864, 0.0
      %v5881 = vmax.f32 %v5865, 0.0
      %v5882 = vmax.f32 %v5866, 0.0
      %v5883 = vmax.f32 %v5867, 0.0
      %v5884 = vmax.f32 %v5868, 0.0
      %v5885 = vmax.f32 %v5869, 0.0
      %v5886 = vmax.f32 %v5870, 0.0
      %v5887 = vmax.f32 %v5871, 0.0
      %v5888 = vmax.f32 %v5872, 0.0
      %v5889 = vmax.f32 %v5873, 0.0
      %v5890 = vmax.f32 %v5874, 0.0
      %v5891 = vmax.f32 %v5875, 0.0
      %v5892 = vmax.f32 %v5876, 0.0
      %v5893 = vmax.f32 %v5877, 0.0
      %v5894 = vmax.f32 %v5878, 0.0
      %5895 = vst [vmem:[%s372] sm:$0xff] %v5879
      %5896 = vst [vmem:[%s372 + $0x8] sm:$0xff] %v5880
      %5897 = vst [vmem:[%s372 + $0x10] sm:$0xff] %v5881
      %5898 = vst [vmem:[%s372 + $0x18] sm:$0xff] %v5882
      %5899 = vst [vmem:[%s372 + $0x20] sm:$0xff] %v5883
      %5900 = vst [vmem:[%s372 + $0x28] sm:$0xff] %v5884
      %5901 = vst [vmem:[%s372 + $0x30] sm:$0xff] %v5885
      %5902 = vst [vmem:[%s372 + $0x38] sm:$0xff] %v5886
      %5903 = vst [vmem:[%s372 + $0x40] sm:$0xff] %v5887
      %5904 = vst [vmem:[%s372 + $0x48] sm:$0xff] %v5888
      %5905 = vst [vmem:[%s372 + $0x50] sm:$0xff] %v5889
      %5906 = vst [vmem:[%s372 + $0x58] sm:$0xff] %v5890
      %5907 = vst [vmem:[%s372 + $0x60] sm:$0xff] %v5891
      %5908 = vst [vmem:[%s372 + $0x68] sm:$0xff] %v5892
      %5909 = vst [vmem:[%s372 + $0x70] sm:$0xff] %v5893
      %5910 = vst [vmem:[%s372 + $0x78] sm:$0xff] %v5894
      %p5911 = scmp.lt.s32.totalorder %s22, 1
      %s5912 = scalar_select %p5911, %s22, 1
      %s5913 = smul.addr %s5912, 8
      %s5914 = smul.addr %s5913, 8
      %s5915 = scalar_lea.vmem %s9, %s5914
      %p5916 = scmp.lt.s32.totalorder %s22, 1
      %s5917 = scalar_select %p5916, %s22, 1
      %s5918 = smul.addr %s5917, 16
      %s5919 = smul.addr %s5918, 8
      %s5920 = scalar_lea.vmem %s10, %s5919
      // Predicated region
      $region57: #{encoder_forward.1} parent=55 // pred_check
        %p5921 = pneg %p234
      $region58: #{encoder_forward.1} parent=55 // pred_check_branch
        %5923 = sbr.rel (%p5921) target = $region60
      $region59: #{encoder_forward.1} parent=55 // pred_region
        _
      $region60: #{encoder_forward.1} parent=55 // pred_fallthru
        _
      // Predicated region
      $region61: #{encoder_forward.1} parent=55 // pred_check
        %p5924 = pneg %p260
      $region62: #{encoder_forward.1} parent=55 // pred_check_branch
        %5926 = sbr.rel (%p5924) target = $region64
      $region63: #{encoder_forward.1} parent=55 // pred_region
        _
      $region64: #{encoder_forward.1} parent=55 // pred_fallthru
        _
    $region56: #{encoder_forward.1} parent=5 // pred_fallthru
      _
    %p5927 = scmp.le.s32.totalorder 2, %s17
    // Predicated region
    $region65: #{encoder_forward.1} parent=5 // pred_check
      %p5928 = pneg %p5927
    $region66: #{encoder_forward.1} parent=5 // pred_check_branch
      %5930 = sbr.rel (%p5928) target = $region68
    $region67: #{encoder_forward.1} parent=5 // pred_region
      %s5931 = ssub.s32 %s17, 2
      // Predicated region
      $region69: #{encoder_forward.1} parent=67 // pred_check
        %p5932 = pneg %p240
      $region70: #{encoder_forward.1} parent=67 // pred_check_branch
        %5934 = sbr.rel (%p5932) target = $region72
      $region71: #{encoder_forward.1} parent=67 // pred_region
        %p5935 = scmp.lt.s32.totalorder %s23, 1
        %s5936 = scalar_select %p5935, %s23, 1
        %s5937 = smul.addr %s5936, 8
        %s5938 = smul.addr %s5937, 8
        %s5939 = scalar_lea.vmem %s9, %s5938
      $region72: #{encoder_forward.1} parent=67 // pred_fallthru
        _
      // Predicated region
      $region73: #{encoder_forward.1} parent=67 // pred_check
        %p5940 = pneg %p266
      $region74: #{encoder_forward.1} parent=67 // pred_check_branch
        %5942 = sbr.rel (%p5940) target = $region76
      $region75: #{encoder_forward.1} parent=67 // pred_region
        %p5943 = scmp.lt.s32.totalorder %s23, 1
        %s5944 = scalar_select %p5943, %s23, 1
        %s5945 = smul.addr %s5944, 16
        %s5946 = smul.addr %s5945, 8
        %s5947 = scalar_lea.vmem %s10, %s5946
      $region76: #{encoder_forward.1} parent=67 // pred_fallthru
        _
    $region68: #{encoder_forward.1} parent=5 // pred_fallthru
      _
  $region6: #{encoder_forward.1} parent=0 // loop_footer
    %s21 = sadd.s32 1, %s17
  $region7: #{encoder_forward.1} parent=0 // loop_footer_branch
    %16 = sbr.rel target = $region3
  $region8: #{encoder_forward.1} parent=0 // loop_exit
    _

</llo_original>
